<compile_context>
chip_gen: v6e
topology: v6e:2x2x1
jax: 0.10.0
libtpu: 0.0.40
codegen_flags: <defaults>
</compile_context>

<pallas_src>
import functools

import jax
import jax.numpy as jnp
from jax.experimental import pallas as pl
from jax.experimental.pallas import tpu as pltpu

LANE = 128  # pad C_out up to a full lane width -> unmasked, lane-dense stores


def _conv_clamp_kernel(x_ref, w_ref, b_ref, o_ref, *, H, W, Cin, KH, KW):
    """One grid step == one image.

    x_ref: (1, H+KH-1, W+KW-1, Cin)  padded NHWC image tile (bf16)
    w_ref: (KH*KW, Cin, COUTP)       per-tap weight slabs (bf16, zero-padded)
    b_ref: (1, COUTP)                bias (f32, zero-padded)
    o_ref: (H*W, COUTP)              lane-dense output tile (input dtype)
    """
    HW = H * W
    coutp = o_ref.shape[-1]
    acc = jnp.zeros((HW, coutp), jnp.float32)
    # Shifted-window accumulation: im2col never touches HBM. The Python loop
    # is fully unrolled (static trip count) so `acc` stays in vregs.
    for dy in range(KH):
        for dx in range(KW):
            patch = x_ref[0, dy:dy + H, dx:dx + W, :]      # (H, W, Cin) bf16
            patch = patch.reshape(HW, Cin)                 # in-VMEM reshape
            wt = w_ref[dy * KW + dx]                       # (Cin, COUTP) bf16
            acc = acc + jnp.dot(patch, wt,
                                preferred_element_type=jnp.float32)
    acc = acc + b_ref[...]                                 # bias once (f32)
    o_ref[...] = jnp.clip(acc, 0.0, 1.0).astype(o_ref.dtype)


def generator_forward(x_nchw, weight, bias):
    """clamp(Conv2d(x, weight, bias, stride=1, padding=SAME), 0, 1) in NCHW."""
    N, Cin, H, W = x_nchw.shape
    Cout, Cin_w, KH, KW = weight.shape
    assert Cin_w == Cin and KH % 2 == 1 and KW % 2 == 1
    HW = H * W
    assert HW % 8 == 0, "H*W must be a multiple of 8 for the (8,128) tiling"
    ph, pw = KH // 2, KW // 2
    coutp = ((Cout + LANE - 1) // LANE) * LANE
    Hp, Wp = H + KH - 1, W + KW - 1
    out_dtype = x_nchw.dtype

    # --- glue: NCHW -> NHWC, SAME pad, bf16 cast for the MXU (fused by XLA) --
    x = jnp.transpose(x_nchw, (0, 2, 3, 1))                          # NHWC
    xp = jnp.pad(x, ((0, 0), (ph, ph), (pw, pw), (0, 0))).astype(jnp.bfloat16)

    # weights: (Cout, Cin, KH, KW) -> (KH*KW, Cin, COUTP), lane-padded taps
    w_t = jnp.transpose(weight, (2, 3, 1, 0)).reshape(KH * KW, Cin, Cout)
    w_t = jnp.pad(w_t, ((0, 0), (0, 0), (0, coutp - Cout))).astype(jnp.bfloat16)
    b_p = jnp.pad(bias.astype(jnp.float32).reshape(1, Cout),
                  ((0, 0), (0, coutp - Cout)))

    kernel = functools.partial(_conv_clamp_kernel,
                               H=H, W=W, Cin=Cin, KH=KH, KW=KW)

    cost = pl.CostEstimate(
        flops=2 * N * HW * KH * KW * Cin * coutp,
        transcendentals=0,
        bytes_accessed=(xp.size * 2 + w_t.size * 2 + b_p.size * 4
                        + N * HW * coutp * jnp.dtype(out_dtype).itemsize),
    )

    out2d = pl.pallas_call(
        kernel,
        out_shape=jax.ShapeDtypeStruct((N * HW, coutp), out_dtype),
        grid=(N,),
        in_specs=[
            pl.BlockSpec((1, Hp, Wp, Cin), lambda n: (n, 0, 0, 0)),
            pl.BlockSpec((KH * KW, Cin, coutp), lambda n: (0, 0, 0)),  # resident
            pl.BlockSpec((1, coutp), lambda n: (0, 0)),                # resident
        ],
        out_specs=pl.BlockSpec((HW, coutp), lambda n: (n, 0)),
        compiler_params=pltpu.CompilerParams(
            dimension_semantics=("parallel",),       # v7x: split batch over TCs
            vmem_limit_bytes=32 * 1024 * 1024,       # safe on v5e/v6e/v7x
        ),
        cost_estimate=cost,
    )(xp, w_t, b_p)

    # --- glue: strip lane padding, back to NCHW ----------------------------
    out = out2d[:, :Cout].reshape(N, H, W, Cout)
    return jnp.transpose(out, (0, 3, 1, 2))


def _reference(x_nchw, weight, bias):
    y = jax.lax.conv_general_dilated(
        x_nchw, weight, window_strides=(1, 1), padding="SAME",
        dimension_numbers=("NCHW", "OIHW", "NCHW"),
        precision=jax.lax.Precision.HIGHEST)
    y = y + bias.reshape(1, -1, 1, 1)
    return jnp.clip(y, 0.0, 1.0)


if __name__ == "__main__":
    key = jax.random.PRNGKey(0)
    k_x, k_w, k_b = jax.random.split(key, 3)

    N, Cin, H, W = 2, 4, 16, 16
    Cout, KH, KW = 3, 3, 3

    x = jax.random.normal(k_x, (N, Cin, H, W), dtype=jnp.float32)
    weight = jax.random.normal(k_w, (Cout, Cin, KH, KW), dtype=jnp.float32) * 0.2
    bias = jax.random.normal(k_b, (Cout,), dtype=jnp.float32) * 0.1

    fwd = jax.jit(generator_forward)
    out = jax.block_until_ready(fwd(x, weight, bias))

    # Reference on bf16-quantized inputs (kernel feeds the MXU bf16 operands
    # with f32 accumulation), so tolerances stay tight and meaningful.
    x_q = x.astype(jnp.bfloat16).astype(jnp.float32)
    w_q = weight.astype(jnp.bfloat16).astype(jnp.float32)
    ref = jax.block_until_ready(_reference(x_q, w_q, bias))

    assert out.shape == (N, Cout, H, W), out.shape
    max_err = float(jnp.max(jnp.abs(out - ref)))
    assert jnp.allclose(out, ref, atol=5e-3, rtol=5e-3), max_err

    print("KERNEL_OK")
</pallas_src>

<mosaic_0001>
module attributes {stable_mosaic.version = 11 : i64} {
  func.func @_conv_clamp_kernel(%arg0: i32, %arg1: memref<1x18x18x4xbf16, #tpu.memory_space<vmem>>, %arg2: memref<9x4x128xbf16, #tpu.memory_space<vmem>>, %arg3: memref<1x128xf32, #tpu.memory_space<vmem>>, %arg4: memref<256x128xf32, #tpu.memory_space<vmem>>) attributes {dimension_semantics = [#tpu.dimension_semantics<parallel>], iteration_bounds = array<i64: 2>, scalar_prefetch = 0 : i64, scratch_operands = 0 : i64, tpu.core_type = #tpu.core_type<tc>, window_params = [{transform_indices = @transform_0, window_bounds = array<i64: 1, 18, 18, 4>}, {pipeline_mode = #tpu.pipeline_mode<synchronous>, transform_indices = @transform_1, window_bounds = array<i64: 9, 4, 128>}, {pipeline_mode = #tpu.pipeline_mode<synchronous>, transform_indices = @transform_2, window_bounds = array<i64: 1, 128>}, {transform_indices = @transform_3, window_bounds = array<i64: 256, 128>}]} {
    %cst = arith.constant 0.000000e+00 : f32
    %0 = vector.broadcast %cst : f32 to vector<256x128xf32>
    %c0 = arith.constant 0 : index
    %c0_0 = arith.constant 0 : index
    %c0_1 = arith.constant 0 : index
    %c0_2 = arith.constant 0 : index
    %1 = vector.load %arg1[%c0, %c0_0, %c0_1, %c0_2] : memref<1x18x18x4xbf16, #tpu.memory_space<vmem>>, vector<1x16x16x4xbf16>
    %2 = vector.shape_cast %1 : vector<1x16x16x4xbf16> to vector<16x16x4xbf16>
    %3 = vector.shape_cast %2 : vector<16x16x4xbf16> to vector<256x4xbf16>
    %c0_3 = arith.constant 0 : index
    %c0_4 = arith.constant 0 : index
    %c0_5 = arith.constant 0 : index
    %4 = vector.load %arg2[%c0_3, %c0_4, %c0_5] : memref<9x4x128xbf16, #tpu.memory_space<vmem>>, vector<1x4x128xbf16>
    %5 = vector.shape_cast %4 : vector<1x4x128xbf16> to vector<4x128xbf16>
    %cst_6 = arith.constant dense<0.000000e+00> : vector<256x128xf32>
    %6 = tpu.matmul %3, %5, %cst_6 {dimension_numbers = #tpu.dot_dimension_numbers<[1], [0], [0], [1], [0, 0, 1, 1], [], []>} : vector<256x4xbf16>, vector<4x128xbf16>, vector<256x128xf32> -> vector<256x128xf32>
    %7 = arith.addf %0, %6 : vector<256x128xf32>
    %c0_7 = arith.constant 0 : index
    %c0_8 = arith.constant 0 : index
    %c1 = arith.constant 1 : index
    %c0_9 = arith.constant 0 : index
    %8 = vector.load %arg1[%c0_7, %c0_8, %c1, %c0_9] : memref<1x18x18x4xbf16, #tpu.memory_space<vmem>>, vector<1x16x16x4xbf16>
    %9 = vector.shape_cast %8 : vector<1x16x16x4xbf16> to vector<16x16x4xbf16>
    %10 = vector.shape_cast %9 : vector<16x16x4xbf16> to vector<256x4xbf16>
    %c1_10 = arith.constant 1 : index
    %c0_11 = arith.constant 0 : index
    %c0_12 = arith.constant 0 : index
    %11 = vector.load %arg2[%c1_10, %c0_11, %c0_12] : memref<9x4x128xbf16, #tpu.memory_space<vmem>>, vector<1x4x128xbf16>
    %12 = vector.shape_cast %11 : vector<1x4x128xbf16> to vector<4x128xbf16>
    %cst_13 = arith.constant dense<0.000000e+00> : vector<256x128xf32>
    %13 = tpu.matmul %10, %12, %cst_13 {dimension_numbers = #tpu.dot_dimension_numbers<[1], [0], [0], [1], [0, 0, 1, 1], [], []>} : vector<256x4xbf16>, vector<4x128xbf16>, vector<256x128xf32> -> vector<256x128xf32>
    %14 = arith.addf %7, %13 : vector<256x128xf32>
    %c0_14 = arith.constant 0 : index
    %c0_15 = arith.constant 0 : index
    %c2 = arith.constant 2 : index
    %c0_16 = arith.constant 0 : index
    %15 = vector.load %arg1[%c0_14, %c0_15, %c2, %c0_16] : memref<1x18x18x4xbf16, #tpu.memory_space<vmem>>, vector<1x16x16x4xbf16>
    %16 = vector.shape_cast %15 : vector<1x16x16x4xbf16> to vector<16x16x4xbf16>
    %17 = vector.shape_cast %16 : vector<16x16x4xbf16> to vector<256x4xbf16>
    %c2_17 = arith.constant 2 : index
    %c0_18 = arith.constant 0 : index
    %c0_19 = arith.constant 0 : index
    %18 = vector.load %arg2[%c2_17, %c0_18, %c0_19] : memref<9x4x128xbf16, #tpu.memory_space<vmem>>, vector<1x4x128xbf16>
    %19 = vector.shape_cast %18 : vector<1x4x128xbf16> to vector<4x128xbf16>
    %cst_20 = arith.constant dense<0.000000e+00> : vector<256x128xf32>
    %20 = tpu.matmul %17, %19, %cst_20 {dimension_numbers = #tpu.dot_dimension_numbers<[1], [0], [0], [1], [0, 0, 1, 1], [], []>} : vector<256x4xbf16>, vector<4x128xbf16>, vector<256x128xf32> -> vector<256x128xf32>
    %21 = arith.addf %14, %20 : vector<256x128xf32>
    %c0_21 = arith.constant 0 : index
    %c1_22 = arith.constant 1 : index
    %c0_23 = arith.constant 0 : index
    %c0_24 = arith.constant 0 : index
    %22 = vector.load %arg1[%c0_21, %c1_22, %c0_23, %c0_24] : memref<1x18x18x4xbf16, #tpu.memory_space<vmem>>, vector<1x16x16x4xbf16>
    %23 = vector.shape_cast %22 : vector<1x16x16x4xbf16> to vector<16x16x4xbf16>
    %24 = vector.shape_cast %23 : vector<16x16x4xbf16> to vector<256x4xbf16>
    %c3 = arith.constant 3 : index
    %c0_25 = arith.constant 0 : index
    %c0_26 = arith.constant 0 : index
    %25 = vector.load %arg2[%c3, %c0_25, %c0_26] : memref<9x4x128xbf16, #tpu.memory_space<vmem>>, vector<1x4x128xbf16>
    %26 = vector.shape_cast %25 : vector<1x4x128xbf16> to vector<4x128xbf16>
    %cst_27 = arith.constant dense<0.000000e+00> : vector<256x128xf32>
    %27 = tpu.matmul %24, %26, %cst_27 {dimension_numbers = #tpu.dot_dimension_numbers<[1], [0], [0], [1], [0, 0, 1, 1], [], []>} : vector<256x4xbf16>, vector<4x128xbf16>, vector<256x128xf32> -> vector<256x128xf32>
    %28 = arith.addf %21, %27 : vector<256x128xf32>
    %c0_28 = arith.constant 0 : index
    %c1_29 = arith.constant 1 : index
    %c1_30 = arith.constant 1 : index
    %c0_31 = arith.constant 0 : index
    %29 = vector.load %arg1[%c0_28, %c1_29, %c1_30, %c0_31] : memref<1x18x18x4xbf16, #tpu.memory_space<vmem>>, vector<1x16x16x4xbf16>
    %30 = vector.shape_cast %29 : vector<1x16x16x4xbf16> to vector<16x16x4xbf16>
    %31 = vector.shape_cast %30 : vector<16x16x4xbf16> to vector<256x4xbf16>
    %c4 = arith.constant 4 : index
    %c0_32 = arith.constant 0 : index
    %c0_33 = arith.constant 0 : index
    %32 = vector.load %arg2[%c4, %c0_32, %c0_33] : memref<9x4x128xbf16, #tpu.memory_space<vmem>>, vector<1x4x128xbf16>
    %33 = vector.shape_cast %32 : vector<1x4x128xbf16> to vector<4x128xbf16>
    %cst_34 = arith.constant dense<0.000000e+00> : vector<256x128xf32>
    %34 = tpu.matmul %31, %33, %cst_34 {dimension_numbers = #tpu.dot_dimension_numbers<[1], [0], [0], [1], [0, 0, 1, 1], [], []>} : vector<256x4xbf16>, vector<4x128xbf16>, vector<256x128xf32> -> vector<256x128xf32>
    %35 = arith.addf %28, %34 : vector<256x128xf32>
    %c0_35 = arith.constant 0 : index
    %c1_36 = arith.constant 1 : index
    %c2_37 = arith.constant 2 : index
    %c0_38 = arith.constant 0 : index
    %36 = vector.load %arg1[%c0_35, %c1_36, %c2_37, %c0_38] : memref<1x18x18x4xbf16, #tpu.memory_space<vmem>>, vector<1x16x16x4xbf16>
    %37 = vector.shape_cast %36 : vector<1x16x16x4xbf16> to vector<16x16x4xbf16>
    %38 = vector.shape_cast %37 : vector<16x16x4xbf16> to vector<256x4xbf16>
    %c5 = arith.constant 5 : index
    %c0_39 = arith.constant 0 : index
    %c0_40 = arith.constant 0 : index
    %39 = vector.load %arg2[%c5, %c0_39, %c0_40] : memref<9x4x128xbf16, #tpu.memory_space<vmem>>, vector<1x4x128xbf16>
    %40 = vector.shape_cast %39 : vector<1x4x128xbf16> to vector<4x128xbf16>
    %cst_41 = arith.constant dense<0.000000e+00> : vector<256x128xf32>
    %41 = tpu.matmul %38, %40, %cst_41 {dimension_numbers = #tpu.dot_dimension_numbers<[1], [0], [0], [1], [0, 0, 1, 1], [], []>} : vector<256x4xbf16>, vector<4x128xbf16>, vector<256x128xf32> -> vector<256x128xf32>
    %42 = arith.addf %35, %41 : vector<256x128xf32>
    %c0_42 = arith.constant 0 : index
    %c2_43 = arith.constant 2 : index
    %c0_44 = arith.constant 0 : index
    %c0_45 = arith.constant 0 : index
    %43 = vector.load %arg1[%c0_42, %c2_43, %c0_44, %c0_45] : memref<1x18x18x4xbf16, #tpu.memory_space<vmem>>, vector<1x16x16x4xbf16>
    %44 = vector.shape_cast %43 : vector<1x16x16x4xbf16> to vector<16x16x4xbf16>
    %45 = vector.shape_cast %44 : vector<16x16x4xbf16> to vector<256x4xbf16>
    %c6 = arith.constant 6 : index
    %c0_46 = arith.constant 0 : index
    %c0_47 = arith.constant 0 : index
    %46 = vector.load %arg2[%c6, %c0_46, %c0_47] : memref<9x4x128xbf16, #tpu.memory_space<vmem>>, vector<1x4x128xbf16>
    %47 = vector.shape_cast %46 : vector<1x4x128xbf16> to vector<4x128xbf16>
    %cst_48 = arith.constant dense<0.000000e+00> : vector<256x128xf32>
    %48 = tpu.matmul %45, %47, %cst_48 {dimension_numbers = #tpu.dot_dimension_numbers<[1], [0], [0], [1], [0, 0, 1, 1], [], []>} : vector<256x4xbf16>, vector<4x128xbf16>, vector<256x128xf32> -> vector<256x128xf32>
    %49 = arith.addf %42, %48 : vector<256x128xf32>
    %c0_49 = arith.constant 0 : index
    %c2_50 = arith.constant 2 : index
    %c1_51 = arith.constant 1 : index
    %c0_52 = arith.constant 0 : index
    %50 = vector.load %arg1[%c0_49, %c2_50, %c1_51, %c0_52] : memref<1x18x18x4xbf16, #tpu.memory_space<vmem>>, vector<1x16x16x4xbf16>
    %51 = vector.shape_cast %50 : vector<1x16x16x4xbf16> to vector<16x16x4xbf16>
    %52 = vector.shape_cast %51 : vector<16x16x4xbf16> to vector<256x4xbf16>
    %c7 = arith.constant 7 : index
    %c0_53 = arith.constant 0 : index
    %c0_54 = arith.constant 0 : index
    %53 = vector.load %arg2[%c7, %c0_53, %c0_54] : memref<9x4x128xbf16, #tpu.memory_space<vmem>>, vector<1x4x128xbf16>
    %54 = vector.shape_cast %53 : vector<1x4x128xbf16> to vector<4x128xbf16>
    %cst_55 = arith.constant dense<0.000000e+00> : vector<256x128xf32>
    %55 = tpu.matmul %52, %54, %cst_55 {dimension_numbers = #tpu.dot_dimension_numbers<[1], [0], [0], [1], [0, 0, 1, 1], [], []>} : vector<256x4xbf16>, vector<4x128xbf16>, vector<256x128xf32> -> vector<256x128xf32>
    %56 = arith.addf %49, %55 : vector<256x128xf32>
    %c0_56 = arith.constant 0 : index
    %c2_57 = arith.constant 2 : index
    %c2_58 = arith.constant 2 : index
    %c0_59 = arith.constant 0 : index
    %57 = vector.load %arg1[%c0_56, %c2_57, %c2_58, %c0_59] : memref<1x18x18x4xbf16, #tpu.memory_space<vmem>>, vector<1x16x16x4xbf16>
    %58 = vector.shape_cast %57 : vector<1x16x16x4xbf16> to vector<16x16x4xbf16>
    %59 = vector.shape_cast %58 : vector<16x16x4xbf16> to vector<256x4xbf16>
    %c8 = arith.constant 8 : index
    %c0_60 = arith.constant 0 : index
    %c0_61 = arith.constant 0 : index
    %60 = vector.load %arg2[%c8, %c0_60, %c0_61] : memref<9x4x128xbf16, #tpu.memory_space<vmem>>, vector<1x4x128xbf16>
    %61 = vector.shape_cast %60 : vector<1x4x128xbf16> to vector<4x128xbf16>
    %cst_62 = arith.constant dense<0.000000e+00> : vector<256x128xf32>
    %62 = tpu.matmul %59, %61, %cst_62 {dimension_numbers = #tpu.dot_dimension_numbers<[1], [0], [0], [1], [0, 0, 1, 1], [], []>} : vector<256x4xbf16>, vector<4x128xbf16>, vector<256x128xf32> -> vector<256x128xf32>
    %63 = arith.addf %56, %62 : vector<256x128xf32>
    %c0_63 = arith.constant 0 : index
    %c0_64 = arith.constant 0 : index
    %64 = vector.load %arg3[%c0_63, %c0_64] : memref<1x128xf32, #tpu.memory_space<vmem>>, vector<1x128xf32>
    %65 = vector.broadcast %64 : vector<1x128xf32> to vector<256x128xf32>
    %66 = arith.addf %63, %65 : vector<256x128xf32>
    %cst_65 = arith.constant 0.000000e+00 : f32
    %cst_66 = arith.constant 1.000000e+00 : f32
    %67 = vector.broadcast %cst_65 : f32 to vector<256x128xf32>
    %68 = arith.maximumf %67, %66 : vector<256x128xf32>
    %69 = vector.broadcast %cst_66 : f32 to vector<256x128xf32>
    %70 = arith.minimumf %69, %68 : vector<256x128xf32>
    %c0_67 = arith.constant 0 : index
    %c0_68 = arith.constant 0 : index
    %71 = vector.load %arg4[%c0_67, %c0_68] : memref<256x128xf32, #tpu.memory_space<vmem>>, vector<256x128xf32>
    tpu.vector_store %arg4[%c0_67, %c0_68], %70 {strides = array<i32>} : memref<256x128xf32, #tpu.memory_space<vmem>>, vector<256x128xf32>,
    return
  }
  func.func @transform_0(%arg0: i32) -> (i32, i32, i32, i32) {
    %c0_i32 = arith.constant 0 : i32
    %c0_i32_0 = arith.constant 0 : i32
    %c0_i32_1 = arith.constant 0 : i32
    %c0_i32_2 = arith.constant 0 : i32
    return %arg0, %c0_i32, %c0_i32_0, %c0_i32_1 : i32, i32, i32, i32
  }
  func.func @transform_1(%arg0: i32) -> (i32, i32, i32) {
    %c0_i32 = arith.constant 0 : i32
    %c0_i32_0 = arith.constant 0 : i32
    %c0_i32_1 = arith.constant 0 : i32
    %c0_i32_2 = arith.constant 0 : i32
    return %c0_i32, %c0_i32_0, %c0_i32_1 : i32, i32, i32
  }
  func.func @transform_2(%arg0: i32) -> (i32, i32) {
    %c0_i32 = arith.constant 0 : i32
    %c0_i32_0 = arith.constant 0 : i32
    %c0_i32_1 = arith.constant 0 : i32
    return %c0_i32, %c0_i32_0 : i32, i32
  }
  func.func @transform_3(%arg0: i32) -> (i32, i32) {
    %c0_i32 = arith.constant 0 : i32
    %c0_i32_0 = arith.constant 0 : i32
    return %arg0, %c0_i32 : i32, i32
  }
}

</mosaic_0001>

<llo_original>
// kernel: generator_forward.1
$region0: #{generator_forward.1}
  #allocation0 [shape = 'u32[]', space=smem, size = 0x4, offset = 0x4, fixed_abs, tag = 'smem constant byte address 0x4 - core index']
  #allocation1 [shape = 'u32[144,128]{1,0:T(1,128)}', space=vmem, size = 0x12000, scoped, tag = 'internal scratch']
  %s0 = inlined_call_operand.vmem [shape: bf16[2,18,18,4], index: 0, kind: input, shape index: {}]
  %s1 = inlined_call_operand.vmem [shape: bf16[9,4,128], index: 1, kind: input, shape index: {}]
  %s2 = inlined_call_operand.vmem [shape: f32[1,128], index: 2, kind: input, shape index: {}]
  %s3 = inlined_call_operand.vmem [shape: f32[512,128], index: 3, kind: output, shape index: {}]
  %s4 = sld [smem:[#allocation0]]
  $region45: #{generator_forward.1} parent=0
    _
  %s6 = ssub.s32 1, %s4
  %s7 = scalar_select 0, %s6, %s4
  loop: start=0, step=1, limit=4
  $region2: #{generator_forward.1} parent=0 // loop_pre_header
    _
  $region3: #{generator_forward.1} parent=0 // loop_header
    %s9 = sphi 0, %s13
    %p10 = scmp.ge.s32.totalorder %s9, 4
    %s19 = sphi 0, %s21
    %s22 = sphi 0, %s19
    %s23 = sphi 0, %s22
    %s39 = sphi 0, %s23
    %s43 = sphi 0, %s43
    %s45 = sphi 0, %s43
    %s46 = sphi 0, %s45
    %s60 = sphi 0, %s46
    %s64 = sphi 0, %s64
    %s66 = sphi 0, %s64
    %s67 = sphi 0, %s66
    %s81 = sphi 0, %s67
    %s87 = sphi 0, %s89
    %s90 = sphi 0, %s87
    %s91 = sphi 0, %s90
    %s107 = sphi 0, %s91
  $region4: #{generator_forward.1} parent=0 // loop_header_branch
    %12 = sbr.rel (%p10) target = $region8
  $region5: #{generator_forward.1} parent=0 // loop_body
    %s14 = ssub.s32 %s9, 1
    %s15 = ssub.s32 %s9, 2
    %s16 = sadd.s32 %s9, 1
    %s17 = ssub.s32 %s9, %s16
    %p18 = scmp.eq.s32.totalorder %s17, 0
    %s20 = sadd.s32 %s19, 1
    %s21 = scalar_select %p18, %s19, %s20
    %p24 = pneg %p18
    %p25 = scmp.eq.s32.totalorder %s9, 1
    %p26 = por %p24, %p25
    %p27 = scmp.ne.s32.totalorder %s19, %s22
    %p28 = scmp.eq.s32.totalorder %s9, 0
    %p29 = por %p27, %p28
    %p30 = scmp.ne.s32.totalorder %s19, %s22
    %p31 = scmp.eq.s32.totalorder %s14, 1
    %p32 = por %p30, %p31
    %p33 = scmp.ne.s32.totalorder %s22, %s23
    %p34 = scmp.eq.s32.totalorder %s14, 0
    %p35 = por %p33, %p34
    %p36 = scmp.ne.s32.totalorder %s22, %s23
    %p37 = scmp.eq.s32.totalorder %s15, 1
    %p38 = por %p36, %p37
    %p40 = scmp.ne.s32.totalorder %s23, %s39
    %p41 = scmp.eq.s32.totalorder %s15, 0
    %p42 = por %p40, %p41
    %s44 = sadd.s32 %s43, 1
    %p47 = scmp.eq.s32.totalorder %s9, 1
    %p48 = scmp.ne.s32.totalorder %s43, %s45
    %p49 = scmp.eq.s32.totalorder %s9, 0
    %p50 = por %p48, %p49
    %p51 = scmp.ne.s32.totalorder %s43, %s45
    %p52 = scmp.eq.s32.totalorder %s14, 1
    %p53 = por %p51, %p52
    %p54 = scmp.ne.s32.totalorder %s45, %s46
    %p55 = scmp.eq.s32.totalorder %s14, 0
    %p56 = por %p54, %p55
    %p57 = scmp.ne.s32.totalorder %s45, %s46
    %p58 = scmp.eq.s32.totalorder %s15, 1
    %p59 = por %p57, %p58
    %p61 = scmp.ne.s32.totalorder %s46, %s60
    %p62 = scmp.eq.s32.totalorder %s15, 0
    %p63 = por %p61, %p62
    %s65 = sadd.s32 %s64, 1
    %p68 = scmp.eq.s32.totalorder %s9, 1
    %p69 = scmp.ne.s32.totalorder %s64, %s66
    %p70 = scmp.eq.s32.totalorder %s9, 0
    %p71 = por %p69, %p70
    %p72 = scmp.ne.s32.totalorder %s64, %s66
    %p73 = scmp.eq.s32.totalorder %s14, 1
    %p74 = por %p72, %p73
    %p75 = scmp.ne.s32.totalorder %s66, %s67
    %p76 = scmp.eq.s32.totalorder %s14, 0
    %p77 = por %p75, %p76
    %p78 = scmp.ne.s32.totalorder %s66, %s67
    %p79 = scmp.eq.s32.totalorder %s15, 1
    %p80 = por %p78, %p79
    %p82 = scmp.ne.s32.totalorder %s67, %s81
    %p83 = scmp.eq.s32.totalorder %s15, 0
    %p84 = por %p82, %p83
    %s85 = ssub.s32 %s9, %s16
    %p86 = scmp.eq.s32.totalorder %s85, 0
    %s88 = sadd.s32 %s87, 1
    %s89 = scalar_select %p86, %s87, %s88
    %p92 = pneg %p86
    %p93 = scmp.eq.s32.totalorder %s9, 1
    %p94 = por %p92, %p93
    %p95 = scmp.ne.s32.totalorder %s87, %s90
    %p96 = scmp.eq.s32.totalorder %s9, 0
    %p97 = por %p95, %p96
    %p98 = scmp.ne.s32.totalorder %s87, %s90
    %p99 = scmp.eq.s32.totalorder %s14, 1
    %p100 = por %p98, %p99
    %p101 = scmp.ne.s32.totalorder %s90, %s91
    %p102 = scmp.eq.s32.totalorder %s14, 0
    %p103 = por %p101, %p102
    %p104 = scmp.ne.s32.totalorder %s90, %s91
    %p105 = scmp.eq.s32.totalorder %s15, 1
    %p106 = por %p104, %p105
    %p108 = scmp.ne.s32.totalorder %s91, %s107
    %p109 = scmp.eq.s32.totalorder %s15, 0
    %p110 = por %p108, %p109
    %p111 = scmp.le.s32.totalorder 1, %s9
    %p112 = scmp.lt.s32.totalorder %s9, 3
    %p113 = pnand %p111, %p112
    %p114 = pneg %p113
    // Predicated region
    $region9: #{generator_forward.1} parent=5 // pred_check
      _
    $region10: #{generator_forward.1} parent=5 // pred_check_branch
      %116 = sbr.rel (%p113) target = $region12
    $region11: #{generator_forward.1} parent=5 // pred_region
      %s117 = ssub.s32 %s9, 1
      // Predicated region
      $region13: #{generator_forward.1} parent=11 // pred_check
        %p118 = pneg %p56
      $region14: #{generator_forward.1} parent=11 // pred_check_branch
        %120 = sbr.rel (%p118) target = $region16
      $region15: #{generator_forward.1} parent=11 // pred_region
        _
      $region16: #{generator_forward.1} parent=11 // pred_fallthru
        _
      // Predicated region
      $region17: #{generator_forward.1} parent=11 // pred_check
        %p121 = pneg %p77
      $region18: #{generator_forward.1} parent=11 // pred_check_branch
        %123 = sbr.rel (%p121) target = $region20
      $region19: #{generator_forward.1} parent=11 // pred_region
        _
      $region20: #{generator_forward.1} parent=11 // pred_fallthru
        _
    $region12: #{generator_forward.1} parent=5 // pred_fallthru
      _
    %p124 = scmp.lt.s32.totalorder %s9, 2
    // Predicated region
    $region21: #{generator_forward.1} parent=5 // pred_check
      %p125 = pneg %p124
    $region22: #{generator_forward.1} parent=5 // pred_check_branch
      %127 = sbr.rel (%p125) target = $region24
    $region23: #{generator_forward.1} parent=5 // pred_region
      // Predicated region
      $region25: #{generator_forward.1} parent=23 // pred_check
        %p128 = pneg %p29
      $region26: #{generator_forward.1} parent=23 // pred_check_branch
        %130 = sbr.rel (%p128) target = $region28
      $region27: #{generator_forward.1} parent=23 // pred_region
        %p131 = scmp.lt.s32.totalorder %s9, 1
        %s132 = scalar_select %p131, %s9, 1
        %s133 = smul.addr %s132, 54
        %s134 = smul.addr %s133, 4
        %s135 = scalar_lea.vmem %s0, %s134
      $region28: #{generator_forward.1} parent=23 // pred_fallthru
        _
    $region24: #{generator_forward.1} parent=5 // pred_fallthru
      _
    %p136 = scmp.le.s32.totalorder 1, %s9
    %p137 = scmp.lt.s32.totalorder %s9, 3
    %p138 = pnand %p136, %p137
    %p139 = pneg %p138
    // Predicated region
    $region29: #{generator_forward.1} parent=5 // pred_check
      _
    $region30: #{generator_forward.1} parent=5 // pred_check_branch
      %141 = sbr.rel (%p138) target = $region32
    $region31: #{generator_forward.1} parent=5 // pred_region
      %s142 = ssub.s32 %s9, 1
      %p143 = scmp.lt.s32.totalorder %s14, 1
      %s144 = scalar_select %p143, %s14, 1
      %s145 = smul.addr %s144, 54
      %s146 = smul.addr %s145, 4
      %s147 = scalar_lea.vmem %s0, %s146
      %p148 = pneg %p35
      %p149 = pneg %p32
      %p150 = pneg %p56
      %p151 = pneg %p53
      %p152 = pneg %p77
      %p153 = pneg %p74
      %p154 = pneg %p103
      %p155 = pneg %p100
      %s156 = smul.u32 32, %s14
      %p157 = scmp.lt.s32.totalorder %s156, 63
      %s158 = scalar_select %p157, %s156, 63
      %s159 = smul.addr %s158, 8
      %s160 = scalar_lea.vmem %s3, %s159
      %p161 = scmp.lt.s32.totalorder %s14, 1
      %s162 = scalar_select %p161, %s14, 1
      %s163 = smul.addr %s162, 54
      %s164 = smul.addr %s163, 4
      %s165 = scalar_lea.vmem %s0, %s164
      %s166 = smul.u32 32, %s14
      %p167 = scmp.lt.s32.totalorder %s166, 63
      %s168 = scalar_select %p167, %s166, 63
      %s169 = smul.addr %s168, 8
      %s170 = scalar_lea.vmem %s3, %s169
      %s171 = smul.u32 32, %s14
      %v173 = vld [vmem:[%s165] sm:$0xf]
      %v174 = vld [vmem:[%s165 + $0x4] sm:$0xf]
      %v175 = vld [vmem:[%s165 + $0xc] sm:$0xf]
      %v176 = vld [vmem:[%s165 + $0x10] sm:$0xf]
      %v177 = vld [vmem:[%s165 + $0x18] sm:$0xf]
      %v178 = vld [vmem:[%s165 + $0x1c] sm:$0xf]
      %v179 = vld [vmem:[%s165 + $0x24] sm:$0xf]
      %v180 = vld [vmem:[%s165 + $0x28] sm:$0xf]
      %v181 = vld [vmem:[%s165 + $0x30] sm:$0xf]
      %v182 = vld [vmem:[%s165 + $0x34] sm:$0xf]
      %v183 = vld [vmem:[%s165 + $0x3c] sm:$0xf]
      %v184 = vld [vmem:[%s165 + $0x40] sm:$0xf]
      %v185 = vld [vmem:[%s165 + $0x48] sm:$0xf]
      %v186 = vld [vmem:[%s165 + $0x4c] sm:$0xf]
      %v187 = vld [vmem:[%s165 + $0x54] sm:$0xf]
      %v188 = vld [vmem:[%s165 + $0x58] sm:$0xf]
      %v189 = vld [vmem:[%s165 + $0x60] sm:$0xf]
      %v190 = vld [vmem:[%s165 + $0x64] sm:$0xf]
      %v191 = vld [vmem:[%s165 + $0x6c] sm:$0xf]
      %v192 = vld [vmem:[%s165 + $0x70] sm:$0xf]
      %v193 = vld [vmem:[%s165 + $0x78] sm:$0xf]
      %v194 = vld [vmem:[%s165 + $0x7c] sm:$0xf]
      %v195 = vld [vmem:[%s165 + $0x84] sm:$0xf]
      %v196 = vld [vmem:[%s165 + $0x88] sm:$0xf]
      %v197 = vld [vmem:[%s165 + $0x90] sm:$0xf]
      %v198 = vld [vmem:[%s165 + $0x94] sm:$0xf]
      %v199 = vld [vmem:[%s165 + $0x9c] sm:$0xf]
      %v200 = vld [vmem:[%s165 + $0xa0] sm:$0xf]
      %v201 = vld [vmem:[%s165 + $0xa8] sm:$0xf]
      %v202 = vld [vmem:[%s165 + $0xac] sm:$0xf]
      %v203 = vld [vmem:[%s165 + $0xb4] sm:$0xf]
      %v204 = vld [vmem:[%s165 + $0xb8] sm:$0xf]
      %v205 = vld [vmem:[%s1] sm:$0x3]
      %v206 = vld [vmem:[%s165 + $0x8] sm:$0x1]
      %v207 = vld [vmem:[%s165 + $0x14] sm:$0x1]
      %v208 = vld [vmem:[%s165 + $0x20] sm:$0x1]
      %v209 = vld [vmem:[%s165 + $0x2c] sm:$0x1]
      %v210 = vld [vmem:[%s165 + $0x38] sm:$0x1]
      %v211 = vld [vmem:[%s165 + $0x44] sm:$0x1]
      %v212 = vld [vmem:[%s165 + $0x50] sm:$0x1]
      %v213 = vld [vmem:[%s165 + $0x5c] sm:$0x1]
      %v214 = vld [vmem:[%s165 + $0x68] sm:$0x1]
      %v215 = vld [vmem:[%s165 + $0x74] sm:$0x1]
      %v216 = vld [vmem:[%s165 + $0x80] sm:$0x1]
      %v217 = vld [vmem:[%s165 + $0x8c] sm:$0x1]
      %v218 = vld [vmem:[%s165 + $0x98] sm:$0x1]
      %v219 = vld [vmem:[%s165 + $0xa4] sm:$0x1]
      %v220 = vld [vmem:[%s165 + $0xb0] sm:$0x1]
      %v221 = vld [vmem:[%s165 + $0xbc] sm:$0x1]
      %vm222 = vsmask.f32 3328
      %vm223 = vsmask.f32 7440
      %vm224 = vmor %vm222, %vm223
      %v226 = vshrl.u32 %v173, 16
      %v228 = vrot.slane %v226, 4
      %v229 = vshll.u32 %v173, 16
      %v231 = vrot.slane %v229, 5
      %v232 = vor.u32 %v228, %v231
      %v233 = vrot.slane %v232, 4
      %v235 = vshll.u32 %v174, 16
      %v237 = vrot.slane %v235, 5
      %v238 = vsel %vm224, %v233, %v237
      %v239 = vshrl.u32 %v174, 16
      %v241 = vrot.slane %v239, 4
      %v242 = vor.u32 %v241, %v237
      %v243 = vrot.slane %v242, 4
      %v245 = vshll.u32 %v206, 16
      %v247 = vrot.slane %v245, 5
      %v248 = vsel %vm224, %v243, %v247
      %v250 = vshrl.u32 %v175, 16
      %v252 = vrot.slane %v250, 4
      %v253 = vshll.u32 %v175, 16
      %v255 = vrot.slane %v253, 5
      %v256 = vor.u32 %v252, %v255
      %v257 = vrot.slane %v256, 4
      %v259 = vshll.u32 %v176, 16
      %v261 = vrot.slane %v259, 5
      %v262 = vsel %vm224, %v257, %v261
      %v263 = vshrl.u32 %v176, 16
      %v265 = vrot.slane %v263, 4
      %v266 = vor.u32 %v265, %v261
      %v267 = vrot.slane %v266, 4
      %v269 = vshll.u32 %v207, 16
      %v271 = vrot.slane %v269, 5
      %v272 = vsel %vm224, %v267, %v271
      %v274 = vshrl.u32 %v177, 16
      %v276 = vrot.slane %v274, 4
      %v277 = vshll.u32 %v177, 16
      %v279 = vrot.slane %v277, 5
      %v280 = vor.u32 %v276, %v279
      %v281 = vrot.slane %v280, 4
      %v283 = vshll.u32 %v178, 16
      %v285 = vrot.slane %v283, 5
      %v286 = vsel %vm224, %v281, %v285
      %v287 = vshrl.u32 %v178, 16
      %v289 = vrot.slane %v287, 4
      %v290 = vor.u32 %v289, %v285
      %v291 = vrot.slane %v290, 4
      %v293 = vshll.u32 %v208, 16
      %v295 = vrot.slane %v293, 5
      %v296 = vsel %vm224, %v291, %v295
      %v298 = vshrl.u32 %v179, 16
      %v300 = vrot.slane %v298, 4
      %v301 = vshll.u32 %v179, 16
      %v303 = vrot.slane %v301, 5
      %v304 = vor.u32 %v300, %v303
      %v305 = vrot.slane %v304, 4
      %v307 = vshll.u32 %v180, 16
      %v309 = vrot.slane %v307, 5
      %v310 = vsel %vm224, %v305, %v309
      %v311 = vshrl.u32 %v180, 16
      %v313 = vrot.slane %v311, 4
      %v314 = vor.u32 %v313, %v309
      %v315 = vrot.slane %v314, 4
      %v317 = vshll.u32 %v209, 16
      %v319 = vrot.slane %v317, 5
      %v320 = vsel %vm224, %v315, %v319
      %v322 = vshrl.u32 %v181, 16
      %v324 = vrot.slane %v322, 4
      %v325 = vshll.u32 %v181, 16
      %v327 = vrot.slane %v325, 5
      %v328 = vor.u32 %v324, %v327
      %v329 = vrot.slane %v328, 4
      %v331 = vshll.u32 %v182, 16
      %v333 = vrot.slane %v331, 5
      %v334 = vsel %vm224, %v329, %v333
      %v335 = vshrl.u32 %v182, 16
      %v337 = vrot.slane %v335, 4
      %v338 = vor.u32 %v337, %v333
      %v339 = vrot.slane %v338, 4
      %v341 = vshll.u32 %v210, 16
      %v343 = vrot.slane %v341, 5
      %v344 = vsel %vm224, %v339, %v343
      %v346 = vshrl.u32 %v183, 16
      %v348 = vrot.slane %v346, 4
      %v349 = vshll.u32 %v183, 16
      %v351 = vrot.slane %v349, 5
      %v352 = vor.u32 %v348, %v351
      %v353 = vrot.slane %v352, 4
      %v355 = vshll.u32 %v184, 16
      %v357 = vrot.slane %v355, 5
      %v358 = vsel %vm224, %v353, %v357
      %v359 = vshrl.u32 %v184, 16
      %v361 = vrot.slane %v359, 4
      %v362 = vor.u32 %v361, %v357
      %v363 = vrot.slane %v362, 4
      %v365 = vshll.u32 %v211, 16
      %v367 = vrot.slane %v365, 5
      %v368 = vsel %vm224, %v363, %v367
      %v370 = vshrl.u32 %v185, 16
      %v372 = vrot.slane %v370, 4
      %v373 = vshll.u32 %v185, 16
      %v375 = vrot.slane %v373, 5
      %v376 = vor.u32 %v372, %v375
      %v377 = vrot.slane %v376, 4
      %v379 = vshll.u32 %v186, 16
      %v381 = vrot.slane %v379, 5
      %v382 = vsel %vm224, %v377, %v381
      %v383 = vshrl.u32 %v186, 16
      %v385 = vrot.slane %v383, 4
      %v386 = vor.u32 %v385, %v381
      %v387 = vrot.slane %v386, 4
      %v389 = vshll.u32 %v212, 16
      %v391 = vrot.slane %v389, 5
      %v392 = vsel %vm224, %v387, %v391
      %v394 = vshrl.u32 %v187, 16
      %v396 = vrot.slane %v394, 4
      %v397 = vshll.u32 %v187, 16
      %v399 = vrot.slane %v397, 5
      %v400 = vor.u32 %v396, %v399
      %v401 = vrot.slane %v400, 4
      %v403 = vshll.u32 %v188, 16
      %v405 = vrot.slane %v403, 5
      %v406 = vsel %vm224, %v401, %v405
      %v407 = vshrl.u32 %v188, 16
      %v409 = vrot.slane %v407, 4
      %v410 = vor.u32 %v409, %v405
      %v411 = vrot.slane %v410, 4
      %v413 = vshll.u32 %v213, 16
      %v415 = vrot.slane %v413, 5
      %v416 = vsel %vm224, %v411, %v415
      %v418 = vshrl.u32 %v189, 16
      %v420 = vrot.slane %v418, 4
      %v421 = vshll.u32 %v189, 16
      %v423 = vrot.slane %v421, 5
      %v424 = vor.u32 %v420, %v423
      %v425 = vrot.slane %v424, 4
      %v427 = vshll.u32 %v190, 16
      %v429 = vrot.slane %v427, 5
      %v430 = vsel %vm224, %v425, %v429
      %v431 = vshrl.u32 %v190, 16
      %v433 = vrot.slane %v431, 4
      %v434 = vor.u32 %v433, %v429
      %v435 = vrot.slane %v434, 4
      %v437 = vshll.u32 %v214, 16
      %v439 = vrot.slane %v437, 5
      %v440 = vsel %vm224, %v435, %v439
      %v442 = vshrl.u32 %v191, 16
      %v444 = vrot.slane %v442, 4
      %v445 = vshll.u32 %v191, 16
      %v447 = vrot.slane %v445, 5
      %v448 = vor.u32 %v444, %v447
      %v449 = vrot.slane %v448, 4
      %v451 = vshll.u32 %v192, 16
      %v453 = vrot.slane %v451, 5
      %v454 = vsel %vm224, %v449, %v453
      %v455 = vshrl.u32 %v192, 16
      %v457 = vrot.slane %v455, 4
      %v458 = vor.u32 %v457, %v453
      %v459 = vrot.slane %v458, 4
      %v461 = vshll.u32 %v215, 16
      %v463 = vrot.slane %v461, 5
      %v464 = vsel %vm224, %v459, %v463
      %v466 = vshrl.u32 %v193, 16
      %v468 = vrot.slane %v466, 4
      %v469 = vshll.u32 %v193, 16
      %v471 = vrot.slane %v469, 5
      %v472 = vor.u32 %v468, %v471
      %v473 = vrot.slane %v472, 4
      %v475 = vshll.u32 %v194, 16
      %v477 = vrot.slane %v475, 5
      %v478 = vsel %vm224, %v473, %v477
      %v479 = vshrl.u32 %v194, 16
      %v481 = vrot.slane %v479, 4
      %v482 = vor.u32 %v481, %v477
      %v483 = vrot.slane %v482, 4
      %v485 = vshll.u32 %v216, 16
      %v487 = vrot.slane %v485, 5
      %v488 = vsel %vm224, %v483, %v487
      %v490 = vshrl.u32 %v195, 16
      %v492 = vrot.slane %v490, 4
      %v493 = vshll.u32 %v195, 16
      %v495 = vrot.slane %v493, 5
      %v496 = vor.u32 %v492, %v495
      %v497 = vrot.slane %v496, 4
      %v499 = vshll.u32 %v196, 16
      %v501 = vrot.slane %v499, 5
      %v502 = vsel %vm224, %v497, %v501
      %v503 = vshrl.u32 %v196, 16
      %v505 = vrot.slane %v503, 4
      %v506 = vor.u32 %v505, %v501
      %v507 = vrot.slane %v506, 4
      %v509 = vshll.u32 %v217, 16
      %v511 = vrot.slane %v509, 5
      %v512 = vsel %vm224, %v507, %v511
      %v514 = vshrl.u32 %v197, 16
      %v516 = vrot.slane %v514, 4
      %v517 = vshll.u32 %v197, 16
      %v519 = vrot.slane %v517, 5
      %v520 = vor.u32 %v516, %v519
      %v521 = vrot.slane %v520, 4
      %v523 = vshll.u32 %v198, 16
      %v525 = vrot.slane %v523, 5
      %v526 = vsel %vm224, %v521, %v525
      %v527 = vshrl.u32 %v198, 16
      %v529 = vrot.slane %v527, 4
      %v530 = vor.u32 %v529, %v525
      %v531 = vrot.slane %v530, 4
      %v533 = vshll.u32 %v218, 16
      %v535 = vrot.slane %v533, 5
      %v536 = vsel %vm224, %v531, %v535
      %v538 = vshrl.u32 %v199, 16
      %v540 = vrot.slane %v538, 4
      %v541 = vshll.u32 %v199, 16
      %v543 = vrot.slane %v541, 5
      %v544 = vor.u32 %v540, %v543
      %v545 = vrot.slane %v544, 4
      %v547 = vshll.u32 %v200, 16
      %v549 = vrot.slane %v547, 5
      %v550 = vsel %vm224, %v545, %v549
      %v551 = vshrl.u32 %v200, 16
      %v553 = vrot.slane %v551, 4
      %v554 = vor.u32 %v553, %v549
      %v555 = vrot.slane %v554, 4
      %v557 = vshll.u32 %v219, 16
      %v559 = vrot.slane %v557, 5
      %v560 = vsel %vm224, %v555, %v559
      %v562 = vshrl.u32 %v201, 16
      %v564 = vrot.slane %v562, 4
      %v565 = vshll.u32 %v201, 16
      %v567 = vrot.slane %v565, 5
      %v568 = vor.u32 %v564, %v567
      %v569 = vrot.slane %v568, 4
      %v571 = vshll.u32 %v202, 16
      %v573 = vrot.slane %v571, 5
      %v574 = vsel %vm224, %v569, %v573
      %v575 = vshrl.u32 %v202, 16
      %v577 = vrot.slane %v575, 4
      %v578 = vor.u32 %v577, %v573
      %v579 = vrot.slane %v578, 4
      %v581 = vshll.u32 %v220, 16
      %v583 = vrot.slane %v581, 5
      %v584 = vsel %vm224, %v579, %v583
      %v586 = vshrl.u32 %v203, 16
      %v588 = vrot.slane %v586, 4
      %v589 = vshll.u32 %v203, 16
      %v591 = vrot.slane %v589, 5
      %v592 = vor.u32 %v588, %v591
      %v593 = vrot.slane %v592, 4
      %v595 = vshll.u32 %v204, 16
      %v597 = vrot.slane %v595, 5
      %v598 = vsel %vm224, %v593, %v597
      %v599 = vshrl.u32 %v204, 16
      %v601 = vrot.slane %v599, 4
      %v602 = vor.u32 %v601, %v597
      %v603 = vrot.slane %v602, 4
      %v605 = vshll.u32 %v221, 16
      %v607 = vrot.slane %v605, 5
      %v608 = vsel %vm224, %v603, %v607
      %s609 = scalar_lea.vmem %s1, 2
      %v610 = vld [vmem:[%s609] sm:$0x3]
      %v611 = vunpack.c.l.b16 %v238
      %v612 = vunpack.c.l.b16 %v248
      %v613 = vunpack.c.l.b16 %v262
      %v614 = vunpack.c.l.b16 %v272
      %v615 = vunpack.c.l.b16 %v286
      %v616 = vunpack.c.l.b16 %v296
      %v617 = vunpack.c.l.b16 %v310
      %v618 = vunpack.c.l.b16 %v320
      %v619 = vunpack.c.l.b16 %v334
      %v620 = vunpack.c.l.b16 %v344
      %v621 = vunpack.c.l.b16 %v358
      %v622 = vunpack.c.l.b16 %v368
      %v623 = vunpack.c.l.b16 %v382
      %v624 = vunpack.c.l.b16 %v392
      %v625 = vunpack.c.l.b16 %v406
      %v626 = vunpack.c.l.b16 %v416
      %v627 = vunpack.c.l.b16 %v430
      %v628 = vunpack.c.l.b16 %v440
      %v629 = vunpack.c.l.b16 %v454
      %v630 = vunpack.c.l.b16 %v464
      %v631 = vunpack.c.l.b16 %v478
      %v632 = vunpack.c.l.b16 %v488
      %v633 = vunpack.c.l.b16 %v502
      %v634 = vunpack.c.l.b16 %v512
      %v635 = vunpack.c.l.b16 %v526
      %v636 = vunpack.c.l.b16 %v536
      %v637 = vunpack.c.l.b16 %v550
      %v638 = vunpack.c.l.b16 %v560
      %v639 = vunpack.c.l.b16 %v574
      %v640 = vunpack.c.l.b16 %v584
      %v641 = vunpack.c.l.b16 %v598
      %v642 = vunpack.c.l.b16 %v608
      %v643 = vpack.c.b16 %v612, %v611
      %v644 = vpack.c.b16 %v614, %v613
      %v645 = vpack.c.b16 %v616, %v615
      %v646 = vpack.c.b16 %v618, %v617
      %v647 = vpack.c.b16 %v620, %v619
      %v648 = vpack.c.b16 %v622, %v621
      %v649 = vpack.c.b16 %v624, %v623
      %v650 = vpack.c.b16 %v626, %v625
      %v651 = vpack.c.b16 %v628, %v627
      %v652 = vpack.c.b16 %v630, %v629
      %v653 = vpack.c.b16 %v632, %v631
      %v654 = vpack.c.b16 %v634, %v633
      %v655 = vpack.c.b16 %v636, %v635
      %v656 = vpack.c.b16 %v638, %v637
      %v657 = vpack.c.b16 %v640, %v639
      %v658 = vpack.c.b16 %v642, %v641
      %vm659 = vcmask 31744
      %v661 = vsel %vm659, %v643, 0
      %v664 = vsel %vm659, %v644, 0
      %v667 = vsel %vm659, %v645, 0
      %v670 = vsel %vm659, %v646, 0
      %v673 = vsel %vm659, %v647, 0
      %v676 = vsel %vm659, %v648, 0
      %v679 = vsel %vm659, %v649, 0
      %v682 = vsel %vm659, %v650, 0
      %v685 = vsel %vm659, %v651, 0
      %v688 = vsel %vm659, %v652, 0
      %v691 = vsel %vm659, %v653, 0
      %v694 = vsel %vm659, %v654, 0
      %v697 = vsel %vm659, %v655, 0
      %v700 = vsel %vm659, %v656, 0
      %v703 = vsel %vm659, %v657, 0
      %v706 = vsel %vm659, %v658, 0
      %vm708 = vcmask 1041408
      %v710 = vsel %vm708, %v610, 0
      %712 = vmatprep.subr.bf16.mxu0 0
      %713 = vmatpush1.bf16.msra.mxu0 0
      %714 = vmatprep.subr.bf16.mxu0 0
      %715 = vmatpush1.bf16.msra.mxu0 0
      %716 = vmatprep.subr.bf16.mxu0 0
      %717 = vmatpush1.bf16.msra.mxu0 0
      %718 = vmatprep.subr.bf16.mxu0 0
      %719 = vmatpush1.bf16.msra.mxu0 0
      %720 = vmatprep.subr.bf16.mxu0 0
      %721 = vmatpush1.bf16.msra.mxu0 0
      %722 = vmatprep.subr.bf16.mxu0 0
      %723 = vmatpush1.bf16.msra.mxu0 0
      %724 = vmatprep.subr.bf16.mxu0 0
      %725 = vmatpush1.bf16.msra.mxu0 0
      %726 = vmatprep.subr.bf16.mxu0 0
      %727 = vmatpush1.bf16.msra.mxu0 %v710
      %728 = vmatprep.subr.bf16.mxu0 0
      %729 = vmatpush2.bf16.msra.mxu0 0
      %730 = vmatprep.subr.bf16.mxu0 0
      %731 = vmatpush2.bf16.msra.mxu0 0
      %732 = vmatprep.subr.bf16.mxu0 0
      %733 = vmatpush2.bf16.msra.mxu0 0
      %734 = vmatprep.subr.bf16.mxu0 0
      %735 = vmatpush2.bf16.msra.mxu0 0
      %736 = vmatprep.subr.bf16.mxu0 0
      %737 = vmatpush2.bf16.msra.mxu0 0
      %738 = vmatprep.subr.bf16.mxu0 0
      %739 = vmatpush2.bf16.msra.mxu0 0
      %740 = vmatprep.subr.bf16.mxu0 0
      %741 = vmatpush2.bf16.msra.mxu0 0
      %742 = vmatprep.subr.bf16.mxu0 0
      %743 = vmatpush2.bf16.msra.mxu0 0
      %744 = vmatprep.mubr.bf16.mxu0 0
      %745 = vmatmul.mubr.bf16.gmra.mxu0 %v661
      %v746 = vpop.f32.mrf.mxu0
      %v747 = vadd.f32 0.0, %v746
      %v748 = vpop.f32.mrf.mxu0
      %v749 = vpop.f32.mrf.mxu0
      %v750 = vadd.f32 0.0, %v749
      %v751 = vpop.f32.mrf.mxu0
      %752 = vmatprep.mubr.bf16.mxu0 0
      %753 = vmatmul.mubr.bf16.gmra.mxu0 %v664
      %v754 = vpop.f32.mrf.mxu0
      %v755 = vadd.f32 0.0, %v754
      %v756 = vpop.f32.mrf.mxu0
      %v757 = vpop.f32.mrf.mxu0
      %v758 = vadd.f32 0.0, %v757
      %v759 = vpop.f32.mrf.mxu0
      %760 = vmatprep.mubr.bf16.mxu0 0
      %761 = vmatmul.mubr.bf16.gmra.mxu0 %v667
      %v762 = vpop.f32.mrf.mxu0
      %v763 = vadd.f32 0.0, %v762
      %v764 = vpop.f32.mrf.mxu0
      %v765 = vpop.f32.mrf.mxu0
      %v766 = vadd.f32 0.0, %v765
      %v767 = vpop.f32.mrf.mxu0
      %768 = vmatprep.mubr.bf16.mxu0 0
      %769 = vmatmul.mubr.bf16.gmra.mxu0 %v670
      %v770 = vpop.f32.mrf.mxu0
      %v771 = vadd.f32 0.0, %v770
      %v772 = vpop.f32.mrf.mxu0
      %v773 = vpop.f32.mrf.mxu0
      %v774 = vadd.f32 0.0, %v773
      %v775 = vpop.f32.mrf.mxu0
      %776 = vmatprep.mubr.bf16.mxu0 0
      %777 = vmatmul.mubr.bf16.gmra.mxu0 %v673
      %v778 = vpop.f32.mrf.mxu0
      %v779 = vadd.f32 0.0, %v778
      %v780 = vpop.f32.mrf.mxu0
      %v781 = vpop.f32.mrf.mxu0
      %v782 = vadd.f32 0.0, %v781
      %v783 = vpop.f32.mrf.mxu0
      %784 = vmatprep.mubr.bf16.mxu0 0
      %785 = vmatmul.mubr.bf16.gmra.mxu0 %v676
      %v786 = vpop.f32.mrf.mxu0
      %v787 = vadd.f32 0.0, %v786
      %v788 = vpop.f32.mrf.mxu0
      %v789 = vpop.f32.mrf.mxu0
      %v790 = vadd.f32 0.0, %v789
      %v791 = vpop.f32.mrf.mxu0
      %792 = vmatprep.mubr.bf16.mxu0 0
      %793 = vmatmul.mubr.bf16.gmra.mxu0 %v679
      %v794 = vpop.f32.mrf.mxu0
      %v795 = vadd.f32 0.0, %v794
      %v796 = vpop.f32.mrf.mxu0
      %v797 = vpop.f32.mrf.mxu0
      %v798 = vadd.f32 0.0, %v797
      %v799 = vpop.f32.mrf.mxu0
      %800 = vmatprep.mubr.bf16.mxu0 0
      %801 = vmatmul.mubr.bf16.gmra.mxu0 %v682
      %v802 = vpop.f32.mrf.mxu0
      %v803 = vadd.f32 0.0, %v802
      %v804 = vpop.f32.mrf.mxu0
      %v805 = vpop.f32.mrf.mxu0
      %v806 = vadd.f32 0.0, %v805
      %v807 = vpop.f32.mrf.mxu0
      %808 = vmatprep.mubr.bf16.mxu0 0
      %809 = vmatmul.mubr.bf16.gmra.mxu0 %v685
      %v810 = vpop.f32.mrf.mxu0
      %v811 = vadd.f32 0.0, %v810
      %v812 = vpop.f32.mrf.mxu0
      %v813 = vpop.f32.mrf.mxu0
      %v814 = vadd.f32 0.0, %v813
      %v815 = vpop.f32.mrf.mxu0
      %816 = vmatprep.mubr.bf16.mxu0 0
      %817 = vmatmul.mubr.bf16.gmra.mxu0 %v688
      %v818 = vpop.f32.mrf.mxu0
      %v819 = vadd.f32 0.0, %v818
      %v820 = vpop.f32.mrf.mxu0
      %v821 = vpop.f32.mrf.mxu0
      %v822 = vadd.f32 0.0, %v821
      %v823 = vpop.f32.mrf.mxu0
      %824 = vmatprep.mubr.bf16.mxu0 0
      %825 = vmatmul.mubr.bf16.gmra.mxu0 %v691
      %v826 = vpop.f32.mrf.mxu0
      %v827 = vadd.f32 0.0, %v826
      %v828 = vpop.f32.mrf.mxu0
      %v829 = vpop.f32.mrf.mxu0
      %v830 = vadd.f32 0.0, %v829
      %v831 = vpop.f32.mrf.mxu0
      %832 = vmatprep.mubr.bf16.mxu0 0
      %833 = vmatmul.mubr.bf16.gmra.mxu0 %v694
      %v834 = vpop.f32.mrf.mxu0
      %v835 = vadd.f32 0.0, %v834
      %v836 = vpop.f32.mrf.mxu0
      %v837 = vpop.f32.mrf.mxu0
      %v838 = vadd.f32 0.0, %v837
      %v839 = vpop.f32.mrf.mxu0
      %840 = vmatprep.mubr.bf16.mxu0 0
      %841 = vmatmul.mubr.bf16.gmra.mxu0 %v697
      %v842 = vpop.f32.mrf.mxu0
      %v843 = vadd.f32 0.0, %v842
      %v844 = vpop.f32.mrf.mxu0
      %v845 = vpop.f32.mrf.mxu0
      %v846 = vadd.f32 0.0, %v845
      %v847 = vpop.f32.mrf.mxu0
      %848 = vmatprep.mubr.bf16.mxu0 0
      %849 = vmatmul.mubr.bf16.gmra.mxu0 %v700
      %v850 = vpop.f32.mrf.mxu0
      %v851 = vadd.f32 0.0, %v850
      %v852 = vpop.f32.mrf.mxu0
      %v853 = vpop.f32.mrf.mxu0
      %v854 = vadd.f32 0.0, %v853
      %v855 = vpop.f32.mrf.mxu0
      %856 = vmatprep.mubr.bf16.mxu0 0
      %857 = vmatmul.mubr.bf16.gmra.mxu0 %v703
      %v858 = vpop.f32.mrf.mxu0
      %v859 = vadd.f32 0.0, %v858
      %v860 = vpop.f32.mrf.mxu0
      %v861 = vpop.f32.mrf.mxu0
      %v862 = vadd.f32 0.0, %v861
      %v863 = vpop.f32.mrf.mxu0
      %864 = vmatprep.mubr.bf16.mxu0 0
      %865 = vmatmul.mubr.bf16.gmra.mxu0 %v706
      %v866 = vpop.f32.mrf.mxu0
      %v867 = vadd.f32 0.0, %v866
      %v868 = vpop.f32.mrf.mxu0
      %v869 = vpop.f32.mrf.mxu0
      %v870 = vadd.f32 0.0, %v869
      %v871 = vpop.f32.mrf.mxu0
      %872 = vdwg.mxu0
      %v905 = vunpack.c.l.b16 %v173
      %v906 = vunpack.c.l.b16 %v174
      %v907 = vunpack.c.l.b16 %v175
      %v908 = vunpack.c.l.b16 %v176
      %v909 = vunpack.c.l.b16 %v177
      %v910 = vunpack.c.l.b16 %v178
      %v911 = vunpack.c.l.b16 %v179
      %v912 = vunpack.c.l.b16 %v180
      %v913 = vunpack.c.l.b16 %v181
      %v914 = vunpack.c.l.b16 %v182
      %v915 = vunpack.c.l.b16 %v183
      %v916 = vunpack.c.l.b16 %v184
      %v917 = vunpack.c.l.b16 %v185
      %v918 = vunpack.c.l.b16 %v186
      %v919 = vunpack.c.l.b16 %v187
      %v920 = vunpack.c.l.b16 %v188
      %v921 = vunpack.c.l.b16 %v189
      %v922 = vunpack.c.l.b16 %v190
      %v923 = vunpack.c.l.b16 %v191
      %v924 = vunpack.c.l.b16 %v192
      %v925 = vunpack.c.l.b16 %v193
      %v926 = vunpack.c.l.b16 %v194
      %v927 = vunpack.c.l.b16 %v195
      %v928 = vunpack.c.l.b16 %v196
      %v929 = vunpack.c.l.b16 %v197
      %v930 = vunpack.c.l.b16 %v198
      %v931 = vunpack.c.l.b16 %v199
      %v932 = vunpack.c.l.b16 %v200
      %v933 = vunpack.c.l.b16 %v201
      %v934 = vunpack.c.l.b16 %v202
      %v935 = vunpack.c.l.b16 %v203
      %v936 = vunpack.c.l.b16 %v204
      %v937 = vpack.c.b16 %v906, %v905
      %v938 = vpack.c.b16 %v908, %v907
      %v939 = vpack.c.b16 %v910, %v909
      %v940 = vpack.c.b16 %v912, %v911
      %v941 = vpack.c.b16 %v914, %v913
      %v942 = vpack.c.b16 %v916, %v915
      %v943 = vpack.c.b16 %v918, %v917
      %v944 = vpack.c.b16 %v920, %v919
      %v945 = vpack.c.b16 %v922, %v921
      %v946 = vpack.c.b16 %v924, %v923
      %v947 = vpack.c.b16 %v926, %v925
      %v948 = vpack.c.b16 %v928, %v927
      %v949 = vpack.c.b16 %v930, %v929
      %v950 = vpack.c.b16 %v932, %v931
      %v951 = vpack.c.b16 %v934, %v933
      %v952 = vpack.c.b16 %v936, %v935
      %v954 = vsel %vm659, %v937, 0
      %v957 = vsel %vm659, %v938, 0
      %v960 = vsel %vm659, %v939, 0
      %v963 = vsel %vm659, %v940, 0
      %v966 = vsel %vm659, %v941, 0
      %v969 = vsel %vm659, %v942, 0
      %v972 = vsel %vm659, %v943, 0
      %v975 = vsel %vm659, %v944, 0
      %v978 = vsel %vm659, %v945, 0
      %v981 = vsel %vm659, %v946, 0
      %v984 = vsel %vm659, %v947, 0
      %v987 = vsel %vm659, %v948, 0
      %v990 = vsel %vm659, %v949, 0
      %v993 = vsel %vm659, %v950, 0
      %v996 = vsel %vm659, %v951, 0
      %v999 = vsel %vm659, %v952, 0
      %v1002 = vsel %vm708, %v205, 0
      %1004 = vmatprep.subr.bf16.mxu0 0
      %1005 = vmatpush1.bf16.msra.mxu0 0
      %1006 = vmatprep.subr.bf16.mxu0 0
      %1007 = vmatpush1.bf16.msra.mxu0 0
      %1008 = vmatprep.subr.bf16.mxu0 0
      %1009 = vmatpush1.bf16.msra.mxu0 0
      %1010 = vmatprep.subr.bf16.mxu0 0
      %1011 = vmatpush1.bf16.msra.mxu0 0
      %1012 = vmatprep.subr.bf16.mxu0 0
      %1013 = vmatpush1.bf16.msra.mxu0 0
      %1014 = vmatprep.subr.bf16.mxu0 0
      %1015 = vmatpush1.bf16.msra.mxu0 0
      %1016 = vmatprep.subr.bf16.mxu0 0
      %1017 = vmatpush1.bf16.msra.mxu0 0
      %1018 = vmatprep.subr.bf16.mxu0 0
      %1019 = vmatpush1.bf16.msra.mxu0 %v1002
      %1020 = vmatprep.subr.bf16.mxu0 0
      %1021 = vmatpush2.bf16.msra.mxu0 0
      %1022 = vmatprep.subr.bf16.mxu0 0
      %1023 = vmatpush2.bf16.msra.mxu0 0
      %1024 = vmatprep.subr.bf16.mxu0 0
      %1025 = vmatpush2.bf16.msra.mxu0 0
      %1026 = vmatprep.subr.bf16.mxu0 0
      %1027 = vmatpush2.bf16.msra.mxu0 0
      %1028 = vmatprep.subr.bf16.mxu0 0
      %1029 = vmatpush2.bf16.msra.mxu0 0
      %1030 = vmatprep.subr.bf16.mxu0 0
      %1031 = vmatpush2.bf16.msra.mxu0 0
      %1032 = vmatprep.subr.bf16.mxu0 0
      %1033 = vmatpush2.bf16.msra.mxu0 0
      %1034 = vmatprep.subr.bf16.mxu0 0
      %1035 = vmatpush2.bf16.msra.mxu0 0
      %1036 = vmatprep.mubr.bf16.mxu0 0
      %1037 = vmatmul.mubr.bf16.gmra.mxu0 %v954
      %v1038 = vpop.f32.mrf.mxu0
      %v1039 = vadd.f32 %v747, %v1038
      %v1040 = vpop.f32.mrf.mxu0
      %v1041 = vpop.f32.mrf.mxu0
      %v1042 = vadd.f32 %v750, %v1041
      %v1043 = vpop.f32.mrf.mxu0
      %1044 = vmatprep.mubr.bf16.mxu0 0
      %1045 = vmatmul.mubr.bf16.gmra.mxu0 %v957
      %v1046 = vpop.f32.mrf.mxu0
      %v1047 = vadd.f32 %v755, %v1046
      %v1048 = vpop.f32.mrf.mxu0
      %v1049 = vpop.f32.mrf.mxu0
      %v1050 = vadd.f32 %v758, %v1049
      %v1051 = vpop.f32.mrf.mxu0
      %1052 = vmatprep.mubr.bf16.mxu0 0
      %1053 = vmatmul.mubr.bf16.gmra.mxu0 %v960
      %v1054 = vpop.f32.mrf.mxu0
      %v1055 = vadd.f32 %v763, %v1054
      %v1056 = vpop.f32.mrf.mxu0
      %v1057 = vpop.f32.mrf.mxu0
      %v1058 = vadd.f32 %v766, %v1057
      %v1059 = vpop.f32.mrf.mxu0
      %1060 = vmatprep.mubr.bf16.mxu0 0
      %1061 = vmatmul.mubr.bf16.gmra.mxu0 %v963
      %v1062 = vpop.f32.mrf.mxu0
      %v1063 = vadd.f32 %v771, %v1062
      %v1064 = vpop.f32.mrf.mxu0
      %v1065 = vpop.f32.mrf.mxu0
      %v1066 = vadd.f32 %v774, %v1065
      %v1067 = vpop.f32.mrf.mxu0
      %1068 = vmatprep.mubr.bf16.mxu0 0
      %1069 = vmatmul.mubr.bf16.gmra.mxu0 %v966
      %v1070 = vpop.f32.mrf.mxu0
      %v1071 = vadd.f32 %v779, %v1070
      %v1072 = vpop.f32.mrf.mxu0
      %v1073 = vpop.f32.mrf.mxu0
      %v1074 = vadd.f32 %v782, %v1073
      %v1075 = vpop.f32.mrf.mxu0
      %1076 = vmatprep.mubr.bf16.mxu0 0
      %1077 = vmatmul.mubr.bf16.gmra.mxu0 %v969
      %v1078 = vpop.f32.mrf.mxu0
      %v1079 = vadd.f32 %v787, %v1078
      %v1080 = vpop.f32.mrf.mxu0
      %v1081 = vpop.f32.mrf.mxu0
      %v1082 = vadd.f32 %v790, %v1081
      %v1083 = vpop.f32.mrf.mxu0
      %1084 = vmatprep.mubr.bf16.mxu0 0
      %1085 = vmatmul.mubr.bf16.gmra.mxu0 %v972
      %v1086 = vpop.f32.mrf.mxu0
      %v1087 = vadd.f32 %v795, %v1086
      %v1088 = vpop.f32.mrf.mxu0
      %v1089 = vpop.f32.mrf.mxu0
      %v1090 = vadd.f32 %v798, %v1089
      %v1091 = vpop.f32.mrf.mxu0
      %1092 = vmatprep.mubr.bf16.mxu0 0
      %1093 = vmatmul.mubr.bf16.gmra.mxu0 %v975
      %v1094 = vpop.f32.mrf.mxu0
      %v1095 = vadd.f32 %v803, %v1094
      %v1096 = vpop.f32.mrf.mxu0
      %v1097 = vpop.f32.mrf.mxu0
      %v1098 = vadd.f32 %v806, %v1097
      %v1099 = vpop.f32.mrf.mxu0
      %1100 = vmatprep.mubr.bf16.mxu0 0
      %1101 = vmatmul.mubr.bf16.gmra.mxu0 %v978
      %v1102 = vpop.f32.mrf.mxu0
      %v1103 = vadd.f32 %v811, %v1102
      %v1104 = vpop.f32.mrf.mxu0
      %v1105 = vpop.f32.mrf.mxu0
      %v1106 = vadd.f32 %v814, %v1105
      %v1107 = vpop.f32.mrf.mxu0
      %1108 = vmatprep.mubr.bf16.mxu0 0
      %1109 = vmatmul.mubr.bf16.gmra.mxu0 %v981
      %v1110 = vpop.f32.mrf.mxu0
      %v1111 = vadd.f32 %v819, %v1110
      %v1112 = vpop.f32.mrf.mxu0
      %v1113 = vpop.f32.mrf.mxu0
      %v1114 = vadd.f32 %v822, %v1113
      %v1115 = vpop.f32.mrf.mxu0
      %1116 = vmatprep.mubr.bf16.mxu0 0
      %1117 = vmatmul.mubr.bf16.gmra.mxu0 %v984
      %v1118 = vpop.f32.mrf.mxu0
      %v1119 = vadd.f32 %v827, %v1118
      %v1120 = vpop.f32.mrf.mxu0
      %v1121 = vpop.f32.mrf.mxu0
      %v1122 = vadd.f32 %v830, %v1121
      %v1123 = vpop.f32.mrf.mxu0
      %1124 = vmatprep.mubr.bf16.mxu0 0
      %1125 = vmatmul.mubr.bf16.gmra.mxu0 %v987
      %v1126 = vpop.f32.mrf.mxu0
      %v1127 = vadd.f32 %v835, %v1126
      %v1128 = vpop.f32.mrf.mxu0
      %v1129 = vpop.f32.mrf.mxu0
      %v1130 = vadd.f32 %v838, %v1129
      %v1131 = vpop.f32.mrf.mxu0
      %1132 = vmatprep.mubr.bf16.mxu0 0
      %1133 = vmatmul.mubr.bf16.gmra.mxu0 %v990
      %v1134 = vpop.f32.mrf.mxu0
      %v1135 = vadd.f32 %v843, %v1134
      %v1136 = vpop.f32.mrf.mxu0
      %v1137 = vpop.f32.mrf.mxu0
      %v1138 = vadd.f32 %v846, %v1137
      %v1139 = vpop.f32.mrf.mxu0
      %1140 = vmatprep.mubr.bf16.mxu0 0
      %1141 = vmatmul.mubr.bf16.gmra.mxu0 %v993
      %v1142 = vpop.f32.mrf.mxu0
      %v1143 = vadd.f32 %v851, %v1142
      %v1144 = vpop.f32.mrf.mxu0
      %v1145 = vpop.f32.mrf.mxu0
      %v1146 = vadd.f32 %v854, %v1145
      %v1147 = vpop.f32.mrf.mxu0
      %1148 = vmatprep.mubr.bf16.mxu0 0
      %1149 = vmatmul.mubr.bf16.gmra.mxu0 %v996
      %v1150 = vpop.f32.mrf.mxu0
      %v1151 = vadd.f32 %v859, %v1150
      %v1152 = vpop.f32.mrf.mxu0
      %v1153 = vpop.f32.mrf.mxu0
      %v1154 = vadd.f32 %v862, %v1153
      %v1155 = vpop.f32.mrf.mxu0
      %1156 = vmatprep.mubr.bf16.mxu0 0
      %1157 = vmatmul.mubr.bf16.gmra.mxu0 %v999
      %v1158 = vpop.f32.mrf.mxu0
      %v1159 = vadd.f32 %v867, %v1158
      %v1160 = vpop.f32.mrf.mxu0
      %v1161 = vpop.f32.mrf.mxu0
      %v1162 = vadd.f32 %v870, %v1161
      %v1163 = vpop.f32.mrf.mxu0
      %1164 = vdwg.mxu0
      %v1165 = vld [vmem:[%s165] sm:$0xe]
      %v1166 = vld [vmem:[%s165 + $0xc] sm:$0xe]
      %v1167 = vld [vmem:[%s165 + $0x18] sm:$0xe]
      %v1168 = vld [vmem:[%s165 + $0x24] sm:$0xe]
      %v1169 = vld [vmem:[%s165 + $0x30] sm:$0xe]
      %v1170 = vld [vmem:[%s165 + $0x3c] sm:$0xe]
      %v1171 = vld [vmem:[%s165 + $0x48] sm:$0xe]
      %v1172 = vld [vmem:[%s165 + $0x54] sm:$0xe]
      %v1173 = vld [vmem:[%s165 + $0x60] sm:$0xe]
      %v1174 = vld [vmem:[%s165 + $0x6c] sm:$0xe]
      %v1175 = vld [vmem:[%s165 + $0x78] sm:$0xe]
      %v1176 = vld [vmem:[%s165 + $0x84] sm:$0xe]
      %v1177 = vld [vmem:[%s165 + $0x90] sm:$0xe]
      %v1178 = vld [vmem:[%s165 + $0x9c] sm:$0xe]
      %v1179 = vld [vmem:[%s165 + $0xa8] sm:$0xe]
      %v1180 = vld [vmem:[%s165 + $0xb4] sm:$0xe]
      %vm1213 = vcmask 1042432
      %vm1214 = vcmask 1046532
      %vm1215 = vmor %vm1213, %vm1214
      %v1216 = vrot.slane %v1165, 5
      %v1217 = vrot.slane %v1216, 4
      %v1218 = vrot.slane %v174, 5
      %v1219 = vsel %vm1215, %v1217, %v1218
      %v1220 = vrot.slane %v1218, 4
      %v1221 = vrot.slane %v206, 5
      %v1222 = vsel %vm1215, %v1220, %v1221
      %v1223 = vrot.slane %v1166, 5
      %v1224 = vrot.slane %v1223, 4
      %v1225 = vrot.slane %v176, 5
      %v1226 = vsel %vm1215, %v1224, %v1225
      %v1227 = vrot.slane %v1225, 4
      %v1228 = vrot.slane %v207, 5
      %v1229 = vsel %vm1215, %v1227, %v1228
      %v1230 = vrot.slane %v1167, 5
      %v1231 = vrot.slane %v1230, 4
      %v1232 = vrot.slane %v178, 5
      %v1233 = vsel %vm1215, %v1231, %v1232
      %v1234 = vrot.slane %v1232, 4
      %v1235 = vrot.slane %v208, 5
      %v1236 = vsel %vm1215, %v1234, %v1235
      %v1237 = vrot.slane %v1168, 5
      %v1238 = vrot.slane %v1237, 4
      %v1239 = vrot.slane %v180, 5
      %v1240 = vsel %vm1215, %v1238, %v1239
      %v1241 = vrot.slane %v1239, 4
      %v1242 = vrot.slane %v209, 5
      %v1243 = vsel %vm1215, %v1241, %v1242
      %v1244 = vrot.slane %v1169, 5
      %v1245 = vrot.slane %v1244, 4
      %v1246 = vrot.slane %v182, 5
      %v1247 = vsel %vm1215, %v1245, %v1246
      %v1248 = vrot.slane %v1246, 4
      %v1249 = vrot.slane %v210, 5
      %v1250 = vsel %vm1215, %v1248, %v1249
      %v1251 = vrot.slane %v1170, 5
      %v1252 = vrot.slane %v1251, 4
      %v1253 = vrot.slane %v184, 5
      %v1254 = vsel %vm1215, %v1252, %v1253
      %v1255 = vrot.slane %v1253, 4
      %v1256 = vrot.slane %v211, 5
      %v1257 = vsel %vm1215, %v1255, %v1256
      %v1258 = vrot.slane %v1171, 5
      %v1259 = vrot.slane %v1258, 4
      %v1260 = vrot.slane %v186, 5
      %v1261 = vsel %vm1215, %v1259, %v1260
      %v1262 = vrot.slane %v1260, 4
      %v1263 = vrot.slane %v212, 5
      %v1264 = vsel %vm1215, %v1262, %v1263
      %v1265 = vrot.slane %v1172, 5
      %v1266 = vrot.slane %v1265, 4
      %v1267 = vrot.slane %v188, 5
      %v1268 = vsel %vm1215, %v1266, %v1267
      %v1269 = vrot.slane %v1267, 4
      %v1270 = vrot.slane %v213, 5
      %v1271 = vsel %vm1215, %v1269, %v1270
      %v1272 = vrot.slane %v1173, 5
      %v1273 = vrot.slane %v1272, 4
      %v1274 = vrot.slane %v190, 5
      %v1275 = vsel %vm1215, %v1273, %v1274
      %v1276 = vrot.slane %v1274, 4
      %v1277 = vrot.slane %v214, 5
      %v1278 = vsel %vm1215, %v1276, %v1277
      %v1279 = vrot.slane %v1174, 5
      %v1280 = vrot.slane %v1279, 4
      %v1281 = vrot.slane %v192, 5
      %v1282 = vsel %vm1215, %v1280, %v1281
      %v1283 = vrot.slane %v1281, 4
      %v1284 = vrot.slane %v215, 5
      %v1285 = vsel %vm1215, %v1283, %v1284
      %v1286 = vrot.slane %v1175, 5
      %v1287 = vrot.slane %v1286, 4
      %v1288 = vrot.slane %v194, 5
      %v1289 = vsel %vm1215, %v1287, %v1288
      %v1290 = vrot.slane %v1288, 4
      %v1291 = vrot.slane %v216, 5
      %v1292 = vsel %vm1215, %v1290, %v1291
      %v1293 = vrot.slane %v1176, 5
      %v1294 = vrot.slane %v1293, 4
      %v1295 = vrot.slane %v196, 5
      %v1296 = vsel %vm1215, %v1294, %v1295
      %v1297 = vrot.slane %v1295, 4
      %v1298 = vrot.slane %v217, 5
      %v1299 = vsel %vm1215, %v1297, %v1298
      %v1300 = vrot.slane %v1177, 5
      %v1301 = vrot.slane %v1300, 4
      %v1302 = vrot.slane %v198, 5
      %v1303 = vsel %vm1215, %v1301, %v1302
      %v1304 = vrot.slane %v1302, 4
      %v1305 = vrot.slane %v218, 5
      %v1306 = vsel %vm1215, %v1304, %v1305
      %v1307 = vrot.slane %v1178, 5
      %v1308 = vrot.slane %v1307, 4
      %v1309 = vrot.slane %v200, 5
      %v1310 = vsel %vm1215, %v1308, %v1309
      %v1311 = vrot.slane %v1309, 4
      %v1312 = vrot.slane %v219, 5
      %v1313 = vsel %vm1215, %v1311, %v1312
      %v1314 = vrot.slane %v1179, 5
      %v1315 = vrot.slane %v1314, 4
      %v1316 = vrot.slane %v202, 5
      %v1317 = vsel %vm1215, %v1315, %v1316
      %v1318 = vrot.slane %v1316, 4
      %v1319 = vrot.slane %v220, 5
      %v1320 = vsel %vm1215, %v1318, %v1319
      %v1321 = vrot.slane %v1180, 5
      %v1322 = vrot.slane %v1321, 4
      %v1323 = vrot.slane %v204, 5
      %v1324 = vsel %vm1215, %v1322, %v1323
      %v1325 = vrot.slane %v1323, 4
      %v1326 = vrot.slane %v221, 5
      %v1327 = vsel %vm1215, %v1325, %v1326
      %s1328 = scalar_lea.vmem %s1, 4
      %v1329 = vld [vmem:[%s1328] sm:$0x3]
      %v1330 = vunpack.c.l.b16 %v1219
      %v1331 = vunpack.c.l.b16 %v1222
      %v1332 = vunpack.c.l.b16 %v1226
      %v1333 = vunpack.c.l.b16 %v1229
      %v1334 = vunpack.c.l.b16 %v1233
      %v1335 = vunpack.c.l.b16 %v1236
      %v1336 = vunpack.c.l.b16 %v1240
      %v1337 = vunpack.c.l.b16 %v1243
      %v1338 = vunpack.c.l.b16 %v1247
      %v1339 = vunpack.c.l.b16 %v1250
      %v1340 = vunpack.c.l.b16 %v1254
      %v1341 = vunpack.c.l.b16 %v1257
      %v1342 = vunpack.c.l.b16 %v1261
      %v1343 = vunpack.c.l.b16 %v1264
      %v1344 = vunpack.c.l.b16 %v1268
      %v1345 = vunpack.c.l.b16 %v1271
      %v1346 = vunpack.c.l.b16 %v1275
      %v1347 = vunpack.c.l.b16 %v1278
      %v1348 = vunpack.c.l.b16 %v1282
      %v1349 = vunpack.c.l.b16 %v1285
      %v1350 = vunpack.c.l.b16 %v1289
      %v1351 = vunpack.c.l.b16 %v1292
      %v1352 = vunpack.c.l.b16 %v1296
      %v1353 = vunpack.c.l.b16 %v1299
      %v1354 = vunpack.c.l.b16 %v1303
      %v1355 = vunpack.c.l.b16 %v1306
      %v1356 = vunpack.c.l.b16 %v1310
      %v1357 = vunpack.c.l.b16 %v1313
      %v1358 = vunpack.c.l.b16 %v1317
      %v1359 = vunpack.c.l.b16 %v1320
      %v1360 = vunpack.c.l.b16 %v1324
      %v1361 = vunpack.c.l.b16 %v1327
      %v1362 = vpack.c.b16 %v1331, %v1330
      %v1363 = vpack.c.b16 %v1333, %v1332
      %v1364 = vpack.c.b16 %v1335, %v1334
      %v1365 = vpack.c.b16 %v1337, %v1336
      %v1366 = vpack.c.b16 %v1339, %v1338
      %v1367 = vpack.c.b16 %v1341, %v1340
      %v1368 = vpack.c.b16 %v1343, %v1342
      %v1369 = vpack.c.b16 %v1345, %v1344
      %v1370 = vpack.c.b16 %v1347, %v1346
      %v1371 = vpack.c.b16 %v1349, %v1348
      %v1372 = vpack.c.b16 %v1351, %v1350
      %v1373 = vpack.c.b16 %v1353, %v1352
      %v1374 = vpack.c.b16 %v1355, %v1354
      %v1375 = vpack.c.b16 %v1357, %v1356
      %v1376 = vpack.c.b16 %v1359, %v1358
      %v1377 = vpack.c.b16 %v1361, %v1360
      %v1379 = vsel %vm659, %v1362, 0
      %v1382 = vsel %vm659, %v1363, 0
      %v1385 = vsel %vm659, %v1364, 0
      %v1388 = vsel %vm659, %v1365, 0
      %v1391 = vsel %vm659, %v1366, 0
      %v1394 = vsel %vm659, %v1367, 0
      %v1397 = vsel %vm659, %v1368, 0
      %v1400 = vsel %vm659, %v1369, 0
      %v1403 = vsel %vm659, %v1370, 0
      %v1406 = vsel %vm659, %v1371, 0
      %v1409 = vsel %vm659, %v1372, 0
      %v1412 = vsel %vm659, %v1373, 0
      %v1415 = vsel %vm659, %v1374, 0
      %v1418 = vsel %vm659, %v1375, 0
      %v1421 = vsel %vm659, %v1376, 0
      %v1424 = vsel %vm659, %v1377, 0
      %v1427 = vsel %vm708, %v1329, 0
      %1429 = vmatprep.subr.bf16.mxu0 0
      %1430 = vmatpush1.bf16.msra.mxu0 0
      %1431 = vmatprep.subr.bf16.mxu0 0
      %1432 = vmatpush1.bf16.msra.mxu0 0
      %1433 = vmatprep.subr.bf16.mxu0 0
      %1434 = vmatpush1.bf16.msra.mxu0 0
      %1435 = vmatprep.subr.bf16.mxu0 0
      %1436 = vmatpush1.bf16.msra.mxu0 0
      %1437 = vmatprep.subr.bf16.mxu0 0
      %1438 = vmatpush1.bf16.msra.mxu0 0
      %1439 = vmatprep.subr.bf16.mxu0 0
      %1440 = vmatpush1.bf16.msra.mxu0 0
      %1441 = vmatprep.subr.bf16.mxu0 0
      %1442 = vmatpush1.bf16.msra.mxu0 0
      %1443 = vmatprep.subr.bf16.mxu0 0
      %1444 = vmatpush1.bf16.msra.mxu0 %v1427
      %1445 = vmatprep.subr.bf16.mxu0 0
      %1446 = vmatpush2.bf16.msra.mxu0 0
      %1447 = vmatprep.subr.bf16.mxu0 0
      %1448 = vmatpush2.bf16.msra.mxu0 0
      %1449 = vmatprep.subr.bf16.mxu0 0
      %1450 = vmatpush2.bf16.msra.mxu0 0
      %1451 = vmatprep.subr.bf16.mxu0 0
      %1452 = vmatpush2.bf16.msra.mxu0 0
      %1453 = vmatprep.subr.bf16.mxu0 0
      %1454 = vmatpush2.bf16.msra.mxu0 0
      %1455 = vmatprep.subr.bf16.mxu0 0
      %1456 = vmatpush2.bf16.msra.mxu0 0
      %1457 = vmatprep.subr.bf16.mxu0 0
      %1458 = vmatpush2.bf16.msra.mxu0 0
      %1459 = vmatprep.subr.bf16.mxu0 0
      %1460 = vmatpush2.bf16.msra.mxu0 0
      %1461 = vmatprep.mubr.bf16.mxu0 0
      %1462 = vmatmul.mubr.bf16.gmra.mxu0 %v1379
      %v1463 = vpop.f32.mrf.mxu0
      %v1464 = vadd.f32 0.0, %v1463
      %v1465 = vpop.f32.mrf.mxu0
      %v1466 = vpop.f32.mrf.mxu0
      %v1467 = vadd.f32 0.0, %v1466
      %v1468 = vpop.f32.mrf.mxu0
      %1469 = vmatprep.mubr.bf16.mxu0 0
      %1470 = vmatmul.mubr.bf16.gmra.mxu0 %v1382
      %v1471 = vpop.f32.mrf.mxu0
      %v1472 = vadd.f32 0.0, %v1471
      %v1473 = vpop.f32.mrf.mxu0
      %v1474 = vpop.f32.mrf.mxu0
      %v1475 = vadd.f32 0.0, %v1474
      %v1476 = vpop.f32.mrf.mxu0
      %1477 = vmatprep.mubr.bf16.mxu0 0
      %1478 = vmatmul.mubr.bf16.gmra.mxu0 %v1385
      %v1479 = vpop.f32.mrf.mxu0
      %v1480 = vadd.f32 0.0, %v1479
      %v1481 = vpop.f32.mrf.mxu0
      %v1482 = vpop.f32.mrf.mxu0
      %v1483 = vadd.f32 0.0, %v1482
      %v1484 = vpop.f32.mrf.mxu0
      %1485 = vmatprep.mubr.bf16.mxu0 0
      %1486 = vmatmul.mubr.bf16.gmra.mxu0 %v1388
      %v1487 = vpop.f32.mrf.mxu0
      %v1488 = vadd.f32 0.0, %v1487
      %v1489 = vpop.f32.mrf.mxu0
      %v1490 = vpop.f32.mrf.mxu0
      %v1491 = vadd.f32 0.0, %v1490
      %v1492 = vpop.f32.mrf.mxu0
      %1493 = vmatprep.mubr.bf16.mxu0 0
      %1494 = vmatmul.mubr.bf16.gmra.mxu0 %v1391
      %v1495 = vpop.f32.mrf.mxu0
      %v1496 = vadd.f32 0.0, %v1495
      %v1497 = vpop.f32.mrf.mxu0
      %v1498 = vpop.f32.mrf.mxu0
      %v1499 = vadd.f32 0.0, %v1498
      %v1500 = vpop.f32.mrf.mxu0
      %1501 = vmatprep.mubr.bf16.mxu0 0
      %1502 = vmatmul.mubr.bf16.gmra.mxu0 %v1394
      %v1503 = vpop.f32.mrf.mxu0
      %v1504 = vadd.f32 0.0, %v1503
      %v1505 = vpop.f32.mrf.mxu0
      %v1506 = vpop.f32.mrf.mxu0
      %v1507 = vadd.f32 0.0, %v1506
      %v1508 = vpop.f32.mrf.mxu0
      %1509 = vmatprep.mubr.bf16.mxu0 0
      %1510 = vmatmul.mubr.bf16.gmra.mxu0 %v1397
      %v1511 = vpop.f32.mrf.mxu0
      %v1512 = vadd.f32 0.0, %v1511
      %v1513 = vpop.f32.mrf.mxu0
      %v1514 = vpop.f32.mrf.mxu0
      %v1515 = vadd.f32 0.0, %v1514
      %v1516 = vpop.f32.mrf.mxu0
      %1517 = vmatprep.mubr.bf16.mxu0 0
      %1518 = vmatmul.mubr.bf16.gmra.mxu0 %v1400
      %v1519 = vpop.f32.mrf.mxu0
      %v1520 = vadd.f32 0.0, %v1519
      %v1521 = vpop.f32.mrf.mxu0
      %v1522 = vpop.f32.mrf.mxu0
      %v1523 = vadd.f32 0.0, %v1522
      %v1524 = vpop.f32.mrf.mxu0
      %1525 = vmatprep.mubr.bf16.mxu0 0
      %1526 = vmatmul.mubr.bf16.gmra.mxu0 %v1403
      %v1527 = vpop.f32.mrf.mxu0
      %v1528 = vadd.f32 0.0, %v1527
      %v1529 = vpop.f32.mrf.mxu0
      %v1530 = vpop.f32.mrf.mxu0
      %v1531 = vadd.f32 0.0, %v1530
      %v1532 = vpop.f32.mrf.mxu0
      %1533 = vmatprep.mubr.bf16.mxu0 0
      %1534 = vmatmul.mubr.bf16.gmra.mxu0 %v1406
      %v1535 = vpop.f32.mrf.mxu0
      %v1536 = vadd.f32 0.0, %v1535
      %v1537 = vpop.f32.mrf.mxu0
      %v1538 = vpop.f32.mrf.mxu0
      %v1539 = vadd.f32 0.0, %v1538
      %v1540 = vpop.f32.mrf.mxu0
      %1541 = vmatprep.mubr.bf16.mxu0 0
      %1542 = vmatmul.mubr.bf16.gmra.mxu0 %v1409
      %v1543 = vpop.f32.mrf.mxu0
      %v1544 = vadd.f32 0.0, %v1543
      %v1545 = vpop.f32.mrf.mxu0
      %v1546 = vpop.f32.mrf.mxu0
      %v1547 = vadd.f32 0.0, %v1546
      %v1548 = vpop.f32.mrf.mxu0
      %1549 = vmatprep.mubr.bf16.mxu0 0
      %1550 = vmatmul.mubr.bf16.gmra.mxu0 %v1412
      %v1551 = vpop.f32.mrf.mxu0
      %v1552 = vadd.f32 0.0, %v1551
      %v1553 = vpop.f32.mrf.mxu0
      %v1554 = vpop.f32.mrf.mxu0
      %v1555 = vadd.f32 0.0, %v1554
      %v1556 = vpop.f32.mrf.mxu0
      %1557 = vmatprep.mubr.bf16.mxu0 0
      %1558 = vmatmul.mubr.bf16.gmra.mxu0 %v1415
      %v1559 = vpop.f32.mrf.mxu0
      %v1560 = vadd.f32 0.0, %v1559
      %v1561 = vpop.f32.mrf.mxu0
      %v1562 = vpop.f32.mrf.mxu0
      %v1563 = vadd.f32 0.0, %v1562
      %v1564 = vpop.f32.mrf.mxu0
      %1565 = vmatprep.mubr.bf16.mxu0 0
      %1566 = vmatmul.mubr.bf16.gmra.mxu0 %v1418
      %v1567 = vpop.f32.mrf.mxu0
      %v1568 = vadd.f32 0.0, %v1567
      %v1569 = vpop.f32.mrf.mxu0
      %v1570 = vpop.f32.mrf.mxu0
      %v1571 = vadd.f32 0.0, %v1570
      %v1572 = vpop.f32.mrf.mxu0
      %1573 = vmatprep.mubr.bf16.mxu0 0
      %1574 = vmatmul.mubr.bf16.gmra.mxu0 %v1421
      %v1575 = vpop.f32.mrf.mxu0
      %v1576 = vadd.f32 0.0, %v1575
      %v1577 = vpop.f32.mrf.mxu0
      %v1578 = vpop.f32.mrf.mxu0
      %v1579 = vadd.f32 0.0, %v1578
      %v1580 = vpop.f32.mrf.mxu0
      %1581 = vmatprep.mubr.bf16.mxu0 0
      %1582 = vmatmul.mubr.bf16.gmra.mxu0 %v1424
      %v1583 = vpop.f32.mrf.mxu0
      %v1584 = vadd.f32 0.0, %v1583
      %v1585 = vpop.f32.mrf.mxu0
      %v1586 = vpop.f32.mrf.mxu0
      %v1587 = vadd.f32 0.0, %v1586
      %v1588 = vpop.f32.mrf.mxu0
      %1589 = vdwg.mxu0
      %v1590 = vadd.f32 %v1039, %v1464
      %v1591 = vadd.f32 %v1042, %v1467
      %v1592 = vadd.f32 %v1047, %v1472
      %v1593 = vadd.f32 %v1050, %v1475
      %v1594 = vadd.f32 %v1055, %v1480
      %v1595 = vadd.f32 %v1058, %v1483
      %v1596 = vadd.f32 %v1063, %v1488
      %v1597 = vadd.f32 %v1066, %v1491
      %v1598 = vadd.f32 %v1071, %v1496
      %v1599 = vadd.f32 %v1074, %v1499
      %v1600 = vadd.f32 %v1079, %v1504
      %v1601 = vadd.f32 %v1082, %v1507
      %v1602 = vadd.f32 %v1087, %v1512
      %v1603 = vadd.f32 %v1090, %v1515
      %v1604 = vadd.f32 %v1095, %v1520
      %v1605 = vadd.f32 %v1098, %v1523
      %v1606 = vadd.f32 %v1103, %v1528
      %v1607 = vadd.f32 %v1106, %v1531
      %v1608 = vadd.f32 %v1111, %v1536
      %v1609 = vadd.f32 %v1114, %v1539
      %v1610 = vadd.f32 %v1119, %v1544
      %v1611 = vadd.f32 %v1122, %v1547
      %v1612 = vadd.f32 %v1127, %v1552
      %v1613 = vadd.f32 %v1130, %v1555
      %v1614 = vadd.f32 %v1135, %v1560
      %v1615 = vadd.f32 %v1138, %v1563
      %v1616 = vadd.f32 %v1143, %v1568
      %v1617 = vadd.f32 %v1146, %v1571
      %v1618 = vadd.f32 %v1151, %v1576
      %v1619 = vadd.f32 %v1154, %v1579
      %v1620 = vadd.f32 %v1159, %v1584
      %v1621 = vadd.f32 %v1162, %v1587
      %s1622 = scalar_lea.vmem %s165, 12
      %v1623 = vld [vmem:[%s1622] sm:$0xf]
      %v1624 = vld [vmem:[%s1622 + $0x4] sm:$0xf]
      %v1625 = vld [vmem:[%s1622 + $0xc] sm:$0xf]
      %v1626 = vld [vmem:[%s1622 + $0x10] sm:$0xf]
      %v1627 = vld [vmem:[%s1622 + $0x18] sm:$0xf]
      %v1628 = vld [vmem:[%s1622 + $0x1c] sm:$0xf]
      %v1629 = vld [vmem:[%s1622 + $0x24] sm:$0xf]
      %v1630 = vld [vmem:[%s1622 + $0x28] sm:$0xf]
      %v1631 = vld [vmem:[%s1622 + $0x30] sm:$0xf]
      %v1632 = vld [vmem:[%s1622 + $0x34] sm:$0xf]
      %v1633 = vld [vmem:[%s1622 + $0x3c] sm:$0xf]
      %v1634 = vld [vmem:[%s1622 + $0x40] sm:$0xf]
      %v1635 = vld [vmem:[%s1622 + $0x48] sm:$0xf]
      %v1636 = vld [vmem:[%s1622 + $0x4c] sm:$0xf]
      %v1637 = vld [vmem:[%s1622 + $0x54] sm:$0xf]
      %v1638 = vld [vmem:[%s1622 + $0x58] sm:$0xf]
      %v1639 = vld [vmem:[%s1622 + $0x60] sm:$0xf]
      %v1640 = vld [vmem:[%s1622 + $0x64] sm:$0xf]
      %v1641 = vld [vmem:[%s1622 + $0x6c] sm:$0xf]
      %v1642 = vld [vmem:[%s1622 + $0x70] sm:$0xf]
      %v1643 = vld [vmem:[%s1622 + $0x78] sm:$0xf]
      %v1644 = vld [vmem:[%s1622 + $0x7c] sm:$0xf]
      %v1645 = vld [vmem:[%s1622 + $0x84] sm:$0xf]
      %v1646 = vld [vmem:[%s1622 + $0x88] sm:$0xf]
      %v1647 = vld [vmem:[%s1622 + $0x90] sm:$0xf]
      %v1648 = vld [vmem:[%s1622 + $0x94] sm:$0xf]
      %v1649 = vld [vmem:[%s1622 + $0x9c] sm:$0xf]
      %v1650 = vld [vmem:[%s1622 + $0xa0] sm:$0xf]
      %v1651 = vld [vmem:[%s1622 + $0xa8] sm:$0xf]
      %v1652 = vld [vmem:[%s1622 + $0xac] sm:$0xf]
      %v1653 = vld [vmem:[%s1622 + $0xb4] sm:$0xf]
      %v1654 = vld [vmem:[%s1622 + $0xb8] sm:$0xf]
      %s1655 = scalar_lea.vmem %s1, 6
      %v1656 = vld [vmem:[%s1655] sm:$0x3]
      %v1689 = vunpack.c.l.b16 %v1623
      %v1690 = vunpack.c.l.b16 %v1624
      %v1691 = vunpack.c.l.b16 %v1625
      %v1692 = vunpack.c.l.b16 %v1626
      %v1693 = vunpack.c.l.b16 %v1627
      %v1694 = vunpack.c.l.b16 %v1628
      %v1695 = vunpack.c.l.b16 %v1629
      %v1696 = vunpack.c.l.b16 %v1630
      %v1697 = vunpack.c.l.b16 %v1631
      %v1698 = vunpack.c.l.b16 %v1632
      %v1699 = vunpack.c.l.b16 %v1633
      %v1700 = vunpack.c.l.b16 %v1634
      %v1701 = vunpack.c.l.b16 %v1635
      %v1702 = vunpack.c.l.b16 %v1636
      %v1703 = vunpack.c.l.b16 %v1637
      %v1704 = vunpack.c.l.b16 %v1638
      %v1705 = vunpack.c.l.b16 %v1639
      %v1706 = vunpack.c.l.b16 %v1640
      %v1707 = vunpack.c.l.b16 %v1641
      %v1708 = vunpack.c.l.b16 %v1642
      %v1709 = vunpack.c.l.b16 %v1643
      %v1710 = vunpack.c.l.b16 %v1644
      %v1711 = vunpack.c.l.b16 %v1645
      %v1712 = vunpack.c.l.b16 %v1646
      %v1713 = vunpack.c.l.b16 %v1647
      %v1714 = vunpack.c.l.b16 %v1648
      %v1715 = vunpack.c.l.b16 %v1649
      %v1716 = vunpack.c.l.b16 %v1650
      %v1717 = vunpack.c.l.b16 %v1651
      %v1718 = vunpack.c.l.b16 %v1652
      %v1719 = vunpack.c.l.b16 %v1653
      %v1720 = vunpack.c.l.b16 %v1654
      %v1721 = vpack.c.b16 %v1690, %v1689
      %v1722 = vpack.c.b16 %v1692, %v1691
      %v1723 = vpack.c.b16 %v1694, %v1693
      %v1724 = vpack.c.b16 %v1696, %v1695
      %v1725 = vpack.c.b16 %v1698, %v1697
      %v1726 = vpack.c.b16 %v1700, %v1699
      %v1727 = vpack.c.b16 %v1702, %v1701
      %v1728 = vpack.c.b16 %v1704, %v1703
      %v1729 = vpack.c.b16 %v1706, %v1705
      %v1730 = vpack.c.b16 %v1708, %v1707
      %v1731 = vpack.c.b16 %v1710, %v1709
      %v1732 = vpack.c.b16 %v1712, %v1711
      %v1733 = vpack.c.b16 %v1714, %v1713
      %v1734 = vpack.c.b16 %v1716, %v1715
      %v1735 = vpack.c.b16 %v1718, %v1717
      %v1736 = vpack.c.b16 %v1720, %v1719
      %v1738 = vsel %vm659, %v1721, 0
      %v1741 = vsel %vm659, %v1722, 0
      %v1744 = vsel %vm659, %v1723, 0
      %v1747 = vsel %vm659, %v1724, 0
      %v1750 = vsel %vm659, %v1725, 0
      %v1753 = vsel %vm659, %v1726, 0
      %v1756 = vsel %vm659, %v1727, 0
      %v1759 = vsel %vm659, %v1728, 0
      %v1762 = vsel %vm659, %v1729, 0
      %v1765 = vsel %vm659, %v1730, 0
      %v1768 = vsel %vm659, %v1731, 0
      %v1771 = vsel %vm659, %v1732, 0
      %v1774 = vsel %vm659, %v1733, 0
      %v1777 = vsel %vm659, %v1734, 0
      %v1780 = vsel %vm659, %v1735, 0
      %v1783 = vsel %vm659, %v1736, 0
      %v1786 = vsel %vm708, %v1656, 0
      %1788 = vmatprep.subr.bf16.mxu0 0
      %1789 = vmatpush1.bf16.msra.mxu0 0
      %1790 = vmatprep.subr.bf16.mxu0 0
      %1791 = vmatpush1.bf16.msra.mxu0 0
      %1792 = vmatprep.subr.bf16.mxu0 0
      %1793 = vmatpush1.bf16.msra.mxu0 0
      %1794 = vmatprep.subr.bf16.mxu0 0
      %1795 = vmatpush1.bf16.msra.mxu0 0
      %1796 = vmatprep.subr.bf16.mxu0 0
      %1797 = vmatpush1.bf16.msra.mxu0 0
      %1798 = vmatprep.subr.bf16.mxu0 0
      %1799 = vmatpush1.bf16.msra.mxu0 0
      %1800 = vmatprep.subr.bf16.mxu0 0
      %1801 = vmatpush1.bf16.msra.mxu0 0
      %1802 = vmatprep.subr.bf16.mxu0 0
      %1803 = vmatpush1.bf16.msra.mxu0 %v1786
      %1804 = vmatprep.subr.bf16.mxu0 0
      %1805 = vmatpush2.bf16.msra.mxu0 0
      %1806 = vmatprep.subr.bf16.mxu0 0
      %1807 = vmatpush2.bf16.msra.mxu0 0
      %1808 = vmatprep.subr.bf16.mxu0 0
      %1809 = vmatpush2.bf16.msra.mxu0 0
      %1810 = vmatprep.subr.bf16.mxu0 0
      %1811 = vmatpush2.bf16.msra.mxu0 0
      %1812 = vmatprep.subr.bf16.mxu0 0
      %1813 = vmatpush2.bf16.msra.mxu0 0
      %1814 = vmatprep.subr.bf16.mxu0 0
      %1815 = vmatpush2.bf16.msra.mxu0 0
      %1816 = vmatprep.subr.bf16.mxu0 0
      %1817 = vmatpush2.bf16.msra.mxu0 0
      %1818 = vmatprep.subr.bf16.mxu0 0
      %1819 = vmatpush2.bf16.msra.mxu0 0
      %1820 = vmatprep.mubr.bf16.mxu0 0
      %1821 = vmatmul.mubr.bf16.gmra.mxu0 %v1738
      %v1822 = vpop.f32.mrf.mxu0
      %v1823 = vadd.f32 0.0, %v1822
      %v1824 = vpop.f32.mrf.mxu0
      %v1825 = vpop.f32.mrf.mxu0
      %v1826 = vadd.f32 0.0, %v1825
      %v1827 = vpop.f32.mrf.mxu0
      %1828 = vmatprep.mubr.bf16.mxu0 0
      %1829 = vmatmul.mubr.bf16.gmra.mxu0 %v1741
      %v1830 = vpop.f32.mrf.mxu0
      %v1831 = vadd.f32 0.0, %v1830
      %v1832 = vpop.f32.mrf.mxu0
      %v1833 = vpop.f32.mrf.mxu0
      %v1834 = vadd.f32 0.0, %v1833
      %v1835 = vpop.f32.mrf.mxu0
      %1836 = vmatprep.mubr.bf16.mxu0 0
      %1837 = vmatmul.mubr.bf16.gmra.mxu0 %v1744
      %v1838 = vpop.f32.mrf.mxu0
      %v1839 = vadd.f32 0.0, %v1838
      %v1840 = vpop.f32.mrf.mxu0
      %v1841 = vpop.f32.mrf.mxu0
      %v1842 = vadd.f32 0.0, %v1841
      %v1843 = vpop.f32.mrf.mxu0
      %1844 = vmatprep.mubr.bf16.mxu0 0
      %1845 = vmatmul.mubr.bf16.gmra.mxu0 %v1747
      %v1846 = vpop.f32.mrf.mxu0
      %v1847 = vadd.f32 0.0, %v1846
      %v1848 = vpop.f32.mrf.mxu0
      %v1849 = vpop.f32.mrf.mxu0
      %v1850 = vadd.f32 0.0, %v1849
      %v1851 = vpop.f32.mrf.mxu0
      %1852 = vmatprep.mubr.bf16.mxu0 0
      %1853 = vmatmul.mubr.bf16.gmra.mxu0 %v1750
      %v1854 = vpop.f32.mrf.mxu0
      %v1855 = vadd.f32 0.0, %v1854
      %v1856 = vpop.f32.mrf.mxu0
      %v1857 = vpop.f32.mrf.mxu0
      %v1858 = vadd.f32 0.0, %v1857
      %v1859 = vpop.f32.mrf.mxu0
      %1860 = vmatprep.mubr.bf16.mxu0 0
      %1861 = vmatmul.mubr.bf16.gmra.mxu0 %v1753
      %v1862 = vpop.f32.mrf.mxu0
      %v1863 = vadd.f32 0.0, %v1862
      %v1864 = vpop.f32.mrf.mxu0
      %v1865 = vpop.f32.mrf.mxu0
      %v1866 = vadd.f32 0.0, %v1865
      %v1867 = vpop.f32.mrf.mxu0
      %1868 = vmatprep.mubr.bf16.mxu0 0
      %1869 = vmatmul.mubr.bf16.gmra.mxu0 %v1756
      %v1870 = vpop.f32.mrf.mxu0
      %v1871 = vadd.f32 0.0, %v1870
      %v1872 = vpop.f32.mrf.mxu0
      %v1873 = vpop.f32.mrf.mxu0
      %v1874 = vadd.f32 0.0, %v1873
      %v1875 = vpop.f32.mrf.mxu0
      %1876 = vmatprep.mubr.bf16.mxu0 0
      %1877 = vmatmul.mubr.bf16.gmra.mxu0 %v1759
      %v1878 = vpop.f32.mrf.mxu0
      %v1879 = vadd.f32 0.0, %v1878
      %v1880 = vpop.f32.mrf.mxu0
      %v1881 = vpop.f32.mrf.mxu0
      %v1882 = vadd.f32 0.0, %v1881
      %v1883 = vpop.f32.mrf.mxu0
      %1884 = vmatprep.mubr.bf16.mxu0 0
      %1885 = vmatmul.mubr.bf16.gmra.mxu0 %v1762
      %v1886 = vpop.f32.mrf.mxu0
      %v1887 = vadd.f32 0.0, %v1886
      %v1888 = vpop.f32.mrf.mxu0
      %v1889 = vpop.f32.mrf.mxu0
      %v1890 = vadd.f32 0.0, %v1889
      %v1891 = vpop.f32.mrf.mxu0
      %1892 = vmatprep.mubr.bf16.mxu0 0
      %1893 = vmatmul.mubr.bf16.gmra.mxu0 %v1765
      %v1894 = vpop.f32.mrf.mxu0
      %v1895 = vadd.f32 0.0, %v1894
      %v1896 = vpop.f32.mrf.mxu0
      %v1897 = vpop.f32.mrf.mxu0
      %v1898 = vadd.f32 0.0, %v1897
      %v1899 = vpop.f32.mrf.mxu0
      %1900 = vmatprep.mubr.bf16.mxu0 0
      %1901 = vmatmul.mubr.bf16.gmra.mxu0 %v1768
      %v1902 = vpop.f32.mrf.mxu0
      %v1903 = vadd.f32 0.0, %v1902
      %v1904 = vpop.f32.mrf.mxu0
      %v1905 = vpop.f32.mrf.mxu0
      %v1906 = vadd.f32 0.0, %v1905
      %v1907 = vpop.f32.mrf.mxu0
      %1908 = vmatprep.mubr.bf16.mxu0 0
      %1909 = vmatmul.mubr.bf16.gmra.mxu0 %v1771
      %v1910 = vpop.f32.mrf.mxu0
      %v1911 = vadd.f32 0.0, %v1910
      %v1912 = vpop.f32.mrf.mxu0
      %v1913 = vpop.f32.mrf.mxu0
      %v1914 = vadd.f32 0.0, %v1913
      %v1915 = vpop.f32.mrf.mxu0
      %1916 = vmatprep.mubr.bf16.mxu0 0
      %1917 = vmatmul.mubr.bf16.gmra.mxu0 %v1774
      %v1918 = vpop.f32.mrf.mxu0
      %v1919 = vadd.f32 0.0, %v1918
      %v1920 = vpop.f32.mrf.mxu0
      %v1921 = vpop.f32.mrf.mxu0
      %v1922 = vadd.f32 0.0, %v1921
      %v1923 = vpop.f32.mrf.mxu0
      %1924 = vmatprep.mubr.bf16.mxu0 0
      %1925 = vmatmul.mubr.bf16.gmra.mxu0 %v1777
      %v1926 = vpop.f32.mrf.mxu0
      %v1927 = vadd.f32 0.0, %v1926
      %v1928 = vpop.f32.mrf.mxu0
      %v1929 = vpop.f32.mrf.mxu0
      %v1930 = vadd.f32 0.0, %v1929
      %v1931 = vpop.f32.mrf.mxu0
      %1932 = vmatprep.mubr.bf16.mxu0 0
      %1933 = vmatmul.mubr.bf16.gmra.mxu0 %v1780
      %v1934 = vpop.f32.mrf.mxu0
      %v1935 = vadd.f32 0.0, %v1934
      %v1936 = vpop.f32.mrf.mxu0
      %v1937 = vpop.f32.mrf.mxu0
      %v1938 = vadd.f32 0.0, %v1937
      %v1939 = vpop.f32.mrf.mxu0
      %1940 = vmatprep.mubr.bf16.mxu0 0
      %1941 = vmatmul.mubr.bf16.gmra.mxu0 %v1783
      %v1942 = vpop.f32.mrf.mxu0
      %v1943 = vadd.f32 0.0, %v1942
      %v1944 = vpop.f32.mrf.mxu0
      %v1945 = vpop.f32.mrf.mxu0
      %v1946 = vadd.f32 0.0, %v1945
      %v1947 = vpop.f32.mrf.mxu0
      %1948 = vdwg.mxu0
      %v1949 = vadd.f32 %v1590, %v1823
      %v1950 = vadd.f32 %v1591, %v1826
      %v1951 = vadd.f32 %v1592, %v1831
      %v1952 = vadd.f32 %v1593, %v1834
      %v1953 = vadd.f32 %v1594, %v1839
      %v1954 = vadd.f32 %v1595, %v1842
      %v1955 = vadd.f32 %v1596, %v1847
      %v1956 = vadd.f32 %v1597, %v1850
      %v1957 = vadd.f32 %v1598, %v1855
      %v1958 = vadd.f32 %v1599, %v1858
      %v1959 = vadd.f32 %v1600, %v1863
      %v1960 = vadd.f32 %v1601, %v1866
      %v1961 = vadd.f32 %v1602, %v1871
      %v1962 = vadd.f32 %v1603, %v1874
      %v1963 = vadd.f32 %v1604, %v1879
      %v1964 = vadd.f32 %v1605, %v1882
      %v1965 = vadd.f32 %v1606, %v1887
      %v1966 = vadd.f32 %v1607, %v1890
      %v1967 = vadd.f32 %v1608, %v1895
      %v1968 = vadd.f32 %v1609, %v1898
      %v1969 = vadd.f32 %v1610, %v1903
      %v1970 = vadd.f32 %v1611, %v1906
      %v1971 = vadd.f32 %v1612, %v1911
      %v1972 = vadd.f32 %v1613, %v1914
      %v1973 = vadd.f32 %v1614, %v1919
      %v1974 = vadd.f32 %v1615, %v1922
      %v1975 = vadd.f32 %v1616, %v1927
      %v1976 = vadd.f32 %v1617, %v1930
      %v1977 = vadd.f32 %v1618, %v1935
      %v1978 = vadd.f32 %v1619, %v1938
      %v1979 = vadd.f32 %v1620, %v1943
      %v1980 = vadd.f32 %v1621, %v1946
      %v1981 = vld [vmem:[%s1622] sm:$0xf]
      %v1982 = vld [vmem:[%s1622 + $0x4] sm:$0xf]
      %v1983 = vld [vmem:[%s1622 + $0x8] sm:$0x1]
      %v1984 = vld [vmem:[%s1622 + $0xc] sm:$0xf]
      %v1985 = vld [vmem:[%s1622 + $0x10] sm:$0xf]
      %v1986 = vld [vmem:[%s1622 + $0x14] sm:$0x1]
      %v1987 = vld [vmem:[%s1622 + $0x18] sm:$0xf]
      %v1988 = vld [vmem:[%s1622 + $0x1c] sm:$0xf]
      %v1989 = vld [vmem:[%s1622 + $0x20] sm:$0x1]
      %v1990 = vld [vmem:[%s1622 + $0x24] sm:$0xf]
      %v1991 = vld [vmem:[%s1622 + $0x28] sm:$0xf]
      %v1992 = vld [vmem:[%s1622 + $0x2c] sm:$0x1]
      %v1993 = vld [vmem:[%s1622 + $0x30] sm:$0xf]
      %v1994 = vld [vmem:[%s1622 + $0x34] sm:$0xf]
      %v1995 = vld [vmem:[%s1622 + $0x38] sm:$0x1]
      %v1996 = vld [vmem:[%s1622 + $0x3c] sm:$0xf]
      %v1997 = vld [vmem:[%s1622 + $0x40] sm:$0xf]
      %v1998 = vld [vmem:[%s1622 + $0x44] sm:$0x1]
      %v1999 = vld [vmem:[%s1622 + $0x48] sm:$0xf]
      %v2000 = vld [vmem:[%s1622 + $0x4c] sm:$0xf]
      %v2001 = vld [vmem:[%s1622 + $0x50] sm:$0x1]
      %v2002 = vld [vmem:[%s1622 + $0x54] sm:$0xf]
      %v2003 = vld [vmem:[%s1622 + $0x58] sm:$0xf]
      %v2004 = vld [vmem:[%s1622 + $0x5c] sm:$0x1]
      %v2005 = vld [vmem:[%s1622 + $0x60] sm:$0xf]
      %v2006 = vld [vmem:[%s1622 + $0x64] sm:$0xf]
      %v2007 = vld [vmem:[%s1622 + $0x68] sm:$0x1]
      %v2008 = vld [vmem:[%s1622 + $0x6c] sm:$0xf]
      %v2009 = vld [vmem:[%s1622 + $0x70] sm:$0xf]
      %v2010 = vld [vmem:[%s1622 + $0x74] sm:$0x1]
      %v2011 = vld [vmem:[%s1622 + $0x78] sm:$0xf]
      %v2012 = vld [vmem:[%s1622 + $0x7c] sm:$0xf]
      %v2013 = vld [vmem:[%s1622 + $0x80] sm:$0x1]
      %v2014 = vld [vmem:[%s1622 + $0x84] sm:$0xf]
      %v2015 = vld [vmem:[%s1622 + $0x88] sm:$0xf]
      %v2016 = vld [vmem:[%s1622 + $0x8c] sm:$0x1]
      %v2017 = vld [vmem:[%s1622 + $0x90] sm:$0xf]
      %v2018 = vld [vmem:[%s1622 + $0x94] sm:$0xf]
      %v2019 = vld [vmem:[%s1622 + $0x98] sm:$0x1]
      %v2020 = vld [vmem:[%s1622 + $0x9c] sm:$0xf]
      %v2021 = vld [vmem:[%s1622 + $0xa0] sm:$0xf]
      %v2022 = vld [vmem:[%s1622 + $0xa4] sm:$0x1]
      %v2023 = vld [vmem:[%s1622 + $0xa8] sm:$0xf]
      %v2024 = vld [vmem:[%s1622 + $0xac] sm:$0xf]
      %v2025 = vld [vmem:[%s1622 + $0xb0] sm:$0x1]
      %v2026 = vld [vmem:[%s1622 + $0xb4] sm:$0xf]
      %v2027 = vld [vmem:[%s1622 + $0xb8] sm:$0xf]
      %v2028 = vld [vmem:[%s1622 + $0xbc] sm:$0x1]
      %v2030 = vshrl.u32 %v1981, 16
      %v2032 = vrot.slane %v2030, 4
      %v2033 = vshll.u32 %v1981, 16
      %v2035 = vrot.slane %v2033, 5
      %v2036 = vor.u32 %v2032, %v2035
      %v2037 = vrot.slane %v2036, 4
      %v2039 = vshll.u32 %v1982, 16
      %v2041 = vrot.slane %v2039, 5
      %v2042 = vsel %vm224, %v2037, %v2041
      %v2043 = vshrl.u32 %v1982, 16
      %v2045 = vrot.slane %v2043, 4
      %v2046 = vor.u32 %v2045, %v2041
      %v2047 = vrot.slane %v2046, 4
      %v2049 = vshll.u32 %v1983, 16
      %v2051 = vrot.slane %v2049, 5
      %v2052 = vsel %vm224, %v2047, %v2051
      %v2054 = vshrl.u32 %v1984, 16
      %v2056 = vrot.slane %v2054, 4
      %v2057 = vshll.u32 %v1984, 16
      %v2059 = vrot.slane %v2057, 5
      %v2060 = vor.u32 %v2056, %v2059
      %v2061 = vrot.slane %v2060, 4
      %v2063 = vshll.u32 %v1985, 16
      %v2065 = vrot.slane %v2063, 5
      %v2066 = vsel %vm224, %v2061, %v2065
      %v2067 = vshrl.u32 %v1985, 16
      %v2069 = vrot.slane %v2067, 4
      %v2070 = vor.u32 %v2069, %v2065
      %v2071 = vrot.slane %v2070, 4
      %v2073 = vshll.u32 %v1986, 16
      %v2075 = vrot.slane %v2073, 5
      %v2076 = vsel %vm224, %v2071, %v2075
      %v2078 = vshrl.u32 %v1987, 16
      %v2080 = vrot.slane %v2078, 4
      %v2081 = vshll.u32 %v1987, 16
      %v2083 = vrot.slane %v2081, 5
      %v2084 = vor.u32 %v2080, %v2083
      %v2085 = vrot.slane %v2084, 4
      %v2087 = vshll.u32 %v1988, 16
      %v2089 = vrot.slane %v2087, 5
      %v2090 = vsel %vm224, %v2085, %v2089
      %v2091 = vshrl.u32 %v1988, 16
      %v2093 = vrot.slane %v2091, 4
      %v2094 = vor.u32 %v2093, %v2089
      %v2095 = vrot.slane %v2094, 4
      %v2097 = vshll.u32 %v1989, 16
      %v2099 = vrot.slane %v2097, 5
      %v2100 = vsel %vm224, %v2095, %v2099
      %v2102 = vshrl.u32 %v1990, 16
      %v2104 = vrot.slane %v2102, 4
      %v2105 = vshll.u32 %v1990, 16
      %v2107 = vrot.slane %v2105, 5
      %v2108 = vor.u32 %v2104, %v2107
      %v2109 = vrot.slane %v2108, 4
      %v2111 = vshll.u32 %v1991, 16
      %v2113 = vrot.slane %v2111, 5
      %v2114 = vsel %vm224, %v2109, %v2113
      %v2115 = vshrl.u32 %v1991, 16
      %v2117 = vrot.slane %v2115, 4
      %v2118 = vor.u32 %v2117, %v2113
      %v2119 = vrot.slane %v2118, 4
      %v2121 = vshll.u32 %v1992, 16
      %v2123 = vrot.slane %v2121, 5
      %v2124 = vsel %vm224, %v2119, %v2123
      %v2126 = vshrl.u32 %v1993, 16
      %v2128 = vrot.slane %v2126, 4
      %v2129 = vshll.u32 %v1993, 16
      %v2131 = vrot.slane %v2129, 5
      %v2132 = vor.u32 %v2128, %v2131
      %v2133 = vrot.slane %v2132, 4
      %v2135 = vshll.u32 %v1994, 16
      %v2137 = vrot.slane %v2135, 5
      %v2138 = vsel %vm224, %v2133, %v2137
      %v2139 = vshrl.u32 %v1994, 16
      %v2141 = vrot.slane %v2139, 4
      %v2142 = vor.u32 %v2141, %v2137
      %v2143 = vrot.slane %v2142, 4
      %v2145 = vshll.u32 %v1995, 16
      %v2147 = vrot.slane %v2145, 5
      %v2148 = vsel %vm224, %v2143, %v2147
      %v2150 = vshrl.u32 %v1996, 16
      %v2152 = vrot.slane %v2150, 4
      %v2153 = vshll.u32 %v1996, 16
      %v2155 = vrot.slane %v2153, 5
      %v2156 = vor.u32 %v2152, %v2155
      %v2157 = vrot.slane %v2156, 4
      %v2159 = vshll.u32 %v1997, 16
      %v2161 = vrot.slane %v2159, 5
      %v2162 = vsel %vm224, %v2157, %v2161
      %v2163 = vshrl.u32 %v1997, 16
      %v2165 = vrot.slane %v2163, 4
      %v2166 = vor.u32 %v2165, %v2161
      %v2167 = vrot.slane %v2166, 4
      %v2169 = vshll.u32 %v1998, 16
      %v2171 = vrot.slane %v2169, 5
      %v2172 = vsel %vm224, %v2167, %v2171
      %v2174 = vshrl.u32 %v1999, 16
      %v2176 = vrot.slane %v2174, 4
      %v2177 = vshll.u32 %v1999, 16
      %v2179 = vrot.slane %v2177, 5
      %v2180 = vor.u32 %v2176, %v2179
      %v2181 = vrot.slane %v2180, 4
      %v2183 = vshll.u32 %v2000, 16
      %v2185 = vrot.slane %v2183, 5
      %v2186 = vsel %vm224, %v2181, %v2185
      %v2187 = vshrl.u32 %v2000, 16
      %v2189 = vrot.slane %v2187, 4
      %v2190 = vor.u32 %v2189, %v2185
      %v2191 = vrot.slane %v2190, 4
      %v2193 = vshll.u32 %v2001, 16
      %v2195 = vrot.slane %v2193, 5
      %v2196 = vsel %vm224, %v2191, %v2195
      %v2198 = vshrl.u32 %v2002, 16
      %v2200 = vrot.slane %v2198, 4
      %v2201 = vshll.u32 %v2002, 16
      %v2203 = vrot.slane %v2201, 5
      %v2204 = vor.u32 %v2200, %v2203
      %v2205 = vrot.slane %v2204, 4
      %v2207 = vshll.u32 %v2003, 16
      %v2209 = vrot.slane %v2207, 5
      %v2210 = vsel %vm224, %v2205, %v2209
      %v2211 = vshrl.u32 %v2003, 16
      %v2213 = vrot.slane %v2211, 4
      %v2214 = vor.u32 %v2213, %v2209
      %v2215 = vrot.slane %v2214, 4
      %v2217 = vshll.u32 %v2004, 16
      %v2219 = vrot.slane %v2217, 5
      %v2220 = vsel %vm224, %v2215, %v2219
      %v2222 = vshrl.u32 %v2005, 16
      %v2224 = vrot.slane %v2222, 4
      %v2225 = vshll.u32 %v2005, 16
      %v2227 = vrot.slane %v2225, 5
      %v2228 = vor.u32 %v2224, %v2227
      %v2229 = vrot.slane %v2228, 4
      %v2231 = vshll.u32 %v2006, 16
      %v2233 = vrot.slane %v2231, 5
      %v2234 = vsel %vm224, %v2229, %v2233
      %v2235 = vshrl.u32 %v2006, 16
      %v2237 = vrot.slane %v2235, 4
      %v2238 = vor.u32 %v2237, %v2233
      %v2239 = vrot.slane %v2238, 4
      %v2241 = vshll.u32 %v2007, 16
      %v2243 = vrot.slane %v2241, 5
      %v2244 = vsel %vm224, %v2239, %v2243
      %v2246 = vshrl.u32 %v2008, 16
      %v2248 = vrot.slane %v2246, 4
      %v2249 = vshll.u32 %v2008, 16
      %v2251 = vrot.slane %v2249, 5
      %v2252 = vor.u32 %v2248, %v2251
      %v2253 = vrot.slane %v2252, 4
      %v2255 = vshll.u32 %v2009, 16
      %v2257 = vrot.slane %v2255, 5
      %v2258 = vsel %vm224, %v2253, %v2257
      %v2259 = vshrl.u32 %v2009, 16
      %v2261 = vrot.slane %v2259, 4
      %v2262 = vor.u32 %v2261, %v2257
      %v2263 = vrot.slane %v2262, 4
      %v2265 = vshll.u32 %v2010, 16
      %v2267 = vrot.slane %v2265, 5
      %v2268 = vsel %vm224, %v2263, %v2267
      %v2270 = vshrl.u32 %v2011, 16
      %v2272 = vrot.slane %v2270, 4
      %v2273 = vshll.u32 %v2011, 16
      %v2275 = vrot.slane %v2273, 5
      %v2276 = vor.u32 %v2272, %v2275
      %v2277 = vrot.slane %v2276, 4
      %v2279 = vshll.u32 %v2012, 16
      %v2281 = vrot.slane %v2279, 5
      %v2282 = vsel %vm224, %v2277, %v2281
      %v2283 = vshrl.u32 %v2012, 16
      %v2285 = vrot.slane %v2283, 4
      %v2286 = vor.u32 %v2285, %v2281
      %v2287 = vrot.slane %v2286, 4
      %v2289 = vshll.u32 %v2013, 16
      %v2291 = vrot.slane %v2289, 5
      %v2292 = vsel %vm224, %v2287, %v2291
      %v2294 = vshrl.u32 %v2014, 16
      %v2296 = vrot.slane %v2294, 4
      %v2297 = vshll.u32 %v2014, 16
      %v2299 = vrot.slane %v2297, 5
      %v2300 = vor.u32 %v2296, %v2299
      %v2301 = vrot.slane %v2300, 4
      %v2303 = vshll.u32 %v2015, 16
      %v2305 = vrot.slane %v2303, 5
      %v2306 = vsel %vm224, %v2301, %v2305
      %v2307 = vshrl.u32 %v2015, 16
      %v2309 = vrot.slane %v2307, 4
      %v2310 = vor.u32 %v2309, %v2305
      %v2311 = vrot.slane %v2310, 4
      %v2313 = vshll.u32 %v2016, 16
      %v2315 = vrot.slane %v2313, 5
      %v2316 = vsel %vm224, %v2311, %v2315
      %v2318 = vshrl.u32 %v2017, 16
      %v2320 = vrot.slane %v2318, 4
      %v2321 = vshll.u32 %v2017, 16
      %v2323 = vrot.slane %v2321, 5
      %v2324 = vor.u32 %v2320, %v2323
      %v2325 = vrot.slane %v2324, 4
      %v2327 = vshll.u32 %v2018, 16
      %v2329 = vrot.slane %v2327, 5
      %v2330 = vsel %vm224, %v2325, %v2329
      %v2331 = vshrl.u32 %v2018, 16
      %v2333 = vrot.slane %v2331, 4
      %v2334 = vor.u32 %v2333, %v2329
      %v2335 = vrot.slane %v2334, 4
      %v2337 = vshll.u32 %v2019, 16
      %v2339 = vrot.slane %v2337, 5
      %v2340 = vsel %vm224, %v2335, %v2339
      %v2342 = vshrl.u32 %v2020, 16
      %v2344 = vrot.slane %v2342, 4
      %v2345 = vshll.u32 %v2020, 16
      %v2347 = vrot.slane %v2345, 5
      %v2348 = vor.u32 %v2344, %v2347
      %v2349 = vrot.slane %v2348, 4
      %v2351 = vshll.u32 %v2021, 16
      %v2353 = vrot.slane %v2351, 5
      %v2354 = vsel %vm224, %v2349, %v2353
      %v2355 = vshrl.u32 %v2021, 16
      %v2357 = vrot.slane %v2355, 4
      %v2358 = vor.u32 %v2357, %v2353
      %v2359 = vrot.slane %v2358, 4
      %v2361 = vshll.u32 %v2022, 16
      %v2363 = vrot.slane %v2361, 5
      %v2364 = vsel %vm224, %v2359, %v2363
      %v2366 = vshrl.u32 %v2023, 16
      %v2368 = vrot.slane %v2366, 4
      %v2369 = vshll.u32 %v2023, 16
      %v2371 = vrot.slane %v2369, 5
      %v2372 = vor.u32 %v2368, %v2371
      %v2373 = vrot.slane %v2372, 4
      %v2375 = vshll.u32 %v2024, 16
      %v2377 = vrot.slane %v2375, 5
      %v2378 = vsel %vm224, %v2373, %v2377
      %v2379 = vshrl.u32 %v2024, 16
      %v2381 = vrot.slane %v2379, 4
      %v2382 = vor.u32 %v2381, %v2377
      %v2383 = vrot.slane %v2382, 4
      %v2385 = vshll.u32 %v2025, 16
      %v2387 = vrot.slane %v2385, 5
      %v2388 = vsel %vm224, %v2383, %v2387
      %v2390 = vshrl.u32 %v2026, 16
      %v2392 = vrot.slane %v2390, 4
      %v2393 = vshll.u32 %v2026, 16
      %v2395 = vrot.slane %v2393, 5
      %v2396 = vor.u32 %v2392, %v2395
      %v2397 = vrot.slane %v2396, 4
      %v2399 = vshll.u32 %v2027, 16
      %v2401 = vrot.slane %v2399, 5
      %v2402 = vsel %vm224, %v2397, %v2401
      %v2403 = vshrl.u32 %v2027, 16
      %v2405 = vrot.slane %v2403, 4
      %v2406 = vor.u32 %v2405, %v2401
      %v2407 = vrot.slane %v2406, 4
      %v2409 = vshll.u32 %v2028, 16
      %v2411 = vrot.slane %v2409, 5
      %v2412 = vsel %vm224, %v2407, %v2411
      %s2413 = scalar_lea.vmem %s1, 8
      %v2414 = vld [vmem:[%s2413] sm:$0x3]
      %v2415 = vunpack.c.l.b16 %v2042
      %v2416 = vunpack.c.l.b16 %v2052
      %v2417 = vunpack.c.l.b16 %v2066
      %v2418 = vunpack.c.l.b16 %v2076
      %v2419 = vunpack.c.l.b16 %v2090
      %v2420 = vunpack.c.l.b16 %v2100
      %v2421 = vunpack.c.l.b16 %v2114
      %v2422 = vunpack.c.l.b16 %v2124
      %v2423 = vunpack.c.l.b16 %v2138
      %v2424 = vunpack.c.l.b16 %v2148
      %v2425 = vunpack.c.l.b16 %v2162
      %v2426 = vunpack.c.l.b16 %v2172
      %v2427 = vunpack.c.l.b16 %v2186
      %v2428 = vunpack.c.l.b16 %v2196
      %v2429 = vunpack.c.l.b16 %v2210
      %v2430 = vunpack.c.l.b16 %v2220
      %v2431 = vunpack.c.l.b16 %v2234
      %v2432 = vunpack.c.l.b16 %v2244
      %v2433 = vunpack.c.l.b16 %v2258
      %v2434 = vunpack.c.l.b16 %v2268
      %v2435 = vunpack.c.l.b16 %v2282
      %v2436 = vunpack.c.l.b16 %v2292
      %v2437 = vunpack.c.l.b16 %v2306
      %v2438 = vunpack.c.l.b16 %v2316
      %v2439 = vunpack.c.l.b16 %v2330
      %v2440 = vunpack.c.l.b16 %v2340
      %v2441 = vunpack.c.l.b16 %v2354
      %v2442 = vunpack.c.l.b16 %v2364
      %v2443 = vunpack.c.l.b16 %v2378
      %v2444 = vunpack.c.l.b16 %v2388
      %v2445 = vunpack.c.l.b16 %v2402
      %v2446 = vunpack.c.l.b16 %v2412
      %v2447 = vpack.c.b16 %v2416, %v2415
      %v2448 = vpack.c.b16 %v2418, %v2417
      %v2449 = vpack.c.b16 %v2420, %v2419
      %v2450 = vpack.c.b16 %v2422, %v2421
      %v2451 = vpack.c.b16 %v2424, %v2423
      %v2452 = vpack.c.b16 %v2426, %v2425
      %v2453 = vpack.c.b16 %v2428, %v2427
      %v2454 = vpack.c.b16 %v2430, %v2429
      %v2455 = vpack.c.b16 %v2432, %v2431
      %v2456 = vpack.c.b16 %v2434, %v2433
      %v2457 = vpack.c.b16 %v2436, %v2435
      %v2458 = vpack.c.b16 %v2438, %v2437
      %v2459 = vpack.c.b16 %v2440, %v2439
      %v2460 = vpack.c.b16 %v2442, %v2441
      %v2461 = vpack.c.b16 %v2444, %v2443
      %v2462 = vpack.c.b16 %v2446, %v2445
      %v2464 = vsel %vm659, %v2447, 0
      %v2467 = vsel %vm659, %v2448, 0
      %v2470 = vsel %vm659, %v2449, 0
      %v2473 = vsel %vm659, %v2450, 0
      %v2476 = vsel %vm659, %v2451, 0
      %v2479 = vsel %vm659, %v2452, 0
      %v2482 = vsel %vm659, %v2453, 0
      %v2485 = vsel %vm659, %v2454, 0
      %v2488 = vsel %vm659, %v2455, 0
      %v2491 = vsel %vm659, %v2456, 0
      %v2494 = vsel %vm659, %v2457, 0
      %v2497 = vsel %vm659, %v2458, 0
      %v2500 = vsel %vm659, %v2459, 0
      %v2503 = vsel %vm659, %v2460, 0
      %v2506 = vsel %vm659, %v2461, 0
      %v2509 = vsel %vm659, %v2462, 0
      %v2512 = vsel %vm708, %v2414, 0
      %2514 = vmatprep.subr.bf16.mxu0 0
      %2515 = vmatpush1.bf16.msra.mxu0 0
      %2516 = vmatprep.subr.bf16.mxu0 0
      %2517 = vmatpush1.bf16.msra.mxu0 0
      %2518 = vmatprep.subr.bf16.mxu0 0
      %2519 = vmatpush1.bf16.msra.mxu0 0
      %2520 = vmatprep.subr.bf16.mxu0 0
      %2521 = vmatpush1.bf16.msra.mxu0 0
      %2522 = vmatprep.subr.bf16.mxu0 0
      %2523 = vmatpush1.bf16.msra.mxu0 0
      %2524 = vmatprep.subr.bf16.mxu0 0
      %2525 = vmatpush1.bf16.msra.mxu0 0
      %2526 = vmatprep.subr.bf16.mxu0 0
      %2527 = vmatpush1.bf16.msra.mxu0 0
      %2528 = vmatprep.subr.bf16.mxu0 0
      %2529 = vmatpush1.bf16.msra.mxu0 %v2512
      %2530 = vmatprep.subr.bf16.mxu0 0
      %2531 = vmatpush2.bf16.msra.mxu0 0
      %2532 = vmatprep.subr.bf16.mxu0 0
      %2533 = vmatpush2.bf16.msra.mxu0 0
      %2534 = vmatprep.subr.bf16.mxu0 0
      %2535 = vmatpush2.bf16.msra.mxu0 0
      %2536 = vmatprep.subr.bf16.mxu0 0
      %2537 = vmatpush2.bf16.msra.mxu0 0
      %2538 = vmatprep.subr.bf16.mxu0 0
      %2539 = vmatpush2.bf16.msra.mxu0 0
      %2540 = vmatprep.subr.bf16.mxu0 0
      %2541 = vmatpush2.bf16.msra.mxu0 0
      %2542 = vmatprep.subr.bf16.mxu0 0
      %2543 = vmatpush2.bf16.msra.mxu0 0
      %2544 = vmatprep.subr.bf16.mxu0 0
      %2545 = vmatpush2.bf16.msra.mxu0 0
      %2546 = vmatprep.mubr.bf16.mxu0 0
      %2547 = vmatmul.mubr.bf16.gmra.mxu0 %v2464
      %v2548 = vpop.f32.mrf.mxu0
      %v2549 = vadd.f32 0.0, %v2548
      %v2550 = vpop.f32.mrf.mxu0
      %v2551 = vpop.f32.mrf.mxu0
      %v2552 = vadd.f32 0.0, %v2551
      %v2553 = vpop.f32.mrf.mxu0
      %2554 = vmatprep.mubr.bf16.mxu0 0
      %2555 = vmatmul.mubr.bf16.gmra.mxu0 %v2467
      %v2556 = vpop.f32.mrf.mxu0
      %v2557 = vadd.f32 0.0, %v2556
      %v2558 = vpop.f32.mrf.mxu0
      %v2559 = vpop.f32.mrf.mxu0
      %v2560 = vadd.f32 0.0, %v2559
      %v2561 = vpop.f32.mrf.mxu0
      %2562 = vmatprep.mubr.bf16.mxu0 0
      %2563 = vmatmul.mubr.bf16.gmra.mxu0 %v2470
      %v2564 = vpop.f32.mrf.mxu0
      %v2565 = vadd.f32 0.0, %v2564
      %v2566 = vpop.f32.mrf.mxu0
      %v2567 = vpop.f32.mrf.mxu0
      %v2568 = vadd.f32 0.0, %v2567
      %v2569 = vpop.f32.mrf.mxu0
      %2570 = vmatprep.mubr.bf16.mxu0 0
      %2571 = vmatmul.mubr.bf16.gmra.mxu0 %v2473
      %v2572 = vpop.f32.mrf.mxu0
      %v2573 = vadd.f32 0.0, %v2572
      %v2574 = vpop.f32.mrf.mxu0
      %v2575 = vpop.f32.mrf.mxu0
      %v2576 = vadd.f32 0.0, %v2575
      %v2577 = vpop.f32.mrf.mxu0
      %2578 = vmatprep.mubr.bf16.mxu0 0
      %2579 = vmatmul.mubr.bf16.gmra.mxu0 %v2476
      %v2580 = vpop.f32.mrf.mxu0
      %v2581 = vadd.f32 0.0, %v2580
      %v2582 = vpop.f32.mrf.mxu0
      %v2583 = vpop.f32.mrf.mxu0
      %v2584 = vadd.f32 0.0, %v2583
      %v2585 = vpop.f32.mrf.mxu0
      %2586 = vmatprep.mubr.bf16.mxu0 0
      %2587 = vmatmul.mubr.bf16.gmra.mxu0 %v2479
      %v2588 = vpop.f32.mrf.mxu0
      %v2589 = vadd.f32 0.0, %v2588
      %v2590 = vpop.f32.mrf.mxu0
      %v2591 = vpop.f32.mrf.mxu0
      %v2592 = vadd.f32 0.0, %v2591
      %v2593 = vpop.f32.mrf.mxu0
      %2594 = vmatprep.mubr.bf16.mxu0 0
      %2595 = vmatmul.mubr.bf16.gmra.mxu0 %v2482
      %v2596 = vpop.f32.mrf.mxu0
      %v2597 = vadd.f32 0.0, %v2596
      %v2598 = vpop.f32.mrf.mxu0
      %v2599 = vpop.f32.mrf.mxu0
      %v2600 = vadd.f32 0.0, %v2599
      %v2601 = vpop.f32.mrf.mxu0
      %2602 = vmatprep.mubr.bf16.mxu0 0
      %2603 = vmatmul.mubr.bf16.gmra.mxu0 %v2485
      %v2604 = vpop.f32.mrf.mxu0
      %v2605 = vadd.f32 0.0, %v2604
      %v2606 = vpop.f32.mrf.mxu0
      %v2607 = vpop.f32.mrf.mxu0
      %v2608 = vadd.f32 0.0, %v2607
      %v2609 = vpop.f32.mrf.mxu0
      %2610 = vmatprep.mubr.bf16.mxu0 0
      %2611 = vmatmul.mubr.bf16.gmra.mxu0 %v2488
      %v2612 = vpop.f32.mrf.mxu0
      %v2613 = vadd.f32 0.0, %v2612
      %v2614 = vpop.f32.mrf.mxu0
      %v2615 = vpop.f32.mrf.mxu0
      %v2616 = vadd.f32 0.0, %v2615
      %v2617 = vpop.f32.mrf.mxu0
      %2618 = vmatprep.mubr.bf16.mxu0 0
      %2619 = vmatmul.mubr.bf16.gmra.mxu0 %v2491
      %v2620 = vpop.f32.mrf.mxu0
      %v2621 = vadd.f32 0.0, %v2620
      %v2622 = vpop.f32.mrf.mxu0
      %v2623 = vpop.f32.mrf.mxu0
      %v2624 = vadd.f32 0.0, %v2623
      %v2625 = vpop.f32.mrf.mxu0
      %2626 = vmatprep.mubr.bf16.mxu0 0
      %2627 = vmatmul.mubr.bf16.gmra.mxu0 %v2494
      %v2628 = vpop.f32.mrf.mxu0
      %v2629 = vadd.f32 0.0, %v2628
      %v2630 = vpop.f32.mrf.mxu0
      %v2631 = vpop.f32.mrf.mxu0
      %v2632 = vadd.f32 0.0, %v2631
      %v2633 = vpop.f32.mrf.mxu0
      %2634 = vmatprep.mubr.bf16.mxu0 0
      %2635 = vmatmul.mubr.bf16.gmra.mxu0 %v2497
      %v2636 = vpop.f32.mrf.mxu0
      %v2637 = vadd.f32 0.0, %v2636
      %v2638 = vpop.f32.mrf.mxu0
      %v2639 = vpop.f32.mrf.mxu0
      %v2640 = vadd.f32 0.0, %v2639
      %v2641 = vpop.f32.mrf.mxu0
      %2642 = vmatprep.mubr.bf16.mxu0 0
      %2643 = vmatmul.mubr.bf16.gmra.mxu0 %v2500
      %v2644 = vpop.f32.mrf.mxu0
      %v2645 = vadd.f32 0.0, %v2644
      %v2646 = vpop.f32.mrf.mxu0
      %v2647 = vpop.f32.mrf.mxu0
      %v2648 = vadd.f32 0.0, %v2647
      %v2649 = vpop.f32.mrf.mxu0
      %2650 = vmatprep.mubr.bf16.mxu0 0
      %2651 = vmatmul.mubr.bf16.gmra.mxu0 %v2503
      %v2652 = vpop.f32.mrf.mxu0
      %v2653 = vadd.f32 0.0, %v2652
      %v2654 = vpop.f32.mrf.mxu0
      %v2655 = vpop.f32.mrf.mxu0
      %v2656 = vadd.f32 0.0, %v2655
      %v2657 = vpop.f32.mrf.mxu0
      %2658 = vmatprep.mubr.bf16.mxu0 0
      %2659 = vmatmul.mubr.bf16.gmra.mxu0 %v2506
      %v2660 = vpop.f32.mrf.mxu0
      %v2661 = vadd.f32 0.0, %v2660
      %v2662 = vpop.f32.mrf.mxu0
      %v2663 = vpop.f32.mrf.mxu0
      %v2664 = vadd.f32 0.0, %v2663
      %v2665 = vpop.f32.mrf.mxu0
      %2666 = vmatprep.mubr.bf16.mxu0 0
      %2667 = vmatmul.mubr.bf16.gmra.mxu0 %v2509
      %v2668 = vpop.f32.mrf.mxu0
      %v2669 = vadd.f32 0.0, %v2668
      %v2670 = vpop.f32.mrf.mxu0
      %v2671 = vpop.f32.mrf.mxu0
      %v2672 = vadd.f32 0.0, %v2671
      %v2673 = vpop.f32.mrf.mxu0
      %2674 = vdwg.mxu0
      %v2675 = vadd.f32 %v1949, %v2549
      %v2676 = vadd.f32 %v1950, %v2552
      %v2677 = vadd.f32 %v1951, %v2557
      %v2678 = vadd.f32 %v1952, %v2560
      %v2679 = vadd.f32 %v1953, %v2565
      %v2680 = vadd.f32 %v1954, %v2568
      %v2681 = vadd.f32 %v1955, %v2573
      %v2682 = vadd.f32 %v1956, %v2576
      %v2683 = vadd.f32 %v1957, %v2581
      %v2684 = vadd.f32 %v1958, %v2584
      %v2685 = vadd.f32 %v1959, %v2589
      %v2686 = vadd.f32 %v1960, %v2592
      %v2687 = vadd.f32 %v1961, %v2597
      %v2688 = vadd.f32 %v1962, %v2600
      %v2689 = vadd.f32 %v1963, %v2605
      %v2690 = vadd.f32 %v1964, %v2608
      %v2691 = vadd.f32 %v1965, %v2613
      %v2692 = vadd.f32 %v1966, %v2616
      %v2693 = vadd.f32 %v1967, %v2621
      %v2694 = vadd.f32 %v1968, %v2624
      %v2695 = vadd.f32 %v1969, %v2629
      %v2696 = vadd.f32 %v1970, %v2632
      %v2697 = vadd.f32 %v1971, %v2637
      %v2698 = vadd.f32 %v1972, %v2640
      %v2699 = vadd.f32 %v1973, %v2645
      %v2700 = vadd.f32 %v1974, %v2648
      %v2701 = vadd.f32 %v1975, %v2653
      %v2702 = vadd.f32 %v1976, %v2656
      %v2703 = vadd.f32 %v1977, %v2661
      %v2704 = vadd.f32 %v1978, %v2664
      %v2705 = vadd.f32 %v1979, %v2669
      %v2706 = vadd.f32 %v1980, %v2672
      %v2707 = vld [vmem:[%s1622] sm:$0xe]
      %v2708 = vld [vmem:[%s1622 + $0xc] sm:$0xe]
      %v2709 = vld [vmem:[%s1622 + $0x18] sm:$0xe]
      %v2710 = vld [vmem:[%s1622 + $0x24] sm:$0xe]
      %v2711 = vld [vmem:[%s1622 + $0x30] sm:$0xe]
      %v2712 = vld [vmem:[%s1622 + $0x3c] sm:$0xe]
      %v2713 = vld [vmem:[%s1622 + $0x48] sm:$0xe]
      %v2714 = vld [vmem:[%s1622 + $0x54] sm:$0xe]
      %v2715 = vld [vmem:[%s1622 + $0x60] sm:$0xe]
      %v2716 = vld [vmem:[%s1622 + $0x6c] sm:$0xe]
      %v2717 = vld [vmem:[%s1622 + $0x78] sm:$0xe]
      %v2718 = vld [vmem:[%s1622 + $0x84] sm:$0xe]
      %v2719 = vld [vmem:[%s1622 + $0x90] sm:$0xe]
      %v2720 = vld [vmem:[%s1622 + $0x9c] sm:$0xe]
      %v2721 = vld [vmem:[%s1622 + $0xa8] sm:$0xe]
      %v2722 = vld [vmem:[%s1622 + $0xb4] sm:$0xe]
      %v2771 = vrot.slane %v2707, 5
      %v2772 = vrot.slane %v2771, 4
      %v2773 = vrot.slane %v1982, 5
      %v2774 = vsel %vm1215, %v2772, %v2773
      %v2775 = vrot.slane %v2773, 4
      %v2776 = vrot.slane %v1983, 5
      %v2777 = vsel %vm1215, %v2775, %v2776
      %v2778 = vrot.slane %v2708, 5
      %v2779 = vrot.slane %v2778, 4
      %v2780 = vrot.slane %v1985, 5
      %v2781 = vsel %vm1215, %v2779, %v2780
      %v2782 = vrot.slane %v2780, 4
      %v2783 = vrot.slane %v1986, 5
      %v2784 = vsel %vm1215, %v2782, %v2783
      %v2785 = vrot.slane %v2709, 5
      %v2786 = vrot.slane %v2785, 4
      %v2787 = vrot.slane %v1988, 5
      %v2788 = vsel %vm1215, %v2786, %v2787
      %v2789 = vrot.slane %v2787, 4
      %v2790 = vrot.slane %v1989, 5
      %v2791 = vsel %vm1215, %v2789, %v2790
      %v2792 = vrot.slane %v2710, 5
      %v2793 = vrot.slane %v2792, 4
      %v2794 = vrot.slane %v1991, 5
      %v2795 = vsel %vm1215, %v2793, %v2794
      %v2796 = vrot.slane %v2794, 4
      %v2797 = vrot.slane %v1992, 5
      %v2798 = vsel %vm1215, %v2796, %v2797
      %v2799 = vrot.slane %v2711, 5
      %v2800 = vrot.slane %v2799, 4
      %v2801 = vrot.slane %v1994, 5
      %v2802 = vsel %vm1215, %v2800, %v2801
      %v2803 = vrot.slane %v2801, 4
      %v2804 = vrot.slane %v1995, 5
      %v2805 = vsel %vm1215, %v2803, %v2804
      %v2806 = vrot.slane %v2712, 5
      %v2807 = vrot.slane %v2806, 4
      %v2808 = vrot.slane %v1997, 5
      %v2809 = vsel %vm1215, %v2807, %v2808
      %v2810 = vrot.slane %v2808, 4
      %v2811 = vrot.slane %v1998, 5
      %v2812 = vsel %vm1215, %v2810, %v2811
      %v2813 = vrot.slane %v2713, 5
      %v2814 = vrot.slane %v2813, 4
      %v2815 = vrot.slane %v2000, 5
      %v2816 = vsel %vm1215, %v2814, %v2815
      %v2817 = vrot.slane %v2815, 4
      %v2818 = vrot.slane %v2001, 5
      %v2819 = vsel %vm1215, %v2817, %v2818
      %v2820 = vrot.slane %v2714, 5
      %v2821 = vrot.slane %v2820, 4
      %v2822 = vrot.slane %v2003, 5
      %v2823 = vsel %vm1215, %v2821, %v2822
      %v2824 = vrot.slane %v2822, 4
      %v2825 = vrot.slane %v2004, 5
      %v2826 = vsel %vm1215, %v2824, %v2825
      %v2827 = vrot.slane %v2715, 5
      %v2828 = vrot.slane %v2827, 4
      %v2829 = vrot.slane %v2006, 5
      %v2830 = vsel %vm1215, %v2828, %v2829
      %v2831 = vrot.slane %v2829, 4
      %v2832 = vrot.slane %v2007, 5
      %v2833 = vsel %vm1215, %v2831, %v2832
      %v2834 = vrot.slane %v2716, 5
      %v2835 = vrot.slane %v2834, 4
      %v2836 = vrot.slane %v2009, 5
      %v2837 = vsel %vm1215, %v2835, %v2836
      %v2838 = vrot.slane %v2836, 4
      %v2839 = vrot.slane %v2010, 5
      %v2840 = vsel %vm1215, %v2838, %v2839
      %v2841 = vrot.slane %v2717, 5
      %v2842 = vrot.slane %v2841, 4
      %v2843 = vrot.slane %v2012, 5
      %v2844 = vsel %vm1215, %v2842, %v2843
      %v2845 = vrot.slane %v2843, 4
      %v2846 = vrot.slane %v2013, 5
      %v2847 = vsel %vm1215, %v2845, %v2846
      %v2848 = vrot.slane %v2718, 5
      %v2849 = vrot.slane %v2848, 4
      %v2850 = vrot.slane %v2015, 5
      %v2851 = vsel %vm1215, %v2849, %v2850
      %v2852 = vrot.slane %v2850, 4
      %v2853 = vrot.slane %v2016, 5
      %v2854 = vsel %vm1215, %v2852, %v2853
      %v2855 = vrot.slane %v2719, 5
      %v2856 = vrot.slane %v2855, 4
      %v2857 = vrot.slane %v2018, 5
      %v2858 = vsel %vm1215, %v2856, %v2857
      %v2859 = vrot.slane %v2857, 4
      %v2860 = vrot.slane %v2019, 5
      %v2861 = vsel %vm1215, %v2859, %v2860
      %v2862 = vrot.slane %v2720, 5
      %v2863 = vrot.slane %v2862, 4
      %v2864 = vrot.slane %v2021, 5
      %v2865 = vsel %vm1215, %v2863, %v2864
      %v2866 = vrot.slane %v2864, 4
      %v2867 = vrot.slane %v2022, 5
      %v2868 = vsel %vm1215, %v2866, %v2867
      %v2869 = vrot.slane %v2721, 5
      %v2870 = vrot.slane %v2869, 4
      %v2871 = vrot.slane %v2024, 5
      %v2872 = vsel %vm1215, %v2870, %v2871
      %v2873 = vrot.slane %v2871, 4
      %v2874 = vrot.slane %v2025, 5
      %v2875 = vsel %vm1215, %v2873, %v2874
      %v2876 = vrot.slane %v2722, 5
      %v2877 = vrot.slane %v2876, 4
      %v2878 = vrot.slane %v2027, 5
      %v2879 = vsel %vm1215, %v2877, %v2878
      %v2880 = vrot.slane %v2878, 4
      %v2881 = vrot.slane %v2028, 5
      %v2882 = vsel %vm1215, %v2880, %v2881
      %s2883 = scalar_lea.vmem %s1, 10
      %v2884 = vld [vmem:[%s2883] sm:$0x3]
      %v2885 = vunpack.c.l.b16 %v2774
      %v2886 = vunpack.c.l.b16 %v2777
      %v2887 = vunpack.c.l.b16 %v2781
      %v2888 = vunpack.c.l.b16 %v2784
      %v2889 = vunpack.c.l.b16 %v2788
      %v2890 = vunpack.c.l.b16 %v2791
      %v2891 = vunpack.c.l.b16 %v2795
      %v2892 = vunpack.c.l.b16 %v2798
      %v2893 = vunpack.c.l.b16 %v2802
      %v2894 = vunpack.c.l.b16 %v2805
      %v2895 = vunpack.c.l.b16 %v2809
      %v2896 = vunpack.c.l.b16 %v2812
      %v2897 = vunpack.c.l.b16 %v2816
      %v2898 = vunpack.c.l.b16 %v2819
      %v2899 = vunpack.c.l.b16 %v2823
      %v2900 = vunpack.c.l.b16 %v2826
      %v2901 = vunpack.c.l.b16 %v2830
      %v2902 = vunpack.c.l.b16 %v2833
      %v2903 = vunpack.c.l.b16 %v2837
      %v2904 = vunpack.c.l.b16 %v2840
      %v2905 = vunpack.c.l.b16 %v2844
      %v2906 = vunpack.c.l.b16 %v2847
      %v2907 = vunpack.c.l.b16 %v2851
      %v2908 = vunpack.c.l.b16 %v2854
      %v2909 = vunpack.c.l.b16 %v2858
      %v2910 = vunpack.c.l.b16 %v2861
      %v2911 = vunpack.c.l.b16 %v2865
      %v2912 = vunpack.c.l.b16 %v2868
      %v2913 = vunpack.c.l.b16 %v2872
      %v2914 = vunpack.c.l.b16 %v2875
      %v2915 = vunpack.c.l.b16 %v2879
      %v2916 = vunpack.c.l.b16 %v2882
      %v2917 = vpack.c.b16 %v2886, %v2885
      %v2918 = vpack.c.b16 %v2888, %v2887
      %v2919 = vpack.c.b16 %v2890, %v2889
      %v2920 = vpack.c.b16 %v2892, %v2891
      %v2921 = vpack.c.b16 %v2894, %v2893
      %v2922 = vpack.c.b16 %v2896, %v2895
      %v2923 = vpack.c.b16 %v2898, %v2897
      %v2924 = vpack.c.b16 %v2900, %v2899
      %v2925 = vpack.c.b16 %v2902, %v2901
      %v2926 = vpack.c.b16 %v2904, %v2903
      %v2927 = vpack.c.b16 %v2906, %v2905
      %v2928 = vpack.c.b16 %v2908, %v2907
      %v2929 = vpack.c.b16 %v2910, %v2909
      %v2930 = vpack.c.b16 %v2912, %v2911
      %v2931 = vpack.c.b16 %v2914, %v2913
      %v2932 = vpack.c.b16 %v2916, %v2915
      %v2934 = vsel %vm659, %v2917, 0
      %v2937 = vsel %vm659, %v2918, 0
      %v2940 = vsel %vm659, %v2919, 0
      %v2943 = vsel %vm659, %v2920, 0
      %v2946 = vsel %vm659, %v2921, 0
      %v2949 = vsel %vm659, %v2922, 0
      %v2952 = vsel %vm659, %v2923, 0
      %v2955 = vsel %vm659, %v2924, 0
      %v2958 = vsel %vm659, %v2925, 0
      %v2961 = vsel %vm659, %v2926, 0
      %v2964 = vsel %vm659, %v2927, 0
      %v2967 = vsel %vm659, %v2928, 0
      %v2970 = vsel %vm659, %v2929, 0
      %v2973 = vsel %vm659, %v2930, 0
      %v2976 = vsel %vm659, %v2931, 0
      %v2979 = vsel %vm659, %v2932, 0
      %v2982 = vsel %vm708, %v2884, 0
      %2984 = vmatprep.subr.bf16.mxu0 0
      %2985 = vmatpush1.bf16.msra.mxu0 0
      %2986 = vmatprep.subr.bf16.mxu0 0
      %2987 = vmatpush1.bf16.msra.mxu0 0
      %2988 = vmatprep.subr.bf16.mxu0 0
      %2989 = vmatpush1.bf16.msra.mxu0 0
      %2990 = vmatprep.subr.bf16.mxu0 0
      %2991 = vmatpush1.bf16.msra.mxu0 0
      %2992 = vmatprep.subr.bf16.mxu0 0
      %2993 = vmatpush1.bf16.msra.mxu0 0
      %2994 = vmatprep.subr.bf16.mxu0 0
      %2995 = vmatpush1.bf16.msra.mxu0 0
      %2996 = vmatprep.subr.bf16.mxu0 0
      %2997 = vmatpush1.bf16.msra.mxu0 0
      %2998 = vmatprep.subr.bf16.mxu0 0
      %2999 = vmatpush1.bf16.msra.mxu0 %v2982
      %3000 = vmatprep.subr.bf16.mxu0 0
      %3001 = vmatpush2.bf16.msra.mxu0 0
      %3002 = vmatprep.subr.bf16.mxu0 0
      %3003 = vmatpush2.bf16.msra.mxu0 0
      %3004 = vmatprep.subr.bf16.mxu0 0
      %3005 = vmatpush2.bf16.msra.mxu0 0
      %3006 = vmatprep.subr.bf16.mxu0 0
      %3007 = vmatpush2.bf16.msra.mxu0 0
      %3008 = vmatprep.subr.bf16.mxu0 0
      %3009 = vmatpush2.bf16.msra.mxu0 0
      %3010 = vmatprep.subr.bf16.mxu0 0
      %3011 = vmatpush2.bf16.msra.mxu0 0
      %3012 = vmatprep.subr.bf16.mxu0 0
      %3013 = vmatpush2.bf16.msra.mxu0 0
      %3014 = vmatprep.subr.bf16.mxu0 0
      %3015 = vmatpush2.bf16.msra.mxu0 0
      %3016 = vmatprep.mubr.bf16.mxu0 0
      %3017 = vmatmul.mubr.bf16.gmra.mxu0 %v2934
      %v3018 = vpop.f32.mrf.mxu0
      %v3019 = vadd.f32 0.0, %v3018
      %v3020 = vpop.f32.mrf.mxu0
      %v3021 = vpop.f32.mrf.mxu0
      %v3022 = vadd.f32 0.0, %v3021
      %v3023 = vpop.f32.mrf.mxu0
      %3024 = vmatprep.mubr.bf16.mxu0 0
      %3025 = vmatmul.mubr.bf16.gmra.mxu0 %v2937
      %v3026 = vpop.f32.mrf.mxu0
      %v3027 = vadd.f32 0.0, %v3026
      %v3028 = vpop.f32.mrf.mxu0
      %v3029 = vpop.f32.mrf.mxu0
      %v3030 = vadd.f32 0.0, %v3029
      %v3031 = vpop.f32.mrf.mxu0
      %3032 = vmatprep.mubr.bf16.mxu0 0
      %3033 = vmatmul.mubr.bf16.gmra.mxu0 %v2940
      %v3034 = vpop.f32.mrf.mxu0
      %v3035 = vadd.f32 0.0, %v3034
      %v3036 = vpop.f32.mrf.mxu0
      %v3037 = vpop.f32.mrf.mxu0
      %v3038 = vadd.f32 0.0, %v3037
      %v3039 = vpop.f32.mrf.mxu0
      %3040 = vmatprep.mubr.bf16.mxu0 0
      %3041 = vmatmul.mubr.bf16.gmra.mxu0 %v2943
      %v3042 = vpop.f32.mrf.mxu0
      %v3043 = vadd.f32 0.0, %v3042
      %v3044 = vpop.f32.mrf.mxu0
      %v3045 = vpop.f32.mrf.mxu0
      %v3046 = vadd.f32 0.0, %v3045
      %v3047 = vpop.f32.mrf.mxu0
      %3048 = vmatprep.mubr.bf16.mxu0 0
      %3049 = vmatmul.mubr.bf16.gmra.mxu0 %v2946
      %v3050 = vpop.f32.mrf.mxu0
      %v3051 = vadd.f32 0.0, %v3050
      %v3052 = vpop.f32.mrf.mxu0
      %v3053 = vpop.f32.mrf.mxu0
      %v3054 = vadd.f32 0.0, %v3053
      %v3055 = vpop.f32.mrf.mxu0
      %3056 = vmatprep.mubr.bf16.mxu0 0
      %3057 = vmatmul.mubr.bf16.gmra.mxu0 %v2949
      %v3058 = vpop.f32.mrf.mxu0
      %v3059 = vadd.f32 0.0, %v3058
      %v3060 = vpop.f32.mrf.mxu0
      %v3061 = vpop.f32.mrf.mxu0
      %v3062 = vadd.f32 0.0, %v3061
      %v3063 = vpop.f32.mrf.mxu0
      %3064 = vmatprep.mubr.bf16.mxu0 0
      %3065 = vmatmul.mubr.bf16.gmra.mxu0 %v2952
      %v3066 = vpop.f32.mrf.mxu0
      %v3067 = vadd.f32 0.0, %v3066
      %v3068 = vpop.f32.mrf.mxu0
      %v3069 = vpop.f32.mrf.mxu0
      %v3070 = vadd.f32 0.0, %v3069
      %v3071 = vpop.f32.mrf.mxu0
      %3072 = vmatprep.mubr.bf16.mxu0 0
      %3073 = vmatmul.mubr.bf16.gmra.mxu0 %v2955
      %v3074 = vpop.f32.mrf.mxu0
      %v3075 = vadd.f32 0.0, %v3074
      %v3076 = vpop.f32.mrf.mxu0
      %v3077 = vpop.f32.mrf.mxu0
      %v3078 = vadd.f32 0.0, %v3077
      %v3079 = vpop.f32.mrf.mxu0
      %3080 = vmatprep.mubr.bf16.mxu0 0
      %3081 = vmatmul.mubr.bf16.gmra.mxu0 %v2958
      %v3082 = vpop.f32.mrf.mxu0
      %v3083 = vadd.f32 0.0, %v3082
      %v3084 = vpop.f32.mrf.mxu0
      %v3085 = vpop.f32.mrf.mxu0
      %v3086 = vadd.f32 0.0, %v3085
      %v3087 = vpop.f32.mrf.mxu0
      %3088 = vmatprep.mubr.bf16.mxu0 0
      %3089 = vmatmul.mubr.bf16.gmra.mxu0 %v2961
      %v3090 = vpop.f32.mrf.mxu0
      %v3091 = vadd.f32 0.0, %v3090
      %v3092 = vpop.f32.mrf.mxu0
      %v3093 = vpop.f32.mrf.mxu0
      %v3094 = vadd.f32 0.0, %v3093
      %v3095 = vpop.f32.mrf.mxu0
      %3096 = vmatprep.mubr.bf16.mxu0 0
      %3097 = vmatmul.mubr.bf16.gmra.mxu0 %v2964
      %v3098 = vpop.f32.mrf.mxu0
      %v3099 = vadd.f32 0.0, %v3098
      %v3100 = vpop.f32.mrf.mxu0
      %v3101 = vpop.f32.mrf.mxu0
      %v3102 = vadd.f32 0.0, %v3101
      %v3103 = vpop.f32.mrf.mxu0
      %3104 = vmatprep.mubr.bf16.mxu0 0
      %3105 = vmatmul.mubr.bf16.gmra.mxu0 %v2967
      %v3106 = vpop.f32.mrf.mxu0
      %v3107 = vadd.f32 0.0, %v3106
      %v3108 = vpop.f32.mrf.mxu0
      %v3109 = vpop.f32.mrf.mxu0
      %v3110 = vadd.f32 0.0, %v3109
      %v3111 = vpop.f32.mrf.mxu0
      %3112 = vmatprep.mubr.bf16.mxu0 0
      %3113 = vmatmul.mubr.bf16.gmra.mxu0 %v2970
      %v3114 = vpop.f32.mrf.mxu0
      %v3115 = vadd.f32 0.0, %v3114
      %v3116 = vpop.f32.mrf.mxu0
      %v3117 = vpop.f32.mrf.mxu0
      %v3118 = vadd.f32 0.0, %v3117
      %v3119 = vpop.f32.mrf.mxu0
      %3120 = vmatprep.mubr.bf16.mxu0 0
      %3121 = vmatmul.mubr.bf16.gmra.mxu0 %v2973
      %v3122 = vpop.f32.mrf.mxu0
      %v3123 = vadd.f32 0.0, %v3122
      %v3124 = vpop.f32.mrf.mxu0
      %v3125 = vpop.f32.mrf.mxu0
      %v3126 = vadd.f32 0.0, %v3125
      %v3127 = vpop.f32.mrf.mxu0
      %3128 = vmatprep.mubr.bf16.mxu0 0
      %3129 = vmatmul.mubr.bf16.gmra.mxu0 %v2976
      %v3130 = vpop.f32.mrf.mxu0
      %v3131 = vadd.f32 0.0, %v3130
      %v3132 = vpop.f32.mrf.mxu0
      %v3133 = vpop.f32.mrf.mxu0
      %v3134 = vadd.f32 0.0, %v3133
      %v3135 = vpop.f32.mrf.mxu0
      %3136 = vmatprep.mubr.bf16.mxu0 0
      %3137 = vmatmul.mubr.bf16.gmra.mxu0 %v2979
      %v3138 = vpop.f32.mrf.mxu0
      %v3139 = vadd.f32 0.0, %v3138
      %v3140 = vpop.f32.mrf.mxu0
      %v3141 = vpop.f32.mrf.mxu0
      %v3142 = vadd.f32 0.0, %v3141
      %v3143 = vpop.f32.mrf.mxu0
      %3144 = vdwg.mxu0
      %v3145 = vadd.f32 %v2675, %v3019
      %v3146 = vadd.f32 %v2676, %v3022
      %v3147 = vadd.f32 %v2677, %v3027
      %v3148 = vadd.f32 %v2678, %v3030
      %v3149 = vadd.f32 %v2679, %v3035
      %v3150 = vadd.f32 %v2680, %v3038
      %v3151 = vadd.f32 %v2681, %v3043
      %v3152 = vadd.f32 %v2682, %v3046
      %v3153 = vadd.f32 %v2683, %v3051
      %v3154 = vadd.f32 %v2684, %v3054
      %v3155 = vadd.f32 %v2685, %v3059
      %v3156 = vadd.f32 %v2686, %v3062
      %v3157 = vadd.f32 %v2687, %v3067
      %v3158 = vadd.f32 %v2688, %v3070
      %v3159 = vadd.f32 %v2689, %v3075
      %v3160 = vadd.f32 %v2690, %v3078
      %v3161 = vadd.f32 %v2691, %v3083
      %v3162 = vadd.f32 %v2692, %v3086
      %v3163 = vadd.f32 %v2693, %v3091
      %v3164 = vadd.f32 %v2694, %v3094
      %v3165 = vadd.f32 %v2695, %v3099
      %v3166 = vadd.f32 %v2696, %v3102
      %v3167 = vadd.f32 %v2697, %v3107
      %v3168 = vadd.f32 %v2698, %v3110
      %v3169 = vadd.f32 %v2699, %v3115
      %v3170 = vadd.f32 %v2700, %v3118
      %v3171 = vadd.f32 %v2701, %v3123
      %v3172 = vadd.f32 %v2702, %v3126
      %v3173 = vadd.f32 %v2703, %v3131
      %v3174 = vadd.f32 %v2704, %v3134
      %v3175 = vadd.f32 %v2705, %v3139
      %v3176 = vadd.f32 %v2706, %v3142
      %s3177 = scalar_lea.vmem %s165, 24
      %v3178 = vld [vmem:[%s3177] sm:$0xf]
      %v3179 = vld [vmem:[%s3177 + $0x4] sm:$0xf]
      %v3180 = vld [vmem:[%s3177 + $0xc] sm:$0xf]
      %v3181 = vld [vmem:[%s3177 + $0x10] sm:$0xf]
      %v3182 = vld [vmem:[%s3177 + $0x18] sm:$0xf]
      %v3183 = vld [vmem:[%s3177 + $0x1c] sm:$0xf]
      %v3184 = vld [vmem:[%s3177 + $0x24] sm:$0xf]
      %v3185 = vld [vmem:[%s3177 + $0x28] sm:$0xf]
      %v3186 = vld [vmem:[%s3177 + $0x30] sm:$0xf]
      %v3187 = vld [vmem:[%s3177 + $0x34] sm:$0xf]
      %v3188 = vld [vmem:[%s3177 + $0x3c] sm:$0xf]
      %v3189 = vld [vmem:[%s3177 + $0x40] sm:$0xf]
      %v3190 = vld [vmem:[%s3177 + $0x48] sm:$0xf]
      %v3191 = vld [vmem:[%s3177 + $0x4c] sm:$0xf]
      %v3192 = vld [vmem:[%s3177 + $0x54] sm:$0xf]
      %v3193 = vld [vmem:[%s3177 + $0x58] sm:$0xf]
      %v3194 = vld [vmem:[%s3177 + $0x60] sm:$0xf]
      %v3195 = vld [vmem:[%s3177 + $0x64] sm:$0xf]
      %v3196 = vld [vmem:[%s3177 + $0x6c] sm:$0xf]
      %v3197 = vld [vmem:[%s3177 + $0x70] sm:$0xf]
      %v3198 = vld [vmem:[%s3177 + $0x78] sm:$0xf]
      %v3199 = vld [vmem:[%s3177 + $0x7c] sm:$0xf]
      %v3200 = vld [vmem:[%s3177 + $0x84] sm:$0xf]
      %v3201 = vld [vmem:[%s3177 + $0x88] sm:$0xf]
      %v3202 = vld [vmem:[%s3177 + $0x90] sm:$0xf]
      %v3203 = vld [vmem:[%s3177 + $0x94] sm:$0xf]
      %v3204 = vld [vmem:[%s3177 + $0x9c] sm:$0xf]
      %v3205 = vld [vmem:[%s3177 + $0xa0] sm:$0xf]
      %v3206 = vld [vmem:[%s3177 + $0xa8] sm:$0xf]
      %v3207 = vld [vmem:[%s3177 + $0xac] sm:$0xf]
      %v3208 = vld [vmem:[%s3177 + $0xb4] sm:$0xf]
      %v3209 = vld [vmem:[%s3177 + $0xb8] sm:$0xf]
      %s3210 = scalar_lea.vmem %s1, 12
      %v3211 = vld [vmem:[%s3210] sm:$0x3]
      %v3244 = vunpack.c.l.b16 %v3178
      %v3245 = vunpack.c.l.b16 %v3179
      %v3246 = vunpack.c.l.b16 %v3180
      %v3247 = vunpack.c.l.b16 %v3181
      %v3248 = vunpack.c.l.b16 %v3182
      %v3249 = vunpack.c.l.b16 %v3183
      %v3250 = vunpack.c.l.b16 %v3184
      %v3251 = vunpack.c.l.b16 %v3185
      %v3252 = vunpack.c.l.b16 %v3186
      %v3253 = vunpack.c.l.b16 %v3187
      %v3254 = vunpack.c.l.b16 %v3188
      %v3255 = vunpack.c.l.b16 %v3189
      %v3256 = vunpack.c.l.b16 %v3190
      %v3257 = vunpack.c.l.b16 %v3191
      %v3258 = vunpack.c.l.b16 %v3192
      %v3259 = vunpack.c.l.b16 %v3193
      %v3260 = vunpack.c.l.b16 %v3194
      %v3261 = vunpack.c.l.b16 %v3195
      %v3262 = vunpack.c.l.b16 %v3196
      %v3263 = vunpack.c.l.b16 %v3197
      %v3264 = vunpack.c.l.b16 %v3198
      %v3265 = vunpack.c.l.b16 %v3199
      %v3266 = vunpack.c.l.b16 %v3200
      %v3267 = vunpack.c.l.b16 %v3201
      %v3268 = vunpack.c.l.b16 %v3202
      %v3269 = vunpack.c.l.b16 %v3203
      %v3270 = vunpack.c.l.b16 %v3204
      %v3271 = vunpack.c.l.b16 %v3205
      %v3272 = vunpack.c.l.b16 %v3206
      %v3273 = vunpack.c.l.b16 %v3207
      %v3274 = vunpack.c.l.b16 %v3208
      %v3275 = vunpack.c.l.b16 %v3209
      %v3276 = vpack.c.b16 %v3245, %v3244
      %v3277 = vpack.c.b16 %v3247, %v3246
      %v3278 = vpack.c.b16 %v3249, %v3248
      %v3279 = vpack.c.b16 %v3251, %v3250
      %v3280 = vpack.c.b16 %v3253, %v3252
      %v3281 = vpack.c.b16 %v3255, %v3254
      %v3282 = vpack.c.b16 %v3257, %v3256
      %v3283 = vpack.c.b16 %v3259, %v3258
      %v3284 = vpack.c.b16 %v3261, %v3260
      %v3285 = vpack.c.b16 %v3263, %v3262
      %v3286 = vpack.c.b16 %v3265, %v3264
      %v3287 = vpack.c.b16 %v3267, %v3266
      %v3288 = vpack.c.b16 %v3269, %v3268
      %v3289 = vpack.c.b16 %v3271, %v3270
      %v3290 = vpack.c.b16 %v3273, %v3272
      %v3291 = vpack.c.b16 %v3275, %v3274
      %v3293 = vsel %vm659, %v3276, 0
      %v3296 = vsel %vm659, %v3277, 0
      %v3299 = vsel %vm659, %v3278, 0
      %v3302 = vsel %vm659, %v3279, 0
      %v3305 = vsel %vm659, %v3280, 0
      %v3308 = vsel %vm659, %v3281, 0
      %v3311 = vsel %vm659, %v3282, 0
      %v3314 = vsel %vm659, %v3283, 0
      %v3317 = vsel %vm659, %v3284, 0
      %v3320 = vsel %vm659, %v3285, 0
      %v3323 = vsel %vm659, %v3286, 0
      %v3326 = vsel %vm659, %v3287, 0
      %v3329 = vsel %vm659, %v3288, 0
      %v3332 = vsel %vm659, %v3289, 0
      %v3335 = vsel %vm659, %v3290, 0
      %v3338 = vsel %vm659, %v3291, 0
      %v3341 = vsel %vm708, %v3211, 0
      %3343 = vmatprep.subr.bf16.mxu0 0
      %3344 = vmatpush1.bf16.msra.mxu0 0
      %3345 = vmatprep.subr.bf16.mxu0 0
      %3346 = vmatpush1.bf16.msra.mxu0 0
      %3347 = vmatprep.subr.bf16.mxu0 0
      %3348 = vmatpush1.bf16.msra.mxu0 0
      %3349 = vmatprep.subr.bf16.mxu0 0
      %3350 = vmatpush1.bf16.msra.mxu0 0
      %3351 = vmatprep.subr.bf16.mxu0 0
      %3352 = vmatpush1.bf16.msra.mxu0 0
      %3353 = vmatprep.subr.bf16.mxu0 0
      %3354 = vmatpush1.bf16.msra.mxu0 0
      %3355 = vmatprep.subr.bf16.mxu0 0
      %3356 = vmatpush1.bf16.msra.mxu0 0
      %3357 = vmatprep.subr.bf16.mxu0 0
      %3358 = vmatpush1.bf16.msra.mxu0 %v3341
      %3359 = vmatprep.subr.bf16.mxu0 0
      %3360 = vmatpush2.bf16.msra.mxu0 0
      %3361 = vmatprep.subr.bf16.mxu0 0
      %3362 = vmatpush2.bf16.msra.mxu0 0
      %3363 = vmatprep.subr.bf16.mxu0 0
      %3364 = vmatpush2.bf16.msra.mxu0 0
      %3365 = vmatprep.subr.bf16.mxu0 0
      %3366 = vmatpush2.bf16.msra.mxu0 0
      %3367 = vmatprep.subr.bf16.mxu0 0
      %3368 = vmatpush2.bf16.msra.mxu0 0
      %3369 = vmatprep.subr.bf16.mxu0 0
      %3370 = vmatpush2.bf16.msra.mxu0 0
      %3371 = vmatprep.subr.bf16.mxu0 0
      %3372 = vmatpush2.bf16.msra.mxu0 0
      %3373 = vmatprep.subr.bf16.mxu0 0
      %3374 = vmatpush2.bf16.msra.mxu0 0
      %3375 = vmatprep.mubr.bf16.mxu0 0
      %3376 = vmatmul.mubr.bf16.gmra.mxu0 %v3293
      %v3377 = vpop.f32.mrf.mxu0
      %v3378 = vadd.f32 0.0, %v3377
      %v3379 = vpop.f32.mrf.mxu0
      %v3380 = vpop.f32.mrf.mxu0
      %v3381 = vadd.f32 0.0, %v3380
      %v3382 = vpop.f32.mrf.mxu0
      %3383 = vmatprep.mubr.bf16.mxu0 0
      %3384 = vmatmul.mubr.bf16.gmra.mxu0 %v3296
      %v3385 = vpop.f32.mrf.mxu0
      %v3386 = vadd.f32 0.0, %v3385
      %v3387 = vpop.f32.mrf.mxu0
      %v3388 = vpop.f32.mrf.mxu0
      %v3389 = vadd.f32 0.0, %v3388
      %v3390 = vpop.f32.mrf.mxu0
      %3391 = vmatprep.mubr.bf16.mxu0 0
      %3392 = vmatmul.mubr.bf16.gmra.mxu0 %v3299
      %v3393 = vpop.f32.mrf.mxu0
      %v3394 = vadd.f32 0.0, %v3393
      %v3395 = vpop.f32.mrf.mxu0
      %v3396 = vpop.f32.mrf.mxu0
      %v3397 = vadd.f32 0.0, %v3396
      %v3398 = vpop.f32.mrf.mxu0
      %3399 = vmatprep.mubr.bf16.mxu0 0
      %3400 = vmatmul.mubr.bf16.gmra.mxu0 %v3302
      %v3401 = vpop.f32.mrf.mxu0
      %v3402 = vadd.f32 0.0, %v3401
      %v3403 = vpop.f32.mrf.mxu0
      %v3404 = vpop.f32.mrf.mxu0
      %v3405 = vadd.f32 0.0, %v3404
      %v3406 = vpop.f32.mrf.mxu0
      %3407 = vmatprep.mubr.bf16.mxu0 0
      %3408 = vmatmul.mubr.bf16.gmra.mxu0 %v3305
      %v3409 = vpop.f32.mrf.mxu0
      %v3410 = vadd.f32 0.0, %v3409
      %v3411 = vpop.f32.mrf.mxu0
      %v3412 = vpop.f32.mrf.mxu0
      %v3413 = vadd.f32 0.0, %v3412
      %v3414 = vpop.f32.mrf.mxu0
      %3415 = vmatprep.mubr.bf16.mxu0 0
      %3416 = vmatmul.mubr.bf16.gmra.mxu0 %v3308
      %v3417 = vpop.f32.mrf.mxu0
      %v3418 = vadd.f32 0.0, %v3417
      %v3419 = vpop.f32.mrf.mxu0
      %v3420 = vpop.f32.mrf.mxu0
      %v3421 = vadd.f32 0.0, %v3420
      %v3422 = vpop.f32.mrf.mxu0
      %3423 = vmatprep.mubr.bf16.mxu0 0
      %3424 = vmatmul.mubr.bf16.gmra.mxu0 %v3311
      %v3425 = vpop.f32.mrf.mxu0
      %v3426 = vadd.f32 0.0, %v3425
      %v3427 = vpop.f32.mrf.mxu0
      %v3428 = vpop.f32.mrf.mxu0
      %v3429 = vadd.f32 0.0, %v3428
      %v3430 = vpop.f32.mrf.mxu0
      %3431 = vmatprep.mubr.bf16.mxu0 0
      %3432 = vmatmul.mubr.bf16.gmra.mxu0 %v3314
      %v3433 = vpop.f32.mrf.mxu0
      %v3434 = vadd.f32 0.0, %v3433
      %v3435 = vpop.f32.mrf.mxu0
      %v3436 = vpop.f32.mrf.mxu0
      %v3437 = vadd.f32 0.0, %v3436
      %v3438 = vpop.f32.mrf.mxu0
      %3439 = vmatprep.mubr.bf16.mxu0 0
      %3440 = vmatmul.mubr.bf16.gmra.mxu0 %v3317
      %v3441 = vpop.f32.mrf.mxu0
      %v3442 = vadd.f32 0.0, %v3441
      %v3443 = vpop.f32.mrf.mxu0
      %v3444 = vpop.f32.mrf.mxu0
      %v3445 = vadd.f32 0.0, %v3444
      %v3446 = vpop.f32.mrf.mxu0
      %3447 = vmatprep.mubr.bf16.mxu0 0
      %3448 = vmatmul.mubr.bf16.gmra.mxu0 %v3320
      %v3449 = vpop.f32.mrf.mxu0
      %v3450 = vadd.f32 0.0, %v3449
      %v3451 = vpop.f32.mrf.mxu0
      %v3452 = vpop.f32.mrf.mxu0
      %v3453 = vadd.f32 0.0, %v3452
      %v3454 = vpop.f32.mrf.mxu0
      %3455 = vmatprep.mubr.bf16.mxu0 0
      %3456 = vmatmul.mubr.bf16.gmra.mxu0 %v3323
      %v3457 = vpop.f32.mrf.mxu0
      %v3458 = vadd.f32 0.0, %v3457
      %v3459 = vpop.f32.mrf.mxu0
      %v3460 = vpop.f32.mrf.mxu0
      %v3461 = vadd.f32 0.0, %v3460
      %v3462 = vpop.f32.mrf.mxu0
      %3463 = vmatprep.mubr.bf16.mxu0 0
      %3464 = vmatmul.mubr.bf16.gmra.mxu0 %v3326
      %v3465 = vpop.f32.mrf.mxu0
      %v3466 = vadd.f32 0.0, %v3465
      %v3467 = vpop.f32.mrf.mxu0
      %v3468 = vpop.f32.mrf.mxu0
      %v3469 = vadd.f32 0.0, %v3468
      %v3470 = vpop.f32.mrf.mxu0
      %3471 = vmatprep.mubr.bf16.mxu0 0
      %3472 = vmatmul.mubr.bf16.gmra.mxu0 %v3329
      %v3473 = vpop.f32.mrf.mxu0
      %v3474 = vadd.f32 0.0, %v3473
      %v3475 = vpop.f32.mrf.mxu0
      %v3476 = vpop.f32.mrf.mxu0
      %v3477 = vadd.f32 0.0, %v3476
      %v3478 = vpop.f32.mrf.mxu0
      %3479 = vmatprep.mubr.bf16.mxu0 0
      %3480 = vmatmul.mubr.bf16.gmra.mxu0 %v3332
      %v3481 = vpop.f32.mrf.mxu0
      %v3482 = vadd.f32 0.0, %v3481
      %v3483 = vpop.f32.mrf.mxu0
      %v3484 = vpop.f32.mrf.mxu0
      %v3485 = vadd.f32 0.0, %v3484
      %v3486 = vpop.f32.mrf.mxu0
      %3487 = vmatprep.mubr.bf16.mxu0 0
      %3488 = vmatmul.mubr.bf16.gmra.mxu0 %v3335
      %v3489 = vpop.f32.mrf.mxu0
      %v3490 = vadd.f32 0.0, %v3489
      %v3491 = vpop.f32.mrf.mxu0
      %v3492 = vpop.f32.mrf.mxu0
      %v3493 = vadd.f32 0.0, %v3492
      %v3494 = vpop.f32.mrf.mxu0
      %3495 = vmatprep.mubr.bf16.mxu0 0
      %3496 = vmatmul.mubr.bf16.gmra.mxu0 %v3338
      %v3497 = vpop.f32.mrf.mxu0
      %v3498 = vadd.f32 0.0, %v3497
      %v3499 = vpop.f32.mrf.mxu0
      %v3500 = vpop.f32.mrf.mxu0
      %v3501 = vadd.f32 0.0, %v3500
      %v3502 = vpop.f32.mrf.mxu0
      %3503 = vdwg.mxu0
      %v3504 = vadd.f32 %v3145, %v3378
      %v3505 = vadd.f32 %v3146, %v3381
      %v3506 = vadd.f32 %v3147, %v3386
      %v3507 = vadd.f32 %v3148, %v3389
      %v3508 = vadd.f32 %v3149, %v3394
      %v3509 = vadd.f32 %v3150, %v3397
      %v3510 = vadd.f32 %v3151, %v3402
      %v3511 = vadd.f32 %v3152, %v3405
      %v3512 = vadd.f32 %v3153, %v3410
      %v3513 = vadd.f32 %v3154, %v3413
      %v3514 = vadd.f32 %v3155, %v3418
      %v3515 = vadd.f32 %v3156, %v3421
      %v3516 = vadd.f32 %v3157, %v3426
      %v3517 = vadd.f32 %v3158, %v3429
      %v3518 = vadd.f32 %v3159, %v3434
      %v3519 = vadd.f32 %v3160, %v3437
      %v3520 = vadd.f32 %v3161, %v3442
      %v3521 = vadd.f32 %v3162, %v3445
      %v3522 = vadd.f32 %v3163, %v3450
      %v3523 = vadd.f32 %v3164, %v3453
      %v3524 = vadd.f32 %v3165, %v3458
      %v3525 = vadd.f32 %v3166, %v3461
      %v3526 = vadd.f32 %v3167, %v3466
      %v3527 = vadd.f32 %v3168, %v3469
      %v3528 = vadd.f32 %v3169, %v3474
      %v3529 = vadd.f32 %v3170, %v3477
      %v3530 = vadd.f32 %v3171, %v3482
      %v3531 = vadd.f32 %v3172, %v3485
      %v3532 = vadd.f32 %v3173, %v3490
      %v3533 = vadd.f32 %v3174, %v3493
      %v3534 = vadd.f32 %v3175, %v3498
      %v3535 = vadd.f32 %v3176, %v3501
      %v3536 = vld [vmem:[%s3177] sm:$0xf]
      %v3537 = vld [vmem:[%s3177 + $0x4] sm:$0xf]
      %v3538 = vld [vmem:[%s3177 + $0x8] sm:$0x1]
      %v3539 = vld [vmem:[%s3177 + $0xc] sm:$0xf]
      %v3540 = vld [vmem:[%s3177 + $0x10] sm:$0xf]
      %v3541 = vld [vmem:[%s3177 + $0x14] sm:$0x1]
      %v3542 = vld [vmem:[%s3177 + $0x18] sm:$0xf]
      %v3543 = vld [vmem:[%s3177 + $0x1c] sm:$0xf]
      %v3544 = vld [vmem:[%s3177 + $0x20] sm:$0x1]
      %v3545 = vld [vmem:[%s3177 + $0x24] sm:$0xf]
      %v3546 = vld [vmem:[%s3177 + $0x28] sm:$0xf]
      %v3547 = vld [vmem:[%s3177 + $0x2c] sm:$0x1]
      %v3548 = vld [vmem:[%s3177 + $0x30] sm:$0xf]
      %v3549 = vld [vmem:[%s3177 + $0x34] sm:$0xf]
      %v3550 = vld [vmem:[%s3177 + $0x38] sm:$0x1]
      %v3551 = vld [vmem:[%s3177 + $0x3c] sm:$0xf]
      %v3552 = vld [vmem:[%s3177 + $0x40] sm:$0xf]
      %v3553 = vld [vmem:[%s3177 + $0x44] sm:$0x1]
      %v3554 = vld [vmem:[%s3177 + $0x48] sm:$0xf]
      %v3555 = vld [vmem:[%s3177 + $0x4c] sm:$0xf]
      %v3556 = vld [vmem:[%s3177 + $0x50] sm:$0x1]
      %v3557 = vld [vmem:[%s3177 + $0x54] sm:$0xf]
      %v3558 = vld [vmem:[%s3177 + $0x58] sm:$0xf]
      %v3559 = vld [vmem:[%s3177 + $0x5c] sm:$0x1]
      %v3560 = vld [vmem:[%s3177 + $0x60] sm:$0xf]
      %v3561 = vld [vmem:[%s3177 + $0x64] sm:$0xf]
      %v3562 = vld [vmem:[%s3177 + $0x68] sm:$0x1]
      %v3563 = vld [vmem:[%s3177 + $0x6c] sm:$0xf]
      %v3564 = vld [vmem:[%s3177 + $0x70] sm:$0xf]
      %v3565 = vld [vmem:[%s3177 + $0x74] sm:$0x1]
      %v3566 = vld [vmem:[%s3177 + $0x78] sm:$0xf]
      %v3567 = vld [vmem:[%s3177 + $0x7c] sm:$0xf]
      %v3568 = vld [vmem:[%s3177 + $0x80] sm:$0x1]
      %v3569 = vld [vmem:[%s3177 + $0x84] sm:$0xf]
      %v3570 = vld [vmem:[%s3177 + $0x88] sm:$0xf]
      %v3571 = vld [vmem:[%s3177 + $0x8c] sm:$0x1]
      %v3572 = vld [vmem:[%s3177 + $0x90] sm:$0xf]
      %v3573 = vld [vmem:[%s3177 + $0x94] sm:$0xf]
      %v3574 = vld [vmem:[%s3177 + $0x98] sm:$0x1]
      %v3575 = vld [vmem:[%s3177 + $0x9c] sm:$0xf]
      %v3576 = vld [vmem:[%s3177 + $0xa0] sm:$0xf]
      %v3577 = vld [vmem:[%s3177 + $0xa4] sm:$0x1]
      %v3578 = vld [vmem:[%s3177 + $0xa8] sm:$0xf]
      %v3579 = vld [vmem:[%s3177 + $0xac] sm:$0xf]
      %v3580 = vld [vmem:[%s3177 + $0xb0] sm:$0x1]
      %v3581 = vld [vmem:[%s3177 + $0xb4] sm:$0xf]
      %v3582 = vld [vmem:[%s3177 + $0xb8] sm:$0xf]
      %v3583 = vld [vmem:[%s3177 + $0xbc] sm:$0x1]
      %v3585 = vshrl.u32 %v3536, 16
      %v3587 = vrot.slane %v3585, 4
      %v3588 = vshll.u32 %v3536, 16
      %v3590 = vrot.slane %v3588, 5
      %v3591 = vor.u32 %v3587, %v3590
      %v3592 = vrot.slane %v3591, 4
      %v3594 = vshll.u32 %v3537, 16
      %v3596 = vrot.slane %v3594, 5
      %v3597 = vsel %vm224, %v3592, %v3596
      %v3598 = vshrl.u32 %v3537, 16
      %v3600 = vrot.slane %v3598, 4
      %v3601 = vor.u32 %v3600, %v3596
      %v3602 = vrot.slane %v3601, 4
      %v3604 = vshll.u32 %v3538, 16
      %v3606 = vrot.slane %v3604, 5
      %v3607 = vsel %vm224, %v3602, %v3606
      %v3609 = vshrl.u32 %v3539, 16
      %v3611 = vrot.slane %v3609, 4
      %v3612 = vshll.u32 %v3539, 16
      %v3614 = vrot.slane %v3612, 5
      %v3615 = vor.u32 %v3611, %v3614
      %v3616 = vrot.slane %v3615, 4
      %v3618 = vshll.u32 %v3540, 16
      %v3620 = vrot.slane %v3618, 5
      %v3621 = vsel %vm224, %v3616, %v3620
      %v3622 = vshrl.u32 %v3540, 16
      %v3624 = vrot.slane %v3622, 4
      %v3625 = vor.u32 %v3624, %v3620
      %v3626 = vrot.slane %v3625, 4
      %v3628 = vshll.u32 %v3541, 16
      %v3630 = vrot.slane %v3628, 5
      %v3631 = vsel %vm224, %v3626, %v3630
      %v3633 = vshrl.u32 %v3542, 16
      %v3635 = vrot.slane %v3633, 4
      %v3636 = vshll.u32 %v3542, 16
      %v3638 = vrot.slane %v3636, 5
      %v3639 = vor.u32 %v3635, %v3638
      %v3640 = vrot.slane %v3639, 4
      %v3642 = vshll.u32 %v3543, 16
      %v3644 = vrot.slane %v3642, 5
      %v3645 = vsel %vm224, %v3640, %v3644
      %v3646 = vshrl.u32 %v3543, 16
      %v3648 = vrot.slane %v3646, 4
      %v3649 = vor.u32 %v3648, %v3644
      %v3650 = vrot.slane %v3649, 4
      %v3652 = vshll.u32 %v3544, 16
      %v3654 = vrot.slane %v3652, 5
      %v3655 = vsel %vm224, %v3650, %v3654
      %v3657 = vshrl.u32 %v3545, 16
      %v3659 = vrot.slane %v3657, 4
      %v3660 = vshll.u32 %v3545, 16
      %v3662 = vrot.slane %v3660, 5
      %v3663 = vor.u32 %v3659, %v3662
      %v3664 = vrot.slane %v3663, 4
      %v3666 = vshll.u32 %v3546, 16
      %v3668 = vrot.slane %v3666, 5
      %v3669 = vsel %vm224, %v3664, %v3668
      %v3670 = vshrl.u32 %v3546, 16
      %v3672 = vrot.slane %v3670, 4
      %v3673 = vor.u32 %v3672, %v3668
      %v3674 = vrot.slane %v3673, 4
      %v3676 = vshll.u32 %v3547, 16
      %v3678 = vrot.slane %v3676, 5
      %v3679 = vsel %vm224, %v3674, %v3678
      %v3681 = vshrl.u32 %v3548, 16
      %v3683 = vrot.slane %v3681, 4
      %v3684 = vshll.u32 %v3548, 16
      %v3686 = vrot.slane %v3684, 5
      %v3687 = vor.u32 %v3683, %v3686
      %v3688 = vrot.slane %v3687, 4
      %v3690 = vshll.u32 %v3549, 16
      %v3692 = vrot.slane %v3690, 5
      %v3693 = vsel %vm224, %v3688, %v3692
      %v3694 = vshrl.u32 %v3549, 16
      %v3696 = vrot.slane %v3694, 4
      %v3697 = vor.u32 %v3696, %v3692
      %v3698 = vrot.slane %v3697, 4
      %v3700 = vshll.u32 %v3550, 16
      %v3702 = vrot.slane %v3700, 5
      %v3703 = vsel %vm224, %v3698, %v3702
      %v3705 = vshrl.u32 %v3551, 16
      %v3707 = vrot.slane %v3705, 4
      %v3708 = vshll.u32 %v3551, 16
      %v3710 = vrot.slane %v3708, 5
      %v3711 = vor.u32 %v3707, %v3710
      %v3712 = vrot.slane %v3711, 4
      %v3714 = vshll.u32 %v3552, 16
      %v3716 = vrot.slane %v3714, 5
      %v3717 = vsel %vm224, %v3712, %v3716
      %v3718 = vshrl.u32 %v3552, 16
      %v3720 = vrot.slane %v3718, 4
      %v3721 = vor.u32 %v3720, %v3716
      %v3722 = vrot.slane %v3721, 4
      %v3724 = vshll.u32 %v3553, 16
      %v3726 = vrot.slane %v3724, 5
      %v3727 = vsel %vm224, %v3722, %v3726
      %v3729 = vshrl.u32 %v3554, 16
      %v3731 = vrot.slane %v3729, 4
      %v3732 = vshll.u32 %v3554, 16
      %v3734 = vrot.slane %v3732, 5
      %v3735 = vor.u32 %v3731, %v3734
      %v3736 = vrot.slane %v3735, 4
      %v3738 = vshll.u32 %v3555, 16
      %v3740 = vrot.slane %v3738, 5
      %v3741 = vsel %vm224, %v3736, %v3740
      %v3742 = vshrl.u32 %v3555, 16
      %v3744 = vrot.slane %v3742, 4
      %v3745 = vor.u32 %v3744, %v3740
      %v3746 = vrot.slane %v3745, 4
      %v3748 = vshll.u32 %v3556, 16
      %v3750 = vrot.slane %v3748, 5
      %v3751 = vsel %vm224, %v3746, %v3750
      %v3753 = vshrl.u32 %v3557, 16
      %v3755 = vrot.slane %v3753, 4
      %v3756 = vshll.u32 %v3557, 16
      %v3758 = vrot.slane %v3756, 5
      %v3759 = vor.u32 %v3755, %v3758
      %v3760 = vrot.slane %v3759, 4
      %v3762 = vshll.u32 %v3558, 16
      %v3764 = vrot.slane %v3762, 5
      %v3765 = vsel %vm224, %v3760, %v3764
      %v3766 = vshrl.u32 %v3558, 16
      %v3768 = vrot.slane %v3766, 4
      %v3769 = vor.u32 %v3768, %v3764
      %v3770 = vrot.slane %v3769, 4
      %v3772 = vshll.u32 %v3559, 16
      %v3774 = vrot.slane %v3772, 5
      %v3775 = vsel %vm224, %v3770, %v3774
      %v3777 = vshrl.u32 %v3560, 16
      %v3779 = vrot.slane %v3777, 4
      %v3780 = vshll.u32 %v3560, 16
      %v3782 = vrot.slane %v3780, 5
      %v3783 = vor.u32 %v3779, %v3782
      %v3784 = vrot.slane %v3783, 4
      %v3786 = vshll.u32 %v3561, 16
      %v3788 = vrot.slane %v3786, 5
      %v3789 = vsel %vm224, %v3784, %v3788
      %v3790 = vshrl.u32 %v3561, 16
      %v3792 = vrot.slane %v3790, 4
      %v3793 = vor.u32 %v3792, %v3788
      %v3794 = vrot.slane %v3793, 4
      %v3796 = vshll.u32 %v3562, 16
      %v3798 = vrot.slane %v3796, 5
      %v3799 = vsel %vm224, %v3794, %v3798
      %v3801 = vshrl.u32 %v3563, 16
      %v3803 = vrot.slane %v3801, 4
      %v3804 = vshll.u32 %v3563, 16
      %v3806 = vrot.slane %v3804, 5
      %v3807 = vor.u32 %v3803, %v3806
      %v3808 = vrot.slane %v3807, 4
      %v3810 = vshll.u32 %v3564, 16
      %v3812 = vrot.slane %v3810, 5
      %v3813 = vsel %vm224, %v3808, %v3812
      %v3814 = vshrl.u32 %v3564, 16
      %v3816 = vrot.slane %v3814, 4
      %v3817 = vor.u32 %v3816, %v3812
      %v3818 = vrot.slane %v3817, 4
      %v3820 = vshll.u32 %v3565, 16
      %v3822 = vrot.slane %v3820, 5
      %v3823 = vsel %vm224, %v3818, %v3822
      %v3825 = vshrl.u32 %v3566, 16
      %v3827 = vrot.slane %v3825, 4
      %v3828 = vshll.u32 %v3566, 16
      %v3830 = vrot.slane %v3828, 5
      %v3831 = vor.u32 %v3827, %v3830
      %v3832 = vrot.slane %v3831, 4
      %v3834 = vshll.u32 %v3567, 16
      %v3836 = vrot.slane %v3834, 5
      %v3837 = vsel %vm224, %v3832, %v3836
      %v3838 = vshrl.u32 %v3567, 16
      %v3840 = vrot.slane %v3838, 4
      %v3841 = vor.u32 %v3840, %v3836
      %v3842 = vrot.slane %v3841, 4
      %v3844 = vshll.u32 %v3568, 16
      %v3846 = vrot.slane %v3844, 5
      %v3847 = vsel %vm224, %v3842, %v3846
      %v3849 = vshrl.u32 %v3569, 16
      %v3851 = vrot.slane %v3849, 4
      %v3852 = vshll.u32 %v3569, 16
      %v3854 = vrot.slane %v3852, 5
      %v3855 = vor.u32 %v3851, %v3854
      %v3856 = vrot.slane %v3855, 4
      %v3858 = vshll.u32 %v3570, 16
      %v3860 = vrot.slane %v3858, 5
      %v3861 = vsel %vm224, %v3856, %v3860
      %v3862 = vshrl.u32 %v3570, 16
      %v3864 = vrot.slane %v3862, 4
      %v3865 = vor.u32 %v3864, %v3860
      %v3866 = vrot.slane %v3865, 4
      %v3868 = vshll.u32 %v3571, 16
      %v3870 = vrot.slane %v3868, 5
      %v3871 = vsel %vm224, %v3866, %v3870
      %v3873 = vshrl.u32 %v3572, 16
      %v3875 = vrot.slane %v3873, 4
      %v3876 = vshll.u32 %v3572, 16
      %v3878 = vrot.slane %v3876, 5
      %v3879 = vor.u32 %v3875, %v3878
      %v3880 = vrot.slane %v3879, 4
      %v3882 = vshll.u32 %v3573, 16
      %v3884 = vrot.slane %v3882, 5
      %v3885 = vsel %vm224, %v3880, %v3884
      %v3886 = vshrl.u32 %v3573, 16
      %v3888 = vrot.slane %v3886, 4
      %v3889 = vor.u32 %v3888, %v3884
      %v3890 = vrot.slane %v3889, 4
      %v3892 = vshll.u32 %v3574, 16
      %v3894 = vrot.slane %v3892, 5
      %v3895 = vsel %vm224, %v3890, %v3894
      %v3897 = vshrl.u32 %v3575, 16
      %v3899 = vrot.slane %v3897, 4
      %v3900 = vshll.u32 %v3575, 16
      %v3902 = vrot.slane %v3900, 5
      %v3903 = vor.u32 %v3899, %v3902
      %v3904 = vrot.slane %v3903, 4
      %v3906 = vshll.u32 %v3576, 16
      %v3908 = vrot.slane %v3906, 5
      %v3909 = vsel %vm224, %v3904, %v3908
      %v3910 = vshrl.u32 %v3576, 16
      %v3912 = vrot.slane %v3910, 4
      %v3913 = vor.u32 %v3912, %v3908
      %v3914 = vrot.slane %v3913, 4
      %v3916 = vshll.u32 %v3577, 16
      %v3918 = vrot.slane %v3916, 5
      %v3919 = vsel %vm224, %v3914, %v3918
      %v3921 = vshrl.u32 %v3578, 16
      %v3923 = vrot.slane %v3921, 4
      %v3924 = vshll.u32 %v3578, 16
      %v3926 = vrot.slane %v3924, 5
      %v3927 = vor.u32 %v3923, %v3926
      %v3928 = vrot.slane %v3927, 4
      %v3930 = vshll.u32 %v3579, 16
      %v3932 = vrot.slane %v3930, 5
      %v3933 = vsel %vm224, %v3928, %v3932
      %v3934 = vshrl.u32 %v3579, 16
      %v3936 = vrot.slane %v3934, 4
      %v3937 = vor.u32 %v3936, %v3932
      %v3938 = vrot.slane %v3937, 4
      %v3940 = vshll.u32 %v3580, 16
      %v3942 = vrot.slane %v3940, 5
      %v3943 = vsel %vm224, %v3938, %v3942
      %v3945 = vshrl.u32 %v3581, 16
      %v3947 = vrot.slane %v3945, 4
      %v3948 = vshll.u32 %v3581, 16
      %v3950 = vrot.slane %v3948, 5
      %v3951 = vor.u32 %v3947, %v3950
      %v3952 = vrot.slane %v3951, 4
      %v3954 = vshll.u32 %v3582, 16
      %v3956 = vrot.slane %v3954, 5
      %v3957 = vsel %vm224, %v3952, %v3956
      %v3958 = vshrl.u32 %v3582, 16
      %v3960 = vrot.slane %v3958, 4
      %v3961 = vor.u32 %v3960, %v3956
      %v3962 = vrot.slane %v3961, 4
      %v3964 = vshll.u32 %v3583, 16
      %v3966 = vrot.slane %v3964, 5
      %v3967 = vsel %vm224, %v3962, %v3966
      %s3968 = scalar_lea.vmem %s1, 14
      %v3969 = vld [vmem:[%s3968] sm:$0x3]
      %v3970 = vunpack.c.l.b16 %v3597
      %v3971 = vunpack.c.l.b16 %v3607
      %v3972 = vunpack.c.l.b16 %v3621
      %v3973 = vunpack.c.l.b16 %v3631
      %v3974 = vunpack.c.l.b16 %v3645
      %v3975 = vunpack.c.l.b16 %v3655
      %v3976 = vunpack.c.l.b16 %v3669
      %v3977 = vunpack.c.l.b16 %v3679
      %v3978 = vunpack.c.l.b16 %v3693
      %v3979 = vunpack.c.l.b16 %v3703
      %v3980 = vunpack.c.l.b16 %v3717
      %v3981 = vunpack.c.l.b16 %v3727
      %v3982 = vunpack.c.l.b16 %v3741
      %v3983 = vunpack.c.l.b16 %v3751
      %v3984 = vunpack.c.l.b16 %v3765
      %v3985 = vunpack.c.l.b16 %v3775
      %v3986 = vunpack.c.l.b16 %v3789
      %v3987 = vunpack.c.l.b16 %v3799
      %v3988 = vunpack.c.l.b16 %v3813
      %v3989 = vunpack.c.l.b16 %v3823
      %v3990 = vunpack.c.l.b16 %v3837
      %v3991 = vunpack.c.l.b16 %v3847
      %v3992 = vunpack.c.l.b16 %v3861
      %v3993 = vunpack.c.l.b16 %v3871
      %v3994 = vunpack.c.l.b16 %v3885
      %v3995 = vunpack.c.l.b16 %v3895
      %v3996 = vunpack.c.l.b16 %v3909
      %v3997 = vunpack.c.l.b16 %v3919
      %v3998 = vunpack.c.l.b16 %v3933
      %v3999 = vunpack.c.l.b16 %v3943
      %v4000 = vunpack.c.l.b16 %v3957
      %v4001 = vunpack.c.l.b16 %v3967
      %v4002 = vpack.c.b16 %v3971, %v3970
      %v4003 = vpack.c.b16 %v3973, %v3972
      %v4004 = vpack.c.b16 %v3975, %v3974
      %v4005 = vpack.c.b16 %v3977, %v3976
      %v4006 = vpack.c.b16 %v3979, %v3978
      %v4007 = vpack.c.b16 %v3981, %v3980
      %v4008 = vpack.c.b16 %v3983, %v3982
      %v4009 = vpack.c.b16 %v3985, %v3984
      %v4010 = vpack.c.b16 %v3987, %v3986
      %v4011 = vpack.c.b16 %v3989, %v3988
      %v4012 = vpack.c.b16 %v3991, %v3990
      %v4013 = vpack.c.b16 %v3993, %v3992
      %v4014 = vpack.c.b16 %v3995, %v3994
      %v4015 = vpack.c.b16 %v3997, %v3996
      %v4016 = vpack.c.b16 %v3999, %v3998
      %v4017 = vpack.c.b16 %v4001, %v4000
      %v4019 = vsel %vm659, %v4002, 0
      %v4022 = vsel %vm659, %v4003, 0
      %v4025 = vsel %vm659, %v4004, 0
      %v4028 = vsel %vm659, %v4005, 0
      %v4031 = vsel %vm659, %v4006, 0
      %v4034 = vsel %vm659, %v4007, 0
      %v4037 = vsel %vm659, %v4008, 0
      %v4040 = vsel %vm659, %v4009, 0
      %v4043 = vsel %vm659, %v4010, 0
      %v4046 = vsel %vm659, %v4011, 0
      %v4049 = vsel %vm659, %v4012, 0
      %v4052 = vsel %vm659, %v4013, 0
      %v4055 = vsel %vm659, %v4014, 0
      %v4058 = vsel %vm659, %v4015, 0
      %v4061 = vsel %vm659, %v4016, 0
      %v4064 = vsel %vm659, %v4017, 0
      %v4067 = vsel %vm708, %v3969, 0
      %4069 = vmatprep.subr.bf16.mxu0 0
      %4070 = vmatpush1.bf16.msra.mxu0 0
      %4071 = vmatprep.subr.bf16.mxu0 0
      %4072 = vmatpush1.bf16.msra.mxu0 0
      %4073 = vmatprep.subr.bf16.mxu0 0
      %4074 = vmatpush1.bf16.msra.mxu0 0
      %4075 = vmatprep.subr.bf16.mxu0 0
      %4076 = vmatpush1.bf16.msra.mxu0 0
      %4077 = vmatprep.subr.bf16.mxu0 0
      %4078 = vmatpush1.bf16.msra.mxu0 0
      %4079 = vmatprep.subr.bf16.mxu0 0
      %4080 = vmatpush1.bf16.msra.mxu0 0
      %4081 = vmatprep.subr.bf16.mxu0 0
      %4082 = vmatpush1.bf16.msra.mxu0 0
      %4083 = vmatprep.subr.bf16.mxu0 0
      %4084 = vmatpush1.bf16.msra.mxu0 %v4067
      %4085 = vmatprep.subr.bf16.mxu0 0
      %4086 = vmatpush2.bf16.msra.mxu0 0
      %4087 = vmatprep.subr.bf16.mxu0 0
      %4088 = vmatpush2.bf16.msra.mxu0 0
      %4089 = vmatprep.subr.bf16.mxu0 0
      %4090 = vmatpush2.bf16.msra.mxu0 0
      %4091 = vmatprep.subr.bf16.mxu0 0
      %4092 = vmatpush2.bf16.msra.mxu0 0
      %4093 = vmatprep.subr.bf16.mxu0 0
      %4094 = vmatpush2.bf16.msra.mxu0 0
      %4095 = vmatprep.subr.bf16.mxu0 0
      %4096 = vmatpush2.bf16.msra.mxu0 0
      %4097 = vmatprep.subr.bf16.mxu0 0
      %4098 = vmatpush2.bf16.msra.mxu0 0
      %4099 = vmatprep.subr.bf16.mxu0 0
      %4100 = vmatpush2.bf16.msra.mxu0 0
      %4101 = vmatprep.mubr.bf16.mxu0 0
      %4102 = vmatmul.mubr.bf16.gmra.mxu0 %v4019
      %v4103 = vpop.f32.mrf.mxu0
      %v4104 = vadd.f32 0.0, %v4103
      %v4105 = vpop.f32.mrf.mxu0
      %v4106 = vpop.f32.mrf.mxu0
      %v4107 = vadd.f32 0.0, %v4106
      %v4108 = vpop.f32.mrf.mxu0
      %4109 = vmatprep.mubr.bf16.mxu0 0
      %4110 = vmatmul.mubr.bf16.gmra.mxu0 %v4022
      %v4111 = vpop.f32.mrf.mxu0
      %v4112 = vadd.f32 0.0, %v4111
      %v4113 = vpop.f32.mrf.mxu0
      %v4114 = vpop.f32.mrf.mxu0
      %v4115 = vadd.f32 0.0, %v4114
      %v4116 = vpop.f32.mrf.mxu0
      %4117 = vmatprep.mubr.bf16.mxu0 0
      %4118 = vmatmul.mubr.bf16.gmra.mxu0 %v4025
      %v4119 = vpop.f32.mrf.mxu0
      %v4120 = vadd.f32 0.0, %v4119
      %v4121 = vpop.f32.mrf.mxu0
      %v4122 = vpop.f32.mrf.mxu0
      %v4123 = vadd.f32 0.0, %v4122
      %v4124 = vpop.f32.mrf.mxu0
      %4125 = vmatprep.mubr.bf16.mxu0 0
      %4126 = vmatmul.mubr.bf16.gmra.mxu0 %v4028
      %v4127 = vpop.f32.mrf.mxu0
      %v4128 = vadd.f32 0.0, %v4127
      %v4129 = vpop.f32.mrf.mxu0
      %v4130 = vpop.f32.mrf.mxu0
      %v4131 = vadd.f32 0.0, %v4130
      %v4132 = vpop.f32.mrf.mxu0
      %4133 = vmatprep.mubr.bf16.mxu0 0
      %4134 = vmatmul.mubr.bf16.gmra.mxu0 %v4031
      %v4135 = vpop.f32.mrf.mxu0
      %v4136 = vadd.f32 0.0, %v4135
      %v4137 = vpop.f32.mrf.mxu0
      %v4138 = vpop.f32.mrf.mxu0
      %v4139 = vadd.f32 0.0, %v4138
      %v4140 = vpop.f32.mrf.mxu0
      %4141 = vmatprep.mubr.bf16.mxu0 0
      %4142 = vmatmul.mubr.bf16.gmra.mxu0 %v4034
      %v4143 = vpop.f32.mrf.mxu0
      %v4144 = vadd.f32 0.0, %v4143
      %v4145 = vpop.f32.mrf.mxu0
      %v4146 = vpop.f32.mrf.mxu0
      %v4147 = vadd.f32 0.0, %v4146
      %v4148 = vpop.f32.mrf.mxu0
      %4149 = vmatprep.mubr.bf16.mxu0 0
      %4150 = vmatmul.mubr.bf16.gmra.mxu0 %v4037
      %v4151 = vpop.f32.mrf.mxu0
      %v4152 = vadd.f32 0.0, %v4151
      %v4153 = vpop.f32.mrf.mxu0
      %v4154 = vpop.f32.mrf.mxu0
      %v4155 = vadd.f32 0.0, %v4154
      %v4156 = vpop.f32.mrf.mxu0
      %4157 = vmatprep.mubr.bf16.mxu0 0
      %4158 = vmatmul.mubr.bf16.gmra.mxu0 %v4040
      %v4159 = vpop.f32.mrf.mxu0
      %v4160 = vadd.f32 0.0, %v4159
      %v4161 = vpop.f32.mrf.mxu0
      %v4162 = vpop.f32.mrf.mxu0
      %v4163 = vadd.f32 0.0, %v4162
      %v4164 = vpop.f32.mrf.mxu0
      %4165 = vmatprep.mubr.bf16.mxu0 0
      %4166 = vmatmul.mubr.bf16.gmra.mxu0 %v4043
      %v4167 = vpop.f32.mrf.mxu0
      %v4168 = vadd.f32 0.0, %v4167
      %v4169 = vpop.f32.mrf.mxu0
      %v4170 = vpop.f32.mrf.mxu0
      %v4171 = vadd.f32 0.0, %v4170
      %v4172 = vpop.f32.mrf.mxu0
      %4173 = vmatprep.mubr.bf16.mxu0 0
      %4174 = vmatmul.mubr.bf16.gmra.mxu0 %v4046
      %v4175 = vpop.f32.mrf.mxu0
      %v4176 = vadd.f32 0.0, %v4175
      %v4177 = vpop.f32.mrf.mxu0
      %v4178 = vpop.f32.mrf.mxu0
      %v4179 = vadd.f32 0.0, %v4178
      %v4180 = vpop.f32.mrf.mxu0
      %4181 = vmatprep.mubr.bf16.mxu0 0
      %4182 = vmatmul.mubr.bf16.gmra.mxu0 %v4049
      %v4183 = vpop.f32.mrf.mxu0
      %v4184 = vadd.f32 0.0, %v4183
      %v4185 = vpop.f32.mrf.mxu0
      %v4186 = vpop.f32.mrf.mxu0
      %v4187 = vadd.f32 0.0, %v4186
      %v4188 = vpop.f32.mrf.mxu0
      %4189 = vmatprep.mubr.bf16.mxu0 0
      %4190 = vmatmul.mubr.bf16.gmra.mxu0 %v4052
      %v4191 = vpop.f32.mrf.mxu0
      %v4192 = vadd.f32 0.0, %v4191
      %v4193 = vpop.f32.mrf.mxu0
      %v4194 = vpop.f32.mrf.mxu0
      %v4195 = vadd.f32 0.0, %v4194
      %v4196 = vpop.f32.mrf.mxu0
      %4197 = vmatprep.mubr.bf16.mxu0 0
      %4198 = vmatmul.mubr.bf16.gmra.mxu0 %v4055
      %v4199 = vpop.f32.mrf.mxu0
      %v4200 = vadd.f32 0.0, %v4199
      %v4201 = vpop.f32.mrf.mxu0
      %v4202 = vpop.f32.mrf.mxu0
      %v4203 = vadd.f32 0.0, %v4202
      %v4204 = vpop.f32.mrf.mxu0
      %4205 = vmatprep.mubr.bf16.mxu0 0
      %4206 = vmatmul.mubr.bf16.gmra.mxu0 %v4058
      %v4207 = vpop.f32.mrf.mxu0
      %v4208 = vadd.f32 0.0, %v4207
      %v4209 = vpop.f32.mrf.mxu0
      %v4210 = vpop.f32.mrf.mxu0
      %v4211 = vadd.f32 0.0, %v4210
      %v4212 = vpop.f32.mrf.mxu0
      %4213 = vmatprep.mubr.bf16.mxu0 0
      %4214 = vmatmul.mubr.bf16.gmra.mxu0 %v4061
      %v4215 = vpop.f32.mrf.mxu0
      %v4216 = vadd.f32 0.0, %v4215
      %v4217 = vpop.f32.mrf.mxu0
      %v4218 = vpop.f32.mrf.mxu0
      %v4219 = vadd.f32 0.0, %v4218
      %v4220 = vpop.f32.mrf.mxu0
      %4221 = vmatprep.mubr.bf16.mxu0 0
      %4222 = vmatmul.mubr.bf16.gmra.mxu0 %v4064
      %v4223 = vpop.f32.mrf.mxu0
      %v4224 = vadd.f32 0.0, %v4223
      %v4225 = vpop.f32.mrf.mxu0
      %v4226 = vpop.f32.mrf.mxu0
      %v4227 = vadd.f32 0.0, %v4226
      %v4228 = vpop.f32.mrf.mxu0
      %4229 = vdwg.mxu0
      %v4230 = vadd.f32 %v3504, %v4104
      %v4231 = vadd.f32 %v3505, %v4107
      %v4232 = vadd.f32 %v3506, %v4112
      %v4233 = vadd.f32 %v3507, %v4115
      %v4234 = vadd.f32 %v3508, %v4120
      %v4235 = vadd.f32 %v3509, %v4123
      %v4236 = vadd.f32 %v3510, %v4128
      %v4237 = vadd.f32 %v3511, %v4131
      %v4238 = vadd.f32 %v3512, %v4136
      %v4239 = vadd.f32 %v3513, %v4139
      %v4240 = vadd.f32 %v3514, %v4144
      %v4241 = vadd.f32 %v3515, %v4147
      %v4242 = vadd.f32 %v3516, %v4152
      %v4243 = vadd.f32 %v3517, %v4155
      %v4244 = vadd.f32 %v3518, %v4160
      %v4245 = vadd.f32 %v3519, %v4163
      %v4246 = vadd.f32 %v3520, %v4168
      %v4247 = vadd.f32 %v3521, %v4171
      %v4248 = vadd.f32 %v3522, %v4176
      %v4249 = vadd.f32 %v3523, %v4179
      %v4250 = vadd.f32 %v3524, %v4184
      %v4251 = vadd.f32 %v3525, %v4187
      %v4252 = vadd.f32 %v3526, %v4192
      %v4253 = vadd.f32 %v3527, %v4195
      %v4254 = vadd.f32 %v3528, %v4200
      %v4255 = vadd.f32 %v3529, %v4203
      %v4256 = vadd.f32 %v3530, %v4208
      %v4257 = vadd.f32 %v3531, %v4211
      %v4258 = vadd.f32 %v3532, %v4216
      %v4259 = vadd.f32 %v3533, %v4219
      %v4260 = vadd.f32 %v3534, %v4224
      %v4261 = vadd.f32 %v3535, %v4227
      %v4262 = vld [vmem:[%s3177] sm:$0xe]
      %v4263 = vld [vmem:[%s3177 + $0xc] sm:$0xe]
      %v4264 = vld [vmem:[%s3177 + $0x18] sm:$0xe]
      %v4265 = vld [vmem:[%s3177 + $0x24] sm:$0xe]
      %v4266 = vld [vmem:[%s3177 + $0x30] sm:$0xe]
      %v4267 = vld [vmem:[%s3177 + $0x3c] sm:$0xe]
      %v4268 = vld [vmem:[%s3177 + $0x48] sm:$0xe]
      %v4269 = vld [vmem:[%s3177 + $0x54] sm:$0xe]
      %v4270 = vld [vmem:[%s3177 + $0x60] sm:$0xe]
      %v4271 = vld [vmem:[%s3177 + $0x6c] sm:$0xe]
      %v4272 = vld [vmem:[%s3177 + $0x78] sm:$0xe]
      %v4273 = vld [vmem:[%s3177 + $0x84] sm:$0xe]
      %v4274 = vld [vmem:[%s3177 + $0x90] sm:$0xe]
      %v4275 = vld [vmem:[%s3177 + $0x9c] sm:$0xe]
      %v4276 = vld [vmem:[%s3177 + $0xa8] sm:$0xe]
      %v4277 = vld [vmem:[%s3177 + $0xb4] sm:$0xe]
      %v4326 = vrot.slane %v4262, 5
      %v4327 = vrot.slane %v4326, 4
      %v4328 = vrot.slane %v3537, 5
      %v4329 = vsel %vm1215, %v4327, %v4328
      %v4330 = vrot.slane %v4328, 4
      %v4331 = vrot.slane %v3538, 5
      %v4332 = vsel %vm1215, %v4330, %v4331
      %v4333 = vrot.slane %v4263, 5
      %v4334 = vrot.slane %v4333, 4
      %v4335 = vrot.slane %v3540, 5
      %v4336 = vsel %vm1215, %v4334, %v4335
      %v4337 = vrot.slane %v4335, 4
      %v4338 = vrot.slane %v3541, 5
      %v4339 = vsel %vm1215, %v4337, %v4338
      %v4340 = vrot.slane %v4264, 5
      %v4341 = vrot.slane %v4340, 4
      %v4342 = vrot.slane %v3543, 5
      %v4343 = vsel %vm1215, %v4341, %v4342
      %v4344 = vrot.slane %v4342, 4
      %v4345 = vrot.slane %v3544, 5
      %v4346 = vsel %vm1215, %v4344, %v4345
      %v4347 = vrot.slane %v4265, 5
      %v4348 = vrot.slane %v4347, 4
      %v4349 = vrot.slane %v3546, 5
      %v4350 = vsel %vm1215, %v4348, %v4349
      %v4351 = vrot.slane %v4349, 4
      %v4352 = vrot.slane %v3547, 5
      %v4353 = vsel %vm1215, %v4351, %v4352
      %v4354 = vrot.slane %v4266, 5
      %v4355 = vrot.slane %v4354, 4
      %v4356 = vrot.slane %v3549, 5
      %v4357 = vsel %vm1215, %v4355, %v4356
      %v4358 = vrot.slane %v4356, 4
      %v4359 = vrot.slane %v3550, 5
      %v4360 = vsel %vm1215, %v4358, %v4359
      %v4361 = vrot.slane %v4267, 5
      %v4362 = vrot.slane %v4361, 4
      %v4363 = vrot.slane %v3552, 5
      %v4364 = vsel %vm1215, %v4362, %v4363
      %v4365 = vrot.slane %v4363, 4
      %v4366 = vrot.slane %v3553, 5
      %v4367 = vsel %vm1215, %v4365, %v4366
      %v4368 = vrot.slane %v4268, 5
      %v4369 = vrot.slane %v4368, 4
      %v4370 = vrot.slane %v3555, 5
      %v4371 = vsel %vm1215, %v4369, %v4370
      %v4372 = vrot.slane %v4370, 4
      %v4373 = vrot.slane %v3556, 5
      %v4374 = vsel %vm1215, %v4372, %v4373
      %v4375 = vrot.slane %v4269, 5
      %v4376 = vrot.slane %v4375, 4
      %v4377 = vrot.slane %v3558, 5
      %v4378 = vsel %vm1215, %v4376, %v4377
      %v4379 = vrot.slane %v4377, 4
      %v4380 = vrot.slane %v3559, 5
      %v4381 = vsel %vm1215, %v4379, %v4380
      %v4382 = vrot.slane %v4270, 5
      %v4383 = vrot.slane %v4382, 4
      %v4384 = vrot.slane %v3561, 5
      %v4385 = vsel %vm1215, %v4383, %v4384
      %v4386 = vrot.slane %v4384, 4
      %v4387 = vrot.slane %v3562, 5
      %v4388 = vsel %vm1215, %v4386, %v4387
      %v4389 = vrot.slane %v4271, 5
      %v4390 = vrot.slane %v4389, 4
      %v4391 = vrot.slane %v3564, 5
      %v4392 = vsel %vm1215, %v4390, %v4391
      %v4393 = vrot.slane %v4391, 4
      %v4394 = vrot.slane %v3565, 5
      %v4395 = vsel %vm1215, %v4393, %v4394
      %v4396 = vrot.slane %v4272, 5
      %v4397 = vrot.slane %v4396, 4
      %v4398 = vrot.slane %v3567, 5
      %v4399 = vsel %vm1215, %v4397, %v4398
      %v4400 = vrot.slane %v4398, 4
      %v4401 = vrot.slane %v3568, 5
      %v4402 = vsel %vm1215, %v4400, %v4401
      %v4403 = vrot.slane %v4273, 5
      %v4404 = vrot.slane %v4403, 4
      %v4405 = vrot.slane %v3570, 5
      %v4406 = vsel %vm1215, %v4404, %v4405
      %v4407 = vrot.slane %v4405, 4
      %v4408 = vrot.slane %v3571, 5
      %v4409 = vsel %vm1215, %v4407, %v4408
      %v4410 = vrot.slane %v4274, 5
      %v4411 = vrot.slane %v4410, 4
      %v4412 = vrot.slane %v3573, 5
      %v4413 = vsel %vm1215, %v4411, %v4412
      %v4414 = vrot.slane %v4412, 4
      %v4415 = vrot.slane %v3574, 5
      %v4416 = vsel %vm1215, %v4414, %v4415
      %v4417 = vrot.slane %v4275, 5
      %v4418 = vrot.slane %v4417, 4
      %v4419 = vrot.slane %v3576, 5
      %v4420 = vsel %vm1215, %v4418, %v4419
      %v4421 = vrot.slane %v4419, 4
      %v4422 = vrot.slane %v3577, 5
      %v4423 = vsel %vm1215, %v4421, %v4422
      %v4424 = vrot.slane %v4276, 5
      %v4425 = vrot.slane %v4424, 4
      %v4426 = vrot.slane %v3579, 5
      %v4427 = vsel %vm1215, %v4425, %v4426
      %v4428 = vrot.slane %v4426, 4
      %v4429 = vrot.slane %v3580, 5
      %v4430 = vsel %vm1215, %v4428, %v4429
      %v4431 = vrot.slane %v4277, 5
      %v4432 = vrot.slane %v4431, 4
      %v4433 = vrot.slane %v3582, 5
      %v4434 = vsel %vm1215, %v4432, %v4433
      %v4435 = vrot.slane %v4433, 4
      %v4436 = vrot.slane %v3583, 5
      %v4437 = vsel %vm1215, %v4435, %v4436
      %s4438 = scalar_lea.vmem %s1, 16
      %v4439 = vld [vmem:[%s4438] sm:$0x3]
      %v4440 = vunpack.c.l.b16 %v4329
      %v4441 = vunpack.c.l.b16 %v4332
      %v4442 = vunpack.c.l.b16 %v4336
      %v4443 = vunpack.c.l.b16 %v4339
      %v4444 = vunpack.c.l.b16 %v4343
      %v4445 = vunpack.c.l.b16 %v4346
      %v4446 = vunpack.c.l.b16 %v4350
      %v4447 = vunpack.c.l.b16 %v4353
      %v4448 = vunpack.c.l.b16 %v4357
      %v4449 = vunpack.c.l.b16 %v4360
      %v4450 = vunpack.c.l.b16 %v4364
      %v4451 = vunpack.c.l.b16 %v4367
      %v4452 = vunpack.c.l.b16 %v4371
      %v4453 = vunpack.c.l.b16 %v4374
      %v4454 = vunpack.c.l.b16 %v4378
      %v4455 = vunpack.c.l.b16 %v4381
      %v4456 = vunpack.c.l.b16 %v4385
      %v4457 = vunpack.c.l.b16 %v4388
      %v4458 = vunpack.c.l.b16 %v4392
      %v4459 = vunpack.c.l.b16 %v4395
      %v4460 = vunpack.c.l.b16 %v4399
      %v4461 = vunpack.c.l.b16 %v4402
      %v4462 = vunpack.c.l.b16 %v4406
      %v4463 = vunpack.c.l.b16 %v4409
      %v4464 = vunpack.c.l.b16 %v4413
      %v4465 = vunpack.c.l.b16 %v4416
      %v4466 = vunpack.c.l.b16 %v4420
      %v4467 = vunpack.c.l.b16 %v4423
      %v4468 = vunpack.c.l.b16 %v4427
      %v4469 = vunpack.c.l.b16 %v4430
      %v4470 = vunpack.c.l.b16 %v4434
      %v4471 = vunpack.c.l.b16 %v4437
      %v4472 = vpack.c.b16 %v4441, %v4440
      %v4473 = vpack.c.b16 %v4443, %v4442
      %v4474 = vpack.c.b16 %v4445, %v4444
      %v4475 = vpack.c.b16 %v4447, %v4446
      %v4476 = vpack.c.b16 %v4449, %v4448
      %v4477 = vpack.c.b16 %v4451, %v4450
      %v4478 = vpack.c.b16 %v4453, %v4452
      %v4479 = vpack.c.b16 %v4455, %v4454
      %v4480 = vpack.c.b16 %v4457, %v4456
      %v4481 = vpack.c.b16 %v4459, %v4458
      %v4482 = vpack.c.b16 %v4461, %v4460
      %v4483 = vpack.c.b16 %v4463, %v4462
      %v4484 = vpack.c.b16 %v4465, %v4464
      %v4485 = vpack.c.b16 %v4467, %v4466
      %v4486 = vpack.c.b16 %v4469, %v4468
      %v4487 = vpack.c.b16 %v4471, %v4470
      %v4489 = vsel %vm659, %v4472, 0
      %v4492 = vsel %vm659, %v4473, 0
      %v4495 = vsel %vm659, %v4474, 0
      %v4498 = vsel %vm659, %v4475, 0
      %v4501 = vsel %vm659, %v4476, 0
      %v4504 = vsel %vm659, %v4477, 0
      %v4507 = vsel %vm659, %v4478, 0
      %v4510 = vsel %vm659, %v4479, 0
      %v4513 = vsel %vm659, %v4480, 0
      %v4516 = vsel %vm659, %v4481, 0
      %v4519 = vsel %vm659, %v4482, 0
      %v4522 = vsel %vm659, %v4483, 0
      %v4525 = vsel %vm659, %v4484, 0
      %v4528 = vsel %vm659, %v4485, 0
      %v4531 = vsel %vm659, %v4486, 0
      %v4534 = vsel %vm659, %v4487, 0
      %v4537 = vsel %vm708, %v4439, 0
      %4539 = vmatprep.subr.bf16.mxu0 0
      %4540 = vmatpush1.bf16.msra.mxu0 0
      %4541 = vmatprep.subr.bf16.mxu0 0
      %4542 = vmatpush1.bf16.msra.mxu0 0
      %4543 = vmatprep.subr.bf16.mxu0 0
      %4544 = vmatpush1.bf16.msra.mxu0 0
      %4545 = vmatprep.subr.bf16.mxu0 0
      %4546 = vmatpush1.bf16.msra.mxu0 0
      %4547 = vmatprep.subr.bf16.mxu0 0
      %4548 = vmatpush1.bf16.msra.mxu0 0
      %4549 = vmatprep.subr.bf16.mxu0 0
      %4550 = vmatpush1.bf16.msra.mxu0 0
      %4551 = vmatprep.subr.bf16.mxu0 0
      %4552 = vmatpush1.bf16.msra.mxu0 0
      %4553 = vmatprep.subr.bf16.mxu0 0
      %4554 = vmatpush1.bf16.msra.mxu0 %v4537
      %4555 = vmatprep.subr.bf16.mxu0 0
      %4556 = vmatpush2.bf16.msra.mxu0 0
      %4557 = vmatprep.subr.bf16.mxu0 0
      %4558 = vmatpush2.bf16.msra.mxu0 0
      %4559 = vmatprep.subr.bf16.mxu0 0
      %4560 = vmatpush2.bf16.msra.mxu0 0
      %4561 = vmatprep.subr.bf16.mxu0 0
      %4562 = vmatpush2.bf16.msra.mxu0 0
      %4563 = vmatprep.subr.bf16.mxu0 0
      %4564 = vmatpush2.bf16.msra.mxu0 0
      %4565 = vmatprep.subr.bf16.mxu0 0
      %4566 = vmatpush2.bf16.msra.mxu0 0
      %4567 = vmatprep.subr.bf16.mxu0 0
      %4568 = vmatpush2.bf16.msra.mxu0 0
      %4569 = vmatprep.subr.bf16.mxu0 0
      %4570 = vmatpush2.bf16.msra.mxu0 0
      %4571 = vmatprep.mubr.bf16.mxu0 0
      %4572 = vmatmul.mubr.bf16.gmra.mxu0 %v4489
      %v4573 = vpop.f32.mrf.mxu0
      %v4574 = vadd.f32 0.0, %v4573
      %v4575 = vpop.f32.mrf.mxu0
      %v4576 = vpop.f32.mrf.mxu0
      %v4577 = vadd.f32 0.0, %v4576
      %v4578 = vpop.f32.mrf.mxu0
      %4579 = vmatprep.mubr.bf16.mxu0 0
      %4580 = vmatmul.mubr.bf16.gmra.mxu0 %v4492
      %v4581 = vpop.f32.mrf.mxu0
      %v4582 = vadd.f32 0.0, %v4581
      %v4583 = vpop.f32.mrf.mxu0
      %v4584 = vpop.f32.mrf.mxu0
      %v4585 = vadd.f32 0.0, %v4584
      %v4586 = vpop.f32.mrf.mxu0
      %4587 = vmatprep.mubr.bf16.mxu0 0
      %4588 = vmatmul.mubr.bf16.gmra.mxu0 %v4495
      %v4589 = vpop.f32.mrf.mxu0
      %v4590 = vadd.f32 0.0, %v4589
      %v4591 = vpop.f32.mrf.mxu0
      %v4592 = vpop.f32.mrf.mxu0
      %v4593 = vadd.f32 0.0, %v4592
      %v4594 = vpop.f32.mrf.mxu0
      %4595 = vmatprep.mubr.bf16.mxu0 0
      %4596 = vmatmul.mubr.bf16.gmra.mxu0 %v4498
      %v4597 = vpop.f32.mrf.mxu0
      %v4598 = vadd.f32 0.0, %v4597
      %v4599 = vpop.f32.mrf.mxu0
      %v4600 = vpop.f32.mrf.mxu0
      %v4601 = vadd.f32 0.0, %v4600
      %v4602 = vpop.f32.mrf.mxu0
      %4603 = vmatprep.mubr.bf16.mxu0 0
      %4604 = vmatmul.mubr.bf16.gmra.mxu0 %v4501
      %v4605 = vpop.f32.mrf.mxu0
      %v4606 = vadd.f32 0.0, %v4605
      %v4607 = vpop.f32.mrf.mxu0
      %v4608 = vpop.f32.mrf.mxu0
      %v4609 = vadd.f32 0.0, %v4608
      %v4610 = vpop.f32.mrf.mxu0
      %4611 = vmatprep.mubr.bf16.mxu0 0
      %4612 = vmatmul.mubr.bf16.gmra.mxu0 %v4504
      %v4613 = vpop.f32.mrf.mxu0
      %v4614 = vadd.f32 0.0, %v4613
      %v4615 = vpop.f32.mrf.mxu0
      %v4616 = vpop.f32.mrf.mxu0
      %v4617 = vadd.f32 0.0, %v4616
      %v4618 = vpop.f32.mrf.mxu0
      %4619 = vmatprep.mubr.bf16.mxu0 0
      %4620 = vmatmul.mubr.bf16.gmra.mxu0 %v4507
      %v4621 = vpop.f32.mrf.mxu0
      %v4622 = vadd.f32 0.0, %v4621
      %v4623 = vpop.f32.mrf.mxu0
      %v4624 = vpop.f32.mrf.mxu0
      %v4625 = vadd.f32 0.0, %v4624
      %v4626 = vpop.f32.mrf.mxu0
      %4627 = vmatprep.mubr.bf16.mxu0 0
      %4628 = vmatmul.mubr.bf16.gmra.mxu0 %v4510
      %v4629 = vpop.f32.mrf.mxu0
      %v4630 = vadd.f32 0.0, %v4629
      %v4631 = vpop.f32.mrf.mxu0
      %v4632 = vpop.f32.mrf.mxu0
      %v4633 = vadd.f32 0.0, %v4632
      %v4634 = vpop.f32.mrf.mxu0
      %4635 = vmatprep.mubr.bf16.mxu0 0
      %4636 = vmatmul.mubr.bf16.gmra.mxu0 %v4513
      %v4637 = vpop.f32.mrf.mxu0
      %v4638 = vadd.f32 0.0, %v4637
      %v4639 = vpop.f32.mrf.mxu0
      %v4640 = vpop.f32.mrf.mxu0
      %v4641 = vadd.f32 0.0, %v4640
      %v4642 = vpop.f32.mrf.mxu0
      %4643 = vmatprep.mubr.bf16.mxu0 0
      %4644 = vmatmul.mubr.bf16.gmra.mxu0 %v4516
      %v4645 = vpop.f32.mrf.mxu0
      %v4646 = vadd.f32 0.0, %v4645
      %v4647 = vpop.f32.mrf.mxu0
      %v4648 = vpop.f32.mrf.mxu0
      %v4649 = vadd.f32 0.0, %v4648
      %v4650 = vpop.f32.mrf.mxu0
      %4651 = vmatprep.mubr.bf16.mxu0 0
      %4652 = vmatmul.mubr.bf16.gmra.mxu0 %v4519
      %v4653 = vpop.f32.mrf.mxu0
      %v4654 = vadd.f32 0.0, %v4653
      %v4655 = vpop.f32.mrf.mxu0
      %v4656 = vpop.f32.mrf.mxu0
      %v4657 = vadd.f32 0.0, %v4656
      %v4658 = vpop.f32.mrf.mxu0
      %4659 = vmatprep.mubr.bf16.mxu0 0
      %4660 = vmatmul.mubr.bf16.gmra.mxu0 %v4522
      %v4661 = vpop.f32.mrf.mxu0
      %v4662 = vadd.f32 0.0, %v4661
      %v4663 = vpop.f32.mrf.mxu0
      %v4664 = vpop.f32.mrf.mxu0
      %v4665 = vadd.f32 0.0, %v4664
      %v4666 = vpop.f32.mrf.mxu0
      %4667 = vmatprep.mubr.bf16.mxu0 0
      %4668 = vmatmul.mubr.bf16.gmra.mxu0 %v4525
      %v4669 = vpop.f32.mrf.mxu0
      %v4670 = vadd.f32 0.0, %v4669
      %v4671 = vpop.f32.mrf.mxu0
      %v4672 = vpop.f32.mrf.mxu0
      %v4673 = vadd.f32 0.0, %v4672
      %v4674 = vpop.f32.mrf.mxu0
      %4675 = vmatprep.mubr.bf16.mxu0 0
      %4676 = vmatmul.mubr.bf16.gmra.mxu0 %v4528
      %v4677 = vpop.f32.mrf.mxu0
      %v4678 = vadd.f32 0.0, %v4677
      %v4679 = vpop.f32.mrf.mxu0
      %v4680 = vpop.f32.mrf.mxu0
      %v4681 = vadd.f32 0.0, %v4680
      %v4682 = vpop.f32.mrf.mxu0
      %4683 = vmatprep.mubr.bf16.mxu0 0
      %4684 = vmatmul.mubr.bf16.gmra.mxu0 %v4531
      %v4685 = vpop.f32.mrf.mxu0
      %v4686 = vadd.f32 0.0, %v4685
      %v4687 = vpop.f32.mrf.mxu0
      %v4688 = vpop.f32.mrf.mxu0
      %v4689 = vadd.f32 0.0, %v4688
      %v4690 = vpop.f32.mrf.mxu0
      %4691 = vmatprep.mubr.bf16.mxu0 0
      %4692 = vmatmul.mubr.bf16.gmra.mxu0 %v4534
      %v4693 = vpop.f32.mrf.mxu0
      %v4694 = vadd.f32 0.0, %v4693
      %v4695 = vpop.f32.mrf.mxu0
      %v4696 = vpop.f32.mrf.mxu0
      %v4697 = vadd.f32 0.0, %v4696
      %v4698 = vpop.f32.mrf.mxu0
      %4699 = vdwg.mxu0
      %v4700 = vadd.f32 %v4230, %v4574
      %v4701 = vadd.f32 %v4231, %v4577
      %v4702 = vadd.f32 %v4232, %v4582
      %v4703 = vadd.f32 %v4233, %v4585
      %v4704 = vadd.f32 %v4234, %v4590
      %v4705 = vadd.f32 %v4235, %v4593
      %v4706 = vadd.f32 %v4236, %v4598
      %v4707 = vadd.f32 %v4237, %v4601
      %v4708 = vadd.f32 %v4238, %v4606
      %v4709 = vadd.f32 %v4239, %v4609
      %v4710 = vadd.f32 %v4240, %v4614
      %v4711 = vadd.f32 %v4241, %v4617
      %v4712 = vadd.f32 %v4242, %v4622
      %v4713 = vadd.f32 %v4243, %v4625
      %v4714 = vadd.f32 %v4244, %v4630
      %v4715 = vadd.f32 %v4245, %v4633
      %v4716 = vadd.f32 %v4246, %v4638
      %v4717 = vadd.f32 %v4247, %v4641
      %v4718 = vadd.f32 %v4248, %v4646
      %v4719 = vadd.f32 %v4249, %v4649
      %v4720 = vadd.f32 %v4250, %v4654
      %v4721 = vadd.f32 %v4251, %v4657
      %v4722 = vadd.f32 %v4252, %v4662
      %v4723 = vadd.f32 %v4253, %v4665
      %v4724 = vadd.f32 %v4254, %v4670
      %v4725 = vadd.f32 %v4255, %v4673
      %v4726 = vadd.f32 %v4256, %v4678
      %v4727 = vadd.f32 %v4257, %v4681
      %v4728 = vadd.f32 %v4258, %v4686
      %v4729 = vadd.f32 %v4259, %v4689
      %v4730 = vadd.f32 %v4260, %v4694
      %v4731 = vadd.f32 %v4261, %v4697
      %v4732 = vld [vmem:[%s2] sm:$0x1]
      %v4734 = vlaneseq
      %v4735 = vshrl.u32 %v4734, 7
      %v4736 = vsub.s32 0, %v4735
      %v4737 = vrot.slane %v4732, %v4736
      %v4739 = vadd.f32 %v4700, %v4737
      %v4740 = vadd.f32 %v4701, %v4737
      %v4741 = vadd.f32 %v4702, %v4737
      %v4742 = vadd.f32 %v4703, %v4737
      %v4743 = vadd.f32 %v4704, %v4737
      %v4744 = vadd.f32 %v4705, %v4737
      %v4745 = vadd.f32 %v4706, %v4737
      %v4746 = vadd.f32 %v4707, %v4737
      %v4747 = vadd.f32 %v4708, %v4737
      %v4748 = vadd.f32 %v4709, %v4737
      %v4749 = vadd.f32 %v4710, %v4737
      %v4750 = vadd.f32 %v4711, %v4737
      %v4751 = vadd.f32 %v4712, %v4737
      %v4752 = vadd.f32 %v4713, %v4737
      %v4753 = vadd.f32 %v4714, %v4737
      %v4754 = vadd.f32 %v4715, %v4737
      %v4755 = vadd.f32 %v4716, %v4737
      %v4756 = vadd.f32 %v4717, %v4737
      %v4757 = vadd.f32 %v4718, %v4737
      %v4758 = vadd.f32 %v4719, %v4737
      %v4759 = vadd.f32 %v4720, %v4737
      %v4760 = vadd.f32 %v4721, %v4737
      %v4761 = vadd.f32 %v4722, %v4737
      %v4762 = vadd.f32 %v4723, %v4737
      %v4763 = vadd.f32 %v4724, %v4737
      %v4764 = vadd.f32 %v4725, %v4737
      %v4765 = vadd.f32 %v4726, %v4737
      %v4766 = vadd.f32 %v4727, %v4737
      %v4767 = vadd.f32 %v4728, %v4737
      %v4768 = vadd.f32 %v4729, %v4737
      %v4769 = vadd.f32 %v4730, %v4737
      %v4770 = vadd.f32 %v4731, %v4737
      %v4771 = vmax.f32 %v4739, 0.0
      %v4772 = vmax.f32 %v4740, 0.0
      %v4773 = vmax.f32 %v4741, 0.0
      %v4774 = vmax.f32 %v4742, 0.0
      %v4775 = vmax.f32 %v4743, 0.0
      %v4776 = vmax.f32 %v4744, 0.0
      %v4777 = vmax.f32 %v4745, 0.0
      %v4778 = vmax.f32 %v4746, 0.0
      %v4779 = vmax.f32 %v4747, 0.0
      %v4780 = vmax.f32 %v4748, 0.0
      %v4781 = vmax.f32 %v4749, 0.0
      %v4782 = vmax.f32 %v4750, 0.0
      %v4783 = vmax.f32 %v4751, 0.0
      %v4784 = vmax.f32 %v4752, 0.0
      %v4785 = vmax.f32 %v4753, 0.0
      %v4786 = vmax.f32 %v4754, 0.0
      %v4787 = vmax.f32 %v4755, 0.0
      %v4788 = vmax.f32 %v4756, 0.0
      %v4789 = vmax.f32 %v4757, 0.0
      %v4790 = vmax.f32 %v4758, 0.0
      %v4791 = vmax.f32 %v4759, 0.0
      %v4792 = vmax.f32 %v4760, 0.0
      %v4793 = vmax.f32 %v4761, 0.0
      %v4794 = vmax.f32 %v4762, 0.0
      %v4795 = vmax.f32 %v4763, 0.0
      %v4796 = vmax.f32 %v4764, 0.0
      %v4797 = vmax.f32 %v4765, 0.0
      %v4798 = vmax.f32 %v4766, 0.0
      %v4799 = vmax.f32 %v4767, 0.0
      %v4800 = vmax.f32 %v4768, 0.0
      %v4801 = vmax.f32 %v4769, 0.0
      %v4802 = vmax.f32 %v4770, 0.0
      %v4803 = vmin.f32 %v4771, 1.0
      %v4804 = vmin.f32 %v4772, 1.0
      %v4805 = vmin.f32 %v4773, 1.0
      %v4806 = vmin.f32 %v4774, 1.0
      %v4807 = vmin.f32 %v4775, 1.0
      %v4808 = vmin.f32 %v4776, 1.0
      %v4809 = vmin.f32 %v4777, 1.0
      %v4810 = vmin.f32 %v4778, 1.0
      %v4811 = vmin.f32 %v4779, 1.0
      %v4812 = vmin.f32 %v4780, 1.0
      %v4813 = vmin.f32 %v4781, 1.0
      %v4814 = vmin.f32 %v4782, 1.0
      %v4815 = vmin.f32 %v4783, 1.0
      %v4816 = vmin.f32 %v4784, 1.0
      %v4817 = vmin.f32 %v4785, 1.0
      %v4818 = vmin.f32 %v4786, 1.0
      %v4819 = vmin.f32 %v4787, 1.0
      %v4820 = vmin.f32 %v4788, 1.0
      %v4821 = vmin.f32 %v4789, 1.0
      %v4822 = vmin.f32 %v4790, 1.0
      %v4823 = vmin.f32 %v4791, 1.0
      %v4824 = vmin.f32 %v4792, 1.0
      %v4825 = vmin.f32 %v4793, 1.0
      %v4826 = vmin.f32 %v4794, 1.0
      %v4827 = vmin.f32 %v4795, 1.0
      %v4828 = vmin.f32 %v4796, 1.0
      %v4829 = vmin.f32 %v4797, 1.0
      %v4830 = vmin.f32 %v4798, 1.0
      %v4831 = vmin.f32 %v4799, 1.0
      %v4832 = vmin.f32 %v4800, 1.0
      %v4833 = vmin.f32 %v4801, 1.0
      %v4834 = vmin.f32 %v4802, 1.0
      %4835 = vst [vmem:[%s170] sm:$0xff] %v4803
      %4836 = vst [vmem:[%s170 + $0x8] sm:$0xff] %v4804
      %4837 = vst [vmem:[%s170 + $0x10] sm:$0xff] %v4805
      %4838 = vst [vmem:[%s170 + $0x18] sm:$0xff] %v4806
      %4839 = vst [vmem:[%s170 + $0x20] sm:$0xff] %v4807
      %4840 = vst [vmem:[%s170 + $0x28] sm:$0xff] %v4808
      %4841 = vst [vmem:[%s170 + $0x30] sm:$0xff] %v4809
      %4842 = vst [vmem:[%s170 + $0x38] sm:$0xff] %v4810
      %4843 = vst [vmem:[%s170 + $0x40] sm:$0xff] %v4811
      %4844 = vst [vmem:[%s170 + $0x48] sm:$0xff] %v4812
      %4845 = vst [vmem:[%s170 + $0x50] sm:$0xff] %v4813
      %4846 = vst [vmem:[%s170 + $0x58] sm:$0xff] %v4814
      %4847 = vst [vmem:[%s170 + $0x60] sm:$0xff] %v4815
      %4848 = vst [vmem:[%s170 + $0x68] sm:$0xff] %v4816
      %4849 = vst [vmem:[%s170 + $0x70] sm:$0xff] %v4817
      %4850 = vst [vmem:[%s170 + $0x78] sm:$0xff] %v4818
      %4851 = vst [vmem:[%s170 + $0x80] sm:$0xff] %v4819
      %4852 = vst [vmem:[%s170 + $0x88] sm:$0xff] %v4820
      %4853 = vst [vmem:[%s170 + $0x90] sm:$0xff] %v4821
      %4854 = vst [vmem:[%s170 + $0x98] sm:$0xff] %v4822
      %4855 = vst [vmem:[%s170 + $0xa0] sm:$0xff] %v4823
      %4856 = vst [vmem:[%s170 + $0xa8] sm:$0xff] %v4824
      %4857 = vst [vmem:[%s170 + $0xb0] sm:$0xff] %v4825
      %4858 = vst [vmem:[%s170 + $0xb8] sm:$0xff] %v4826
      %4859 = vst [vmem:[%s170 + $0xc0] sm:$0xff] %v4827
      %4860 = vst [vmem:[%s170 + $0xc8] sm:$0xff] %v4828
      %4861 = vst [vmem:[%s170 + $0xd0] sm:$0xff] %v4829
      %4862 = vst [vmem:[%s170 + $0xd8] sm:$0xff] %v4830
      %4863 = vst [vmem:[%s170 + $0xe0] sm:$0xff] %v4831
      %4864 = vst [vmem:[%s170 + $0xe8] sm:$0xff] %v4832
      %4865 = vst [vmem:[%s170 + $0xf0] sm:$0xff] %v4833
      %4866 = vst [vmem:[%s170 + $0xf8] sm:$0xff] %v4834
      %s4867 = smul.u32 32, %s14
      %p4868 = scmp.lt.s32.totalorder %s4867, 63
      %s4869 = scalar_select %p4868, %s4867, 63
      %s4870 = smul.addr %s4869, 8
      %s4871 = scalar_lea.vmem %s3, %s4870
      // Predicated region
      $region33: #{generator_forward.1} parent=31 // pred_check
        %p4872 = pneg %p100
      $region34: #{generator_forward.1} parent=31 // pred_check_branch
        %4874 = sbr.rel (%p4872) target = $region36
      $region35: #{generator_forward.1} parent=31 // pred_region
        %s4875 = smul.u32 32, %s14
      $region36: #{generator_forward.1} parent=31 // pred_fallthru
        _
    $region32: #{generator_forward.1} parent=5 // pred_fallthru
      _
    %p4876 = scmp.le.s32.totalorder 2, %s9
    // Predicated region
    $region37: #{generator_forward.1} parent=5 // pred_check
      %p4877 = pneg %p4876
    $region38: #{generator_forward.1} parent=5 // pred_check_branch
      %4879 = sbr.rel (%p4877) target = $region40
    $region39: #{generator_forward.1} parent=5 // pred_region
      %s4880 = ssub.s32 %s9, 2
      // Predicated region
      $region41: #{generator_forward.1} parent=39 // pred_check
        %p4881 = pneg %p106
      $region42: #{generator_forward.1} parent=39 // pred_check_branch
        %4883 = sbr.rel (%p4881) target = $region44
      $region43: #{generator_forward.1} parent=39 // pred_region
        %s4884 = smul.u32 32, %s15
        %p4885 = scmp.lt.s32.totalorder %s4884, 63
        %s4886 = scalar_select %p4885, %s4884, 63
        %s4887 = smul.addr %s4886, 8
        %s4888 = scalar_lea.vmem %s3, %s4887
      $region44: #{generator_forward.1} parent=39 // pred_fallthru
        _
    $region40: #{generator_forward.1} parent=5 // pred_fallthru
      _
  $region6: #{generator_forward.1} parent=0 // loop_footer
    %s13 = sadd.s32 1, %s9
  $region7: #{generator_forward.1} parent=0 // loop_footer_branch
    %8 = sbr.rel target = $region3
  $region8: #{generator_forward.1} parent=0 // loop_exit
    _

</llo_original>
